<compile_context>
chip_gen: v7x
topology: tpu7x:2x2x1
jax: 0.10.0
libtpu: 0.0.40
codegen_flags: <defaults>
</compile_context>

<pallas_src>
import functools

import jax
import jax.numpy as jnp
from jax.experimental import pallas as pl
from jax.experimental.pallas import tpu as pltpu


def _round_up(x, m):
    return (x + m - 1) // m * m


def _block_diag(w, reps):
    """(cin, cout) -> (reps*cin, reps*cout): `reps` copies of w on the diagonal."""
    cin, cout = w.shape
    eye = jnp.eye(reps, dtype=w.dtype)
    return (eye[:, None, :, None] * w[None, :, None, :]).reshape(
        reps * cin, reps * cout)


def _pool_points_max(x, group, num_groups):
    """Max over `num_groups` consecutive lane-groups of width `group`.

    x: (T, num_groups*group) -> (T, group).  Pairwise folding with static lane
    slices keeps everything lane-dense (no (T, P, H) relayout / XLU transpose).
    """
    n = num_groups
    while n > 1:
        k = n // 2
        rem = n - k
        folded = jnp.maximum(x[:, :k * group], x[:, rem * group:n * group])
        if rem > k:
            x = jnp.concatenate([folded, x[:, k * group:rem * group]], axis=-1)
        else:
            x = folded
        n = rem
    return x


def _encoder_kernel(x_ref, m_ref, w1bd_ref, w2pbd_ref, w2bbd_ref, rep_ref,
                    whead_ref, cst_ref, out_ref):
    P = m_ref.shape[1]
    PH = w1bd_ref.shape[1]              # P * hidden
    H = PH // P
    O = out_ref.shape[0]
    cd = w1bd_ref.dtype                 # MXU-operand dtype (bf16 or f32)

    # small head weights (consolidated slab, static row offsets)
    w2q = whead_ref[0:H, 0:H]           # pooled branch of the concat layer
    wo1 = whead_ref[H:2 * H, 0:H]
    wo2 = whead_ref[2 * H:3 * H, 0:O]

    # f32 constant slab: mask lane-expander + all (BN-folded) biases
    expand = cst_ref[0:P, 0:PH]
    b1 = cst_ref[P:P + 1, 0:PH]
    b2b = cst_ref[P + 1:P + 2, 0:PH]
    b2a = cst_ref[P + 2:P + 3, 0:H]
    bo1 = cst_ref[P + 3:P + 4, 0:H]
    bo2 = cst_ref[P + 4:P + 5, 0:O]

    x = x_ref[...]                      # (T, P*C), streamed in input dtype
    m = m_ref[...]                      # (T, P) 0/1 float32

    # Lane-replicate the point mask to (T, P*H) on the MXU (no VPU repeat),
    # and derive per-polyline validity from the same data.
    mask_rep = jnp.dot(m, expand, preferred_element_type=jnp.float32)
    valid = jnp.max(m, axis=-1, keepdims=True)                  # (T, 1)

    # ---- pre_mlps: block-diag Linear(C->H), BN scale folded, bias + ReLU ----
    h = jnp.dot(x.astype(cd), w1bd_ref[...], preferred_element_type=jnp.float32)
    h = jnp.maximum(h + b1, 0.0) * mask_rep                     # (T, P*H)

    pooled = _pool_points_max(h, H, P)                          # (T, H)

    # ---- mlps layer 1: cat(point_feat, pooled) = block-diag + pooled branch.
    # Bias hoisted: gp = pooled @ w2q + b2a per polyline, then broadcast back
    # to all points by the MXU via the lane-replicator matrix.
    gpre = jnp.dot(h.astype(cd), w2pbd_ref[...],
                   preferred_element_type=jnp.float32)          # (T, P*H)
    gp = jnp.dot(pooled.astype(cd), w2q,
                 preferred_element_type=jnp.float32) + b2a      # (T, H)
    gpb = jnp.dot(gp.astype(cd), rep_ref[...],
                  preferred_element_type=jnp.float32)           # (T, P*H)
    g = jnp.maximum(gpre + gpb, 0.0)
    # NOTE: no mask on g — rows from invalid points are re-masked on g2 before
    # the second pool, so the output is identical (checked vs. reference).

    # ---- mlps layer 2: block-diag Linear(H->H), BN folded, bias + ReLU ------
    g2 = jnp.dot(g.astype(cd), w2bbd_ref[...],
                 preferred_element_type=jnp.float32)
    g2 = jnp.maximum(g2 + b2b, 0.0) * mask_rep                  # (T, P*H)

    pooled2 = _pool_points_max(g2, H, P)                        # (T, H)

    # ---- out_mlps on polylines with >= 1 valid point -------------------------
    o1 = jnp.maximum(
        jnp.dot(pooled2.astype(cd), wo1,
                preferred_element_type=jnp.float32) + bo1, 0.0)
    o2 = jnp.dot(o1.astype(cd), wo2, preferred_element_type=jnp.float32) + bo2
    o2 = o2 * valid                                             # zero invalid

    # Lane-dense store: the block's last dim is the row tile, so stores are
    # full 128-lane vst and the write-back DMA is contiguous.
    out_ref[...] = jnp.transpose(o2).astype(out_ref.dtype)      # (O, T)


@functools.partial(jax.jit, static_argnames=("tile_rows", "compute_dtype"))
def pointnet_polyline_encoder(polylines, polylines_mask, params,
                              tile_rows=1024, compute_dtype=jnp.bfloat16):
    B, NPL, P, C = polylines.shape
    N = B * NPL
    H = params["w1"].shape[1]
    O = params["wo2"].shape[1]
    PC, PH = P * C, P * H
    cd = jnp.dtype(compute_dtype)

    # ---- fold eval-mode BN scales; build block-diagonal per-point weights ----
    w1 = params["w1"] * params["s1"][0][None, :]
    w2a = params["w2a"] * params["s2a"][0][None, :]
    w2p, w2q = w2a[:H, :], w2a[H:, :]
    w2b = params["w2b"] * params["s2b"][0][None, :]

    w1bd = _block_diag(w1, P).astype(cd)                         # (P*C, P*H)
    w2pbd = _block_diag(w2p, P).astype(cd)                       # (P*H, P*H)
    w2bbd = _block_diag(w2b, P).astype(cd)                       # (P*H, P*H)
    rep = jnp.tile(jnp.eye(H, dtype=jnp.float32), (1, P)).astype(cd)  # (H, P*H)

    head_w = max(H, O)

    def _pad_lanes(a, width):
        return jnp.pad(a, ((0, 0), (0, width - a.shape[1])))

    whead = jnp.concatenate([
        _pad_lanes(w2q, head_w),
        _pad_lanes(params["wo1"], head_w),
        _pad_lanes(params["wo2"], head_w),
    ], axis=0).astype(cd)                                        # (3H, head_w)

    lane_c = max(PH, H, O)
    expand = jnp.repeat(jnp.eye(P, dtype=jnp.float32), H, axis=1)  # (P, P*H)
    cst = jnp.concatenate([
        _pad_lanes(expand, lane_c),
        _pad_lanes(jnp.tile(params["b1"], (1, P)), lane_c),
        _pad_lanes(jnp.tile(params["b2b"], (1, P)), lane_c),
        _pad_lanes(params["b2a"], lane_c),
        _pad_lanes(params["bo1"], lane_c),
        _pad_lanes(params["bo2"], lane_c),
    ], axis=0).astype(jnp.float32)                               # (P+5, lane_c)

    # ---- VMEM-capacity-aware row tile (v7x: 64 MiB/TC, v5e/v6e: 128 MiB) ----
    try:
        vmem_cap = int(getattr(pltpu.get_tpu_info(), "vmem_capacity_bytes",
                               64 * 1024 * 1024))
    except Exception:
        vmem_cap = 64 * 1024 * 1024

    in_itemsize = jnp.dtype(polylines.dtype).itemsize
    weight_bytes = (int(w1bd.size + w2pbd.size + w2bbd.size + rep.size
                        + whead.size) * cd.itemsize + int(cst.size) * 4)
    row_bytes = (2 * _round_up(PC, 128) * in_itemsize   # input block, dbl-buf
                 + 2 * _round_up(P, 128) * 4            # mask block, dbl-buf
                 + 2 * O * 4                            # output block
                 + 8 * _round_up(PH, 128) * 4)          # live f32 intermediates
    budget = int(0.6 * vmem_cap) - weight_bytes - (4 << 20)
    cap_rows = max(8, budget // max(row_bytes, 1))

    half = _round_up((N + 1) // 2, 8)   # >= 2 grid steps -> both v7x TCs busy
    tile = max(8, min(int(tile_rows), int(cap_rows), half))
    tile = _round_up(tile, 8)
    n_pad = _round_up(N, tile)
    grid = n_pad // tile

    # Stream the input in its own dtype (no wrapper-side cast/copy of the big
    # (N, P*C) slab); only the tiny mask is cast to f32 for the MXU expand.
    poly = polylines.reshape(N, PC)
    mask = polylines_mask.reshape(N, P).astype(jnp.float32)
    if n_pad != N:
        poly = jnp.pad(poly, ((0, n_pad - N), (0, 0)))
        mask = jnp.pad(mask, ((0, n_pad - N), (0, 0)))   # padded rows invalid

    in_specs = [
        pl.BlockSpec((tile, PC), lambda i: (i, 0)),
        pl.BlockSpec((tile, P), lambda i: (i, 0)),
        pl.BlockSpec(w1bd.shape, lambda i: (0, 0)),
        pl.BlockSpec(w2pbd.shape, lambda i: (0, 0)),
        pl.BlockSpec(w2bbd.shape, lambda i: (0, 0)),
        pl.BlockSpec(rep.shape, lambda i: (0, 0)),
        pl.BlockSpec(whead.shape, lambda i: (0, 0)),
        pl.BlockSpec(cst.shape, lambda i: (0, 0)),
    ]
    out_specs = pl.BlockSpec((None, O, tile), lambda i: (i, 0, 0))

    flops = 2 * n_pad * (PC * PH + 2 * PH * PH + P * PH + H * PH
                         + 2 * H * H + H * O)
    bytes_accessed = int(n_pad * PC * in_itemsize + n_pad * P * 4
                         + weight_bytes + n_pad * O * 4)
    vmem_limit = int(min(0.9 * vmem_cap,
                         max(32 << 20,
                             weight_bytes + tile * row_bytes + (8 << 20))))

    out3 = pl.pallas_call(
        _encoder_kernel,
        out_shape=jax.ShapeDtypeStruct((grid, O, tile), jnp.float32),
        grid_spec=pltpu.PrefetchScalarGridSpec(
            num_scalar_prefetch=0,
            grid=(grid,),
            in_specs=in_specs,
            out_specs=out_specs),
        compiler_params=pltpu.CompilerParams(
            dimension_semantics=("parallel",),
            vmem_limit_bytes=vmem_limit),
        cost_estimate=pl.CostEstimate(flops=flops, transcendentals=0,
                                      bytes_accessed=bytes_accessed),
    )(poly, mask, w1bd, w2pbd, w2bbd, rep, whead, cst)

    # (O, row-tile) kernel layout -> (B, NPL, O); the transpose only touches
    # the small output (O floats per polyline), never the input stream.
    out = jnp.transpose(out3, (0, 2, 1)).reshape(n_pad, O)[:N]
    return out.reshape(B, NPL, O)


def make_params(key, in_channels, hidden_dim, out_channels):
    """Deterministic synthetic parameters (eval-mode BN folded to scale/bias)."""
    ks = jax.random.split(key, 16)
    eps = 1e-5

    def bn_fold(kg, kb, km, kv, dim):
        gamma = 1.0 + 0.1 * jax.random.normal(kg, (dim,), jnp.float32)
        beta = 0.1 * jax.random.normal(kb, (dim,), jnp.float32)
        mean = 0.1 * jax.random.normal(km, (dim,), jnp.float32)
        var = jax.random.uniform(kv, (dim,), jnp.float32, 0.5, 1.5)
        scale = gamma / jnp.sqrt(var + eps)
        bias = beta - mean * scale
        return scale.reshape(1, dim), bias.reshape(1, dim)

    C, H, O = in_channels, hidden_dim, out_channels
    s1, b1 = bn_fold(ks[1], ks[2], ks[3], ks[4], H)
    s2a, b2a = bn_fold(ks[6], ks[7], ks[8], ks[9], H)
    s2b, b2b = bn_fold(ks[11], ks[12], ks[13], ks[14], H)
    params = {
        "w1": 0.2 * jax.random.normal(ks[0], (C, H), jnp.float32),
        "s1": s1, "b1": b1,
        "w2a": 0.2 * jax.random.normal(ks[5], (2 * H, H), jnp.float32),
        "s2a": s2a, "b2a": b2a,
        "w2b": 0.2 * jax.random.normal(ks[10], (H, H), jnp.float32),
        "s2b": s2b, "b2b": b2b,
        "wo1": 0.2 * jax.random.normal(ks[15], (H, H), jnp.float32),
        "bo1": 0.05 * jnp.arange(H, dtype=jnp.float32).reshape(1, H),
        "wo2": 0.2 * jax.random.normal(jax.random.fold_in(key, 99), (H, O),
                                       jnp.float32),
        "bo2": 0.03 * jnp.arange(O, dtype=jnp.float32).reshape(1, O),
    }
    return params


def reference(polylines, polylines_mask, p):
    """Pure-JAX (f32) reference mirroring the PyTorch forward (eval-mode BN)."""
    mask = polylines_mask
    m3 = mask[..., None]
    h = jnp.maximum(polylines @ p["w1"] * p["s1"][0] + p["b1"][0], 0.0)
    h = jnp.where(m3, h, 0.0)
    pooled = h.max(axis=2)
    cat = jnp.concatenate(
        [h, jnp.broadcast_to(pooled[:, :, None, :], h.shape)], axis=-1)
    g = jnp.maximum(cat @ p["w2a"] * p["s2a"][0] + p["b2a"][0], 0.0)
    g = jnp.where(m3, g, 0.0)
    g2 = jnp.maximum(g @ p["w2b"] * p["s2b"][0] + p["b2b"][0], 0.0)
    g2 = jnp.where(m3, g2, 0.0)
    pooled2 = g2.max(axis=2)
    valid = mask.any(axis=-1)
    o = jnp.maximum(pooled2 @ p["wo1"] + p["bo1"][0], 0.0) @ p["wo2"] + p["bo2"][0]
    return jnp.where(valid[..., None], o, 0.0)


if __name__ == "__main__":
    B, NPL, P, C = 2, 8, 16, 8
    H, O = 32, 16

    key = jax.random.PRNGKey(0)
    k_poly, k_mask, k_par = jax.random.split(key, 3)

    polylines = jax.random.normal(k_poly, (B, NPL, P, C), jnp.float32)
    polylines_mask = jax.random.bernoulli(k_mask, 0.7, (B, NPL, P))
    # make one polyline fully invalid to exercise the zero-output path
    polylines_mask = polylines_mask.at[0, 0].set(False)

    params = make_params(k_par, C, H, O)
    ref = reference(polylines, polylines_mask, params)

    # f32 compute path: tight check of block-diagonal layout / pooling / masking
    out_f32 = jax.block_until_ready(
        pointnet_polyline_encoder(polylines, polylines_mask, params,
                                  compute_dtype=jnp.float32))
    assert out_f32.shape == (B, NPL, O)
    assert jnp.allclose(out_f32, ref, atol=1e-4, rtol=1e-4), (
        f"f32 max err {jnp.max(jnp.abs(out_f32 - ref))}")

    # default path: bf16 MXU operands, f32 accumulation / elementwise
    out_bf16 = jax.block_until_ready(
        pointnet_polyline_encoder(polylines, polylines_mask, params))
    assert out_bf16.shape == (B, NPL, O)
    assert jnp.allclose(out_bf16, ref, atol=5e-2, rtol=1e-1), (
        f"bf16 max err {jnp.max(jnp.abs(out_bf16 - ref))}")

    print("KERNEL_OK")
</pallas_src>

<mosaic_0001>
module attributes {stable_mosaic.version = 11 : i64} {
  func.func @_encoder_kernel(%arg0: i32, %arg1: memref<8x128xf32, #tpu.memory_space<vmem>>, %arg2: memref<8x16xf32, #tpu.memory_space<vmem>>, %arg3: memref<128x512xf32, #tpu.memory_space<vmem>>, %arg4: memref<512x512xf32, #tpu.memory_space<vmem>>, %arg5: memref<512x512xf32, #tpu.memory_space<vmem>>, %arg6: memref<32x512xf32, #tpu.memory_space<vmem>>, %arg7: memref<96x32xf32, #tpu.memory_space<vmem>>, %arg8: memref<21x512xf32, #tpu.memory_space<vmem>>, %arg9: memref<1x16x8xf32, #tpu.memory_space<vmem>>) attributes {dimension_semantics = [#tpu.dimension_semantics<parallel>], iteration_bounds = array<i64: 2>, scalar_prefetch = 0 : i64, scratch_operands = 0 : i64, tpu.core_type = #tpu.core_type<tc>, window_params = [{transform_indices = @transform_0, window_bounds = array<i64: 8, 128>}, {transform_indices = @transform_1, window_bounds = array<i64: 8, 16>}, {pipeline_mode = #tpu.pipeline_mode<synchronous>, transform_indices = @transform_2, window_bounds = array<i64: 128, 512>}, {pipeline_mode = #tpu.pipeline_mode<synchronous>, transform_indices = @transform_3, window_bounds = array<i64: 512, 512>}, {pipeline_mode = #tpu.pipeline_mode<synchronous>, transform_indices = @transform_4, window_bounds = array<i64: 512, 512>}, {pipeline_mode = #tpu.pipeline_mode<synchronous>, transform_indices = @transform_5, window_bounds = array<i64: 32, 512>}, {pipeline_mode = #tpu.pipeline_mode<synchronous>, transform_indices = @transform_6, window_bounds = array<i64: 96, 32>}, {pipeline_mode = #tpu.pipeline_mode<synchronous>, transform_indices = @transform_7, window_bounds = array<i64: 21, 512>}, {transform_indices = @transform_8, window_bounds = array<i64: 1, 16, 8>}]} {
    %c0 = arith.constant 0 : index
    %c0_0 = arith.constant 0 : index
    %0 = vector.load %arg7[%c0, %c0_0] : memref<96x32xf32, #tpu.memory_space<vmem>>, vector<32x32xf32>
    %c32 = arith.constant 32 : index
    %c0_1 = arith.constant 0 : index
    %1 = vector.load %arg7[%c32, %c0_1] : memref<96x32xf32, #tpu.memory_space<vmem>>, vector<32x32xf32>
    %c64 = arith.constant 64 : index
    %c0_2 = arith.constant 0 : index
    %2 = vector.load %arg7[%c64, %c0_2] : memref<96x32xf32, #tpu.memory_space<vmem>>, vector<32x16xf32>
    %c0_3 = arith.constant 0 : index
    %c0_4 = arith.constant 0 : index
    %3 = vector.load %arg8[%c0_3, %c0_4] : memref<21x512xf32, #tpu.memory_space<vmem>>, vector<16x512xf32>
    %c16 = arith.constant 16 : index
    %c0_5 = arith.constant 0 : index
    %4 = vector.load %arg8[%c16, %c0_5] : memref<21x512xf32, #tpu.memory_space<vmem>>, vector<1x512xf32>
    %c17 = arith.constant 17 : index
    %c0_6 = arith.constant 0 : index
    %5 = vector.load %arg8[%c17, %c0_6] : memref<21x512xf32, #tpu.memory_space<vmem>>, vector<1x512xf32>
    %c18 = arith.constant 18 : index
    %c0_7 = arith.constant 0 : index
    %6 = vector.load %arg8[%c18, %c0_7] : memref<21x512xf32, #tpu.memory_space<vmem>>, vector<1x32xf32>
    %c19 = arith.constant 19 : index
    %c0_8 = arith.constant 0 : index
    %7 = vector.load %arg8[%c19, %c0_8] : memref<21x512xf32, #tpu.memory_space<vmem>>, vector<1x32xf32>
    %c20 = arith.constant 20 : index
    %c0_9 = arith.constant 0 : index
    %8 = vector.load %arg8[%c20, %c0_9] : memref<21x512xf32, #tpu.memory_space<vmem>>, vector<1x16xf32>
    %c0_10 = arith.constant 0 : index
    %c0_11 = arith.constant 0 : index
    %9 = vector.load %arg1[%c0_10, %c0_11] : memref<8x128xf32, #tpu.memory_space<vmem>>, vector<8x128xf32>
    %c0_12 = arith.constant 0 : index
    %c0_13 = arith.constant 0 : index
    %10 = vector.load %arg2[%c0_12, %c0_13] : memref<8x16xf32, #tpu.memory_space<vmem>>, vector<8x16xf32>
    %cst = arith.constant dense<0.000000e+00> : vector<8x512xf32>
    %11 = tpu.matmul %10, %3, %cst {dimension_numbers = #tpu.dot_dimension_numbers<[1], [0], [0], [1], [0, 0, 1, 1], [], []>} : vector<8x16xf32>, vector<16x512xf32>, vector<8x512xf32> -> vector<8x512xf32>
    %cst_14 = arith.constant dense<0xFF800000> : vector<8xf32>
    %12 = vector.multi_reduction <maximumf>, %10, %cst_14 [1] : vector<8x16xf32> to vector<8xf32>
    %13 = vector.shape_cast %12 : vector<8xf32> to vector<8x1xf32>
    %c0_15 = arith.constant 0 : index
    %c0_16 = arith.constant 0 : index
    %14 = vector.load %arg3[%c0_15, %c0_16] : memref<128x512xf32, #tpu.memory_space<vmem>>, vector<128x512xf32>
    %cst_17 = arith.constant dense<0.000000e+00> : vector<8x512xf32>
    %15 = tpu.matmul %9, %14, %cst_17 {dimension_numbers = #tpu.dot_dimension_numbers<[1], [0], [0], [1], [0, 0, 1, 1], [], []>} : vector<8x128xf32>, vector<128x512xf32>, vector<8x512xf32> -> vector<8x512xf32>
    %16 = vector.broadcast %4 : vector<1x512xf32> to vector<8x512xf32>
    %17 = arith.addf %15, %16 : vector<8x512xf32>
    %cst_18 = arith.constant 0.000000e+00 : f32
    %18 = vector.broadcast %cst_18 : f32 to vector<8x512xf32>
    %19 = arith.maximumf %17, %18 : vector<8x512xf32>
    %20 = arith.mulf %19, %11 : vector<8x512xf32>
    %21 = vector.extract_strided_slice %20 {offsets = [0, 0], sizes = [8, 256], strides = [1, 1]} : vector<8x512xf32> to vector<8x256xf32>
    %22 = vector.extract_strided_slice %20 {offsets = [0, 256], sizes = [8, 256], strides = [1, 1]} : vector<8x512xf32> to vector<8x256xf32>
    %23 = arith.maximumf %21, %22 : vector<8x256xf32>
    %24 = vector.extract_strided_slice %23 {offsets = [0, 0], sizes = [8, 128], strides = [1, 1]} : vector<8x256xf32> to vector<8x128xf32>
    %25 = vector.extract_strided_slice %23 {offsets = [0, 128], sizes = [8, 128], strides = [1, 1]} : vector<8x256xf32> to vector<8x128xf32>
    %26 = arith.maximumf %24, %25 : vector<8x128xf32>
    %27 = vector.extract_strided_slice %26 {offsets = [0, 0], sizes = [8, 64], strides = [1, 1]} : vector<8x128xf32> to vector<8x64xf32>
    %28 = vector.extract_strided_slice %26 {offsets = [0, 64], sizes = [8, 64], strides = [1, 1]} : vector<8x128xf32> to vector<8x64xf32>
    %29 = arith.maximumf %27, %28 : vector<8x64xf32>
    %30 = vector.extract_strided_slice %29 {offsets = [0, 0], sizes = [8, 32], strides = [1, 1]} : vector<8x64xf32> to vector<8x32xf32>
    %31 = vector.extract_strided_slice %29 {offsets = [0, 32], sizes = [8, 32], strides = [1, 1]} : vector<8x64xf32> to vector<8x32xf32>
    %32 = arith.maximumf %30, %31 : vector<8x32xf32>
    %c0_19 = arith.constant 0 : index
    %c0_20 = arith.constant 0 : index
    %33 = vector.load %arg4[%c0_19, %c0_20] : memref<512x512xf32, #tpu.memory_space<vmem>>, vector<512x512xf32>
    %cst_21 = arith.constant dense<0.000000e+00> : vector<8x512xf32>
    %34 = tpu.matmul %20, %33, %cst_21 {dimension_numbers = #tpu.dot_dimension_numbers<[1], [0], [0], [1], [0, 0, 1, 1], [], []>} : vector<8x512xf32>, vector<512x512xf32>, vector<8x512xf32> -> vector<8x512xf32>
    %cst_22 = arith.constant dense<0.000000e+00> : vector<8x32xf32>
    %35 = tpu.matmul %32, %0, %cst_22 {dimension_numbers = #tpu.dot_dimension_numbers<[1], [0], [0], [1], [0, 0, 1, 1], [], []>} : vector<8x32xf32>, vector<32x32xf32>, vector<8x32xf32> -> vector<8x32xf32>
    %36 = vector.broadcast %6 : vector<1x32xf32> to vector<8x32xf32>
    %37 = arith.addf %35, %36 : vector<8x32xf32>
    %c0_23 = arith.constant 0 : index
    %c0_24 = arith.constant 0 : index
    %38 = vector.load %arg6[%c0_23, %c0_24] : memref<32x512xf32, #tpu.memory_space<vmem>>, vector<32x512xf32>
    %cst_25 = arith.constant dense<0.000000e+00> : vector<8x512xf32>
    %39 = tpu.matmul %37, %38, %cst_25 {dimension_numbers = #tpu.dot_dimension_numbers<[1], [0], [0], [1], [0, 0, 1, 1], [], []>} : vector<8x32xf32>, vector<32x512xf32>, vector<8x512xf32> -> vector<8x512xf32>
    %40 = arith.addf %34, %39 : vector<8x512xf32>
    %cst_26 = arith.constant 0.000000e+00 : f32
    %41 = vector.broadcast %cst_26 : f32 to vector<8x512xf32>
    %42 = arith.maximumf %40, %41 : vector<8x512xf32>
    %c0_27 = arith.constant 0 : index
    %c0_28 = arith.constant 0 : index
    %43 = vector.load %arg5[%c0_27, %c0_28] : memref<512x512xf32, #tpu.memory_space<vmem>>, vector<512x512xf32>
    %cst_29 = arith.constant dense<0.000000e+00> : vector<8x512xf32>
    %44 = tpu.matmul %42, %43, %cst_29 {dimension_numbers = #tpu.dot_dimension_numbers<[1], [0], [0], [1], [0, 0, 1, 1], [], []>} : vector<8x512xf32>, vector<512x512xf32>, vector<8x512xf32> -> vector<8x512xf32>
    %45 = vector.broadcast %5 : vector<1x512xf32> to vector<8x512xf32>
    %46 = arith.addf %44, %45 : vector<8x512xf32>
    %cst_30 = arith.constant 0.000000e+00 : f32
    %47 = vector.broadcast %cst_30 : f32 to vector<8x512xf32>
    %48 = arith.maximumf %46, %47 : vector<8x512xf32>
    %49 = arith.mulf %48, %11 : vector<8x512xf32>
    %50 = vector.extract_strided_slice %49 {offsets = [0, 0], sizes = [8, 256], strides = [1, 1]} : vector<8x512xf32> to vector<8x256xf32>
    %51 = vector.extract_strided_slice %49 {offsets = [0, 256], sizes = [8, 256], strides = [1, 1]} : vector<8x512xf32> to vector<8x256xf32>
    %52 = arith.maximumf %50, %51 : vector<8x256xf32>
    %53 = vector.extract_strided_slice %52 {offsets = [0, 0], sizes = [8, 128], strides = [1, 1]} : vector<8x256xf32> to vector<8x128xf32>
    %54 = vector.extract_strided_slice %52 {offsets = [0, 128], sizes = [8, 128], strides = [1, 1]} : vector<8x256xf32> to vector<8x128xf32>
    %55 = arith.maximumf %53, %54 : vector<8x128xf32>
    %56 = vector.extract_strided_slice %55 {offsets = [0, 0], sizes = [8, 64], strides = [1, 1]} : vector<8x128xf32> to vector<8x64xf32>
    %57 = vector.extract_strided_slice %55 {offsets = [0, 64], sizes = [8, 64], strides = [1, 1]} : vector<8x128xf32> to vector<8x64xf32>
    %58 = arith.maximumf %56, %57 : vector<8x64xf32>
    %59 = vector.extract_strided_slice %58 {offsets = [0, 0], sizes = [8, 32], strides = [1, 1]} : vector<8x64xf32> to vector<8x32xf32>
    %60 = vector.extract_strided_slice %58 {offsets = [0, 32], sizes = [8, 32], strides = [1, 1]} : vector<8x64xf32> to vector<8x32xf32>
    %61 = arith.maximumf %59, %60 : vector<8x32xf32>
    %cst_31 = arith.constant dense<0.000000e+00> : vector<8x32xf32>
    %62 = tpu.matmul %61, %1, %cst_31 {dimension_numbers = #tpu.dot_dimension_numbers<[1], [0], [0], [1], [0, 0, 1, 1], [], []>} : vector<8x32xf32>, vector<32x32xf32>, vector<8x32xf32> -> vector<8x32xf32>
    %63 = vector.broadcast %7 : vector<1x32xf32> to vector<8x32xf32>
    %64 = arith.addf %62, %63 : vector<8x32xf32>
    %cst_32 = arith.constant 0.000000e+00 : f32
    %65 = vector.broadcast %cst_32 : f32 to vector<8x32xf32>
    %66 = arith.maximumf %64, %65 : vector<8x32xf32>
    %cst_33 = arith.constant dense<0.000000e+00> : vector<8x16xf32>
    %67 = tpu.matmul %66, %2, %cst_33 {dimension_numbers = #tpu.dot_dimension_numbers<[1], [0], [0], [1], [0, 0, 1, 1], [], []>} : vector<8x32xf32>, vector<32x16xf32>, vector<8x16xf32> -> vector<8x16xf32>
    %68 = vector.broadcast %8 : vector<1x16xf32> to vector<8x16xf32>
    %69 = arith.addf %67, %68 : vector<8x16xf32>
    %70 = vector.broadcast %13 : vector<8x1xf32> to vector<8x16xf32>
    %71 = arith.mulf %69, %70 : vector<8x16xf32>
    %72 = tpu.transpose %71, [1, 0] : vector<8x16xf32> -> vector<16x8xf32>
    %c0_34 = arith.constant 0 : index
    %c0_35 = arith.constant 0 : index
    %c0_36 = arith.constant 0 : index
    %73 = vector.load %arg9[%c0_34, %c0_35, %c0_36] : memref<1x16x8xf32, #tpu.memory_space<vmem>>, vector<1x16x8xf32>
    %74 = vector.shape_cast %73 : vector<1x16x8xf32> to vector<16x8xf32>
    %75 = vector.shape_cast %72 : vector<16x8xf32> to vector<1x16x8xf32>
    tpu.vector_store %arg9[%c0_34, %c0_35, %c0_36], %75 {strides = array<i32>} : memref<1x16x8xf32, #tpu.memory_space<vmem>>, vector<1x16x8xf32>,
    return
  }
  func.func @transform_0(%arg0: i32) -> (i32, i32) {
    %c0_i32 = arith.constant 0 : i32
    %c0_i32_0 = arith.constant 0 : i32
    return %arg0, %c0_i32 : i32, i32
  }
  func.func @transform_1(%arg0: i32) -> (i32, i32) {
    %c0_i32 = arith.constant 0 : i32
    %c0_i32_0 = arith.constant 0 : i32
    return %arg0, %c0_i32 : i32, i32
  }
  func.func @transform_2(%arg0: i32) -> (i32, i32) {
    %c0_i32 = arith.constant 0 : i32
    %c0_i32_0 = arith.constant 0 : i32
    %c0_i32_1 = arith.constant 0 : i32
    return %c0_i32, %c0_i32_0 : i32, i32
  }
  func.func @transform_3(%arg0: i32) -> (i32, i32) {
    %c0_i32 = arith.constant 0 : i32
    %c0_i32_0 = arith.constant 0 : i32
    %c0_i32_1 = arith.constant 0 : i32
    return %c0_i32, %c0_i32_0 : i32, i32
  }
  func.func @transform_4(%arg0: i32) -> (i32, i32) {
    %c0_i32 = arith.constant 0 : i32
    %c0_i32_0 = arith.constant 0 : i32
    %c0_i32_1 = arith.constant 0 : i32
    return %c0_i32, %c0_i32_0 : i32, i32
  }
  func.func @transform_5(%arg0: i32) -> (i32, i32) {
    %c0_i32 = arith.constant 0 : i32
    %c0_i32_0 = arith.constant 0 : i32
    %c0_i32_1 = arith.constant 0 : i32
    return %c0_i32, %c0_i32_0 : i32, i32
  }
  func.func @transform_6(%arg0: i32) -> (i32, i32) {
    %c0_i32 = arith.constant 0 : i32
    %c0_i32_0 = arith.constant 0 : i32
    %c0_i32_1 = arith.constant 0 : i32
    return %c0_i32, %c0_i32_0 : i32, i32
  }
  func.func @transform_7(%arg0: i32) -> (i32, i32) {
    %c0_i32 = arith.constant 0 : i32
    %c0_i32_0 = arith.constant 0 : i32
    %c0_i32_1 = arith.constant 0 : i32
    return %c0_i32, %c0_i32_0 : i32, i32
  }
  func.func @transform_8(%arg0: i32) -> (i32, i32, i32) {
    %c0_i32 = arith.constant 0 : i32
    %c0_i32_0 = arith.constant 0 : i32
    %c0_i32_1 = arith.constant 0 : i32
    return %arg0, %c0_i32, %c0_i32_0 : i32, i32, i32
  }
}

</mosaic_0001>

<llo_original>
// kernel: tile.19
$region0: #{tile.19}
  %s0 = inlined_call_operand.vmem [shape: f32[32,16,32], index: 0, kind: input, shape index: {}]
  %s1 = inlined_call_operand.vmem [shape: f32[32,512], index: 1, kind: output, shape index: {}]
  %v2 = vld [vmem:[%s0] ss:$4 sm:$0xff]
  %vm3 = vcmask 261120
  %4 = vst.msk [vmem:[%s1] ss:$8 sm:$0xf] %vm3, %v2
  %s5 = scalar_lea.vmem %s1, 4294967265
  %6 = vst.msk [vmem:[%s5] ss:$8 sm:$0xf0] %vm3, %v2
  %s7 = scalar_lea.vmem %s0, 32
  %v8 = vld [vmem:[%s7] ss:$4 sm:$0xff]
  %vm9 = vcmask 261120
  %s10 = scalar_lea.vmem %s1, 2
  %11 = vst.msk [vmem:[%s10] ss:$8 sm:$0xf] %vm9, %v8
  %s12 = scalar_lea.vmem %s1, 4294967267
  %13 = vst.msk [vmem:[%s12] ss:$8 sm:$0xf0] %vm9, %v8
  %s14 = scalar_lea.vmem %s0, 64
  %v15 = vld [vmem:[%s14] ss:$4 sm:$0xff]
  %vm16 = vcmask 261120
  %s17 = scalar_lea.vmem %s1, 4
  %18 = vst.msk [vmem:[%s17] ss:$8 sm:$0xf] %vm16, %v15
  %s19 = scalar_lea.vmem %s1, 4294967269
  %20 = vst.msk [vmem:[%s19] ss:$8 sm:$0xf0] %vm16, %v15
  %s21 = scalar_lea.vmem %s0, 96
  %v22 = vld [vmem:[%s21] ss:$4 sm:$0xff]
  %vm23 = vcmask 261120
  %s24 = scalar_lea.vmem %s1, 6
  %25 = vst.msk [vmem:[%s24] ss:$8 sm:$0xf] %vm23, %v22
  %s26 = scalar_lea.vmem %s1, 4294967271
  %27 = vst.msk [vmem:[%s26] ss:$8 sm:$0xf0] %vm23, %v22
  %s28 = scalar_lea.vmem %s0, 128
  %v29 = vld [vmem:[%s28] ss:$4 sm:$0xff]
  %vm30 = vcmask 261120
  %s31 = scalar_lea.vmem %s1, 32
  %32 = vst.msk [vmem:[%s31] ss:$8 sm:$0xf] %vm30, %v29
  %s33 = scalar_lea.vmem %s1, 1
  %34 = vst.msk [vmem:[%s33] ss:$8 sm:$0xf0] %vm30, %v29
  %s35 = scalar_lea.vmem %s0, 160
  %v36 = vld [vmem:[%s35] ss:$4 sm:$0xff]
  %vm37 = vcmask 261120
  %s38 = scalar_lea.vmem %s1, 34
  %39 = vst.msk [vmem:[%s38] ss:$8 sm:$0xf] %vm37, %v36
  %s40 = scalar_lea.vmem %s1, 3
  %41 = vst.msk [vmem:[%s40] ss:$8 sm:$0xf0] %vm37, %v36
  %s42 = scalar_lea.vmem %s0, 192
  %v43 = vld [vmem:[%s42] ss:$4 sm:$0xff]
  %vm44 = vcmask 261120
  %s45 = scalar_lea.vmem %s1, 36
  %46 = vst.msk [vmem:[%s45] ss:$8 sm:$0xf] %vm44, %v43
  %s47 = scalar_lea.vmem %s1, 5
  %48 = vst.msk [vmem:[%s47] ss:$8 sm:$0xf0] %vm44, %v43
  %s49 = scalar_lea.vmem %s0, 224
  %v50 = vld [vmem:[%s49] ss:$4 sm:$0xff]
  %vm51 = vcmask 261120
  %s52 = scalar_lea.vmem %s1, 38
  %53 = vst.msk [vmem:[%s52] ss:$8 sm:$0xf] %vm51, %v50
  %s54 = scalar_lea.vmem %s1, 7
  %55 = vst.msk [vmem:[%s54] ss:$8 sm:$0xf0] %vm51, %v50
  %s56 = scalar_lea.vmem %s0, 256
  %v57 = vld [vmem:[%s56] ss:$4 sm:$0xff]
  %vm58 = vcmask 261120
  %s59 = scalar_lea.vmem %s1, 64
  %60 = vst.msk [vmem:[%s59] ss:$8 sm:$0xf] %vm58, %v57
  %s61 = scalar_lea.vmem %s1, 33
  %62 = vst.msk [vmem:[%s61] ss:$8 sm:$0xf0] %vm58, %v57
  %s63 = scalar_lea.vmem %s0, 288
  %v64 = vld [vmem:[%s63] ss:$4 sm:$0xff]
  %vm65 = vcmask 261120
  %s66 = scalar_lea.vmem %s1, 66
  %67 = vst.msk [vmem:[%s66] ss:$8 sm:$0xf] %vm65, %v64
  %s68 = scalar_lea.vmem %s1, 35
  %69 = vst.msk [vmem:[%s68] ss:$8 sm:$0xf0] %vm65, %v64
  %s70 = scalar_lea.vmem %s0, 320
  %v71 = vld [vmem:[%s70] ss:$4 sm:$0xff]
  %vm72 = vcmask 261120
  %s73 = scalar_lea.vmem %s1, 68
  %74 = vst.msk [vmem:[%s73] ss:$8 sm:$0xf] %vm72, %v71
  %s75 = scalar_lea.vmem %s1, 37
  %76 = vst.msk [vmem:[%s75] ss:$8 sm:$0xf0] %vm72, %v71
  %s77 = scalar_lea.vmem %s0, 352
  %v78 = vld [vmem:[%s77] ss:$4 sm:$0xff]
  %vm79 = vcmask 261120
  %s80 = scalar_lea.vmem %s1, 70
  %81 = vst.msk [vmem:[%s80] ss:$8 sm:$0xf] %vm79, %v78
  %s82 = scalar_lea.vmem %s1, 39
  %83 = vst.msk [vmem:[%s82] ss:$8 sm:$0xf0] %vm79, %v78
  %s84 = scalar_lea.vmem %s0, 384
  %v85 = vld [vmem:[%s84] ss:$4 sm:$0xff]
  %vm86 = vcmask 261120
  %s87 = scalar_lea.vmem %s1, 96
  %88 = vst.msk [vmem:[%s87] ss:$8 sm:$0xf] %vm86, %v85
  %s89 = scalar_lea.vmem %s1, 65
  %90 = vst.msk [vmem:[%s89] ss:$8 sm:$0xf0] %vm86, %v85
  %s91 = scalar_lea.vmem %s0, 416
  %v92 = vld [vmem:[%s91] ss:$4 sm:$0xff]
  %vm93 = vcmask 261120
  %s94 = scalar_lea.vmem %s1, 98
  %95 = vst.msk [vmem:[%s94] ss:$8 sm:$0xf] %vm93, %v92
  %s96 = scalar_lea.vmem %s1, 67
  %97 = vst.msk [vmem:[%s96] ss:$8 sm:$0xf0] %vm93, %v92
  %s98 = scalar_lea.vmem %s0, 448
  %v99 = vld [vmem:[%s98] ss:$4 sm:$0xff]
  %vm100 = vcmask 261120
  %s101 = scalar_lea.vmem %s1, 100
  %102 = vst.msk [vmem:[%s101] ss:$8 sm:$0xf] %vm100, %v99
  %s103 = scalar_lea.vmem %s1, 69
  %104 = vst.msk [vmem:[%s103] ss:$8 sm:$0xf0] %vm100, %v99
  %s105 = scalar_lea.vmem %s0, 480
  %v106 = vld [vmem:[%s105] ss:$4 sm:$0xff]
  %vm107 = vcmask 261120
  %s108 = scalar_lea.vmem %s1, 102
  %109 = vst.msk [vmem:[%s108] ss:$8 sm:$0xf] %vm107, %v106
  %s110 = scalar_lea.vmem %s1, 71
  %111 = vst.msk [vmem:[%s110] ss:$8 sm:$0xf0] %vm107, %v106
  %s112 = scalar_lea.vmem %s0, 3
  %s113 = smov 3
  %v114 = vld [vmem:[%s112] ss:$16 sm:%s113]
  %s115 = scalar_lea.vmem %s0, 3
  %s116 = smov 12
  %v117 = vld [vmem:[%s115] ss:$16 sm:%s116]
  %vm118 = vcmask 1043458
  %v119 = vsel %vm118, %v117, %v114
  %s120 = scalar_lea.vmem %s0, 3
  %s121 = smov 48
  %v122 = vld [vmem:[%s120] ss:$16 sm:%s121]
  %vm123 = vcmask 1045508
  %v124 = vsel %vm123, %v122, %v119
  %s125 = scalar_lea.vmem %s0, 3
  %s126 = smov 192
  %v127 = vld [vmem:[%s125] ss:$16 sm:%s126]
  %vm128 = vcmask 1047558
  %v129 = vsel %vm128, %v127, %v124
  %130 = vrot.lane.b32.xlu0 %v129, 96
  %v131 = vpop.permute.xlu0 %130
  %vm132 = vcmask 1048320
  %133 = vst.msk [vmem:[%s1] sm:$0xff] %vm132, %v131
  %s134 = scalar_lea.vmem %s0, 131
  %s135 = smov 3
  %v136 = vld [vmem:[%s134] ss:$16 sm:%s135]
  %s137 = scalar_lea.vmem %s0, 131
  %s138 = smov 12
  %v139 = vld [vmem:[%s137] ss:$16 sm:%s138]
  %vm140 = vcmask 1043458
  %v141 = vsel %vm140, %v139, %v136
  %s142 = scalar_lea.vmem %s0, 131
  %s143 = smov 48
  %v144 = vld [vmem:[%s142] ss:$16 sm:%s143]
  %vm145 = vcmask 1045508
  %v146 = vsel %vm145, %v144, %v141
  %s147 = scalar_lea.vmem %s0, 131
  %s148 = smov 192
  %v149 = vld [vmem:[%s147] ss:$16 sm:%s148]
  %vm150 = vcmask 1047558
  %v151 = vsel %vm150, %v149, %v146
  %152 = vrot.lane.b32.xlu0 %v151, 96
  %v153 = vpop.permute.xlu0 %152
  %vm154 = vcmask 1048320
  %s155 = scalar_lea.vmem %s1, 32
  %156 = vst.msk [vmem:[%s155] sm:$0xff] %vm154, %v153
  %s157 = scalar_lea.vmem %s0, 259
  %s158 = smov 3
  %v159 = vld [vmem:[%s157] ss:$16 sm:%s158]
  %s160 = scalar_lea.vmem %s0, 259
  %s161 = smov 12
  %v162 = vld [vmem:[%s160] ss:$16 sm:%s161]
  %vm163 = vcmask 1043458
  %v164 = vsel %vm163, %v162, %v159
  %s165 = scalar_lea.vmem %s0, 259
  %s166 = smov 48
  %v167 = vld [vmem:[%s165] ss:$16 sm:%s166]
  %vm168 = vcmask 1045508
  %v169 = vsel %vm168, %v167, %v164
  %s170 = scalar_lea.vmem %s0, 259
  %s171 = smov 192
  %v172 = vld [vmem:[%s170] ss:$16 sm:%s171]
  %vm173 = vcmask 1047558
  %v174 = vsel %vm173, %v172, %v169
  %175 = vrot.lane.b32.xlu0 %v174, 96
  %v176 = vpop.permute.xlu0 %175
  %vm177 = vcmask 1048320
  %s178 = scalar_lea.vmem %s1, 64
  %179 = vst.msk [vmem:[%s178] sm:$0xff] %vm177, %v176
  %s180 = scalar_lea.vmem %s0, 387
  %s181 = smov 3
  %v182 = vld [vmem:[%s180] ss:$16 sm:%s181]
  %s183 = scalar_lea.vmem %s0, 387
  %s184 = smov 12
  %v185 = vld [vmem:[%s183] ss:$16 sm:%s184]
  %vm186 = vcmask 1043458
  %v187 = vsel %vm186, %v185, %v182
  %s188 = scalar_lea.vmem %s0, 387
  %s189 = smov 48
  %v190 = vld [vmem:[%s188] ss:$16 sm:%s189]
  %vm191 = vcmask 1045508
  %v192 = vsel %vm191, %v190, %v187
  %s193 = scalar_lea.vmem %s0, 387
  %s194 = smov 192
  %v195 = vld [vmem:[%s193] ss:$16 sm:%s194]
  %vm196 = vcmask 1047558
  %v197 = vsel %vm196, %v195, %v192
  %198 = vrot.lane.b32.xlu0 %v197, 96
  %v199 = vpop.permute.xlu0 %198
  %vm200 = vcmask 1048320
  %s201 = scalar_lea.vmem %s1, 96
  %202 = vst.msk [vmem:[%s201] sm:$0xff] %vm200, %v199
  %s203 = scalar_lea.vmem %s0, 7
  %s204 = smov 3
  %v205 = vld [vmem:[%s203] ss:$16 sm:%s204]
  %s206 = scalar_lea.vmem %s0, 7
  %s207 = smov 12
  %v208 = vld [vmem:[%s206] ss:$16 sm:%s207]
  %vm209 = vcmask 1043458
  %v210 = vsel %vm209, %v208, %v205
  %s211 = scalar_lea.vmem %s0, 7
  %s212 = smov 48
  %v213 = vld [vmem:[%s211] ss:$16 sm:%s212]
  %vm214 = vcmask 1045508
  %v215 = vsel %vm214, %v213, %v210
  %s216 = scalar_lea.vmem %s0, 7
  %s217 = smov 192
  %v218 = vld [vmem:[%s216] ss:$16 sm:%s217]
  %vm219 = vcmask 1047558
  %v220 = vsel %vm219, %v218, %v215
  %221 = vrot.lane.b32.xlu0 %v220, 96
  %v222 = vpop.permute.xlu0 %221
  %vm223 = vcmask 1048320
  %s224 = scalar_lea.vmem %s1, 8
  %225 = vst.msk [vmem:[%s224] sm:$0xff] %vm223, %v222
  %s226 = scalar_lea.vmem %s0, 135
  %s227 = smov 3
  %v228 = vld [vmem:[%s226] ss:$16 sm:%s227]
  %s229 = scalar_lea.vmem %s0, 135
  %s230 = smov 12
  %v231 = vld [vmem:[%s229] ss:$16 sm:%s230]
  %vm232 = vcmask 1043458
  %v233 = vsel %vm232, %v231, %v228
  %s234 = scalar_lea.vmem %s0, 135
  %s235 = smov 48
  %v236 = vld [vmem:[%s234] ss:$16 sm:%s235]
  %vm237 = vcmask 1045508
  %v238 = vsel %vm237, %v236, %v233
  %s239 = scalar_lea.vmem %s0, 135
  %s240 = smov 192
  %v241 = vld [vmem:[%s239] ss:$16 sm:%s240]
  %vm242 = vcmask 1047558
  %v243 = vsel %vm242, %v241, %v238
  %244 = vrot.lane.b32.xlu0 %v243, 96
  %v245 = vpop.permute.xlu0 %244
  %vm246 = vcmask 1048320
  %s247 = scalar_lea.vmem %s1, 40
  %248 = vst.msk [vmem:[%s247] sm:$0xff] %vm246, %v245
  %s249 = scalar_lea.vmem %s0, 263
  %s250 = smov 3
  %v251 = vld [vmem:[%s249] ss:$16 sm:%s250]
  %s252 = scalar_lea.vmem %s0, 263
  %s253 = smov 12
  %v254 = vld [vmem:[%s252] ss:$16 sm:%s253]
  %vm255 = vcmask 1043458
  %v256 = vsel %vm255, %v254, %v251
  %s257 = scalar_lea.vmem %s0, 263
  %s258 = smov 48
  %v259 = vld [vmem:[%s257] ss:$16 sm:%s258]
  %vm260 = vcmask 1045508
  %v261 = vsel %vm260, %v259, %v256
  %s262 = scalar_lea.vmem %s0, 263
  %s263 = smov 192
  %v264 = vld [vmem:[%s262] ss:$16 sm:%s263]
  %vm265 = vcmask 1047558
  %v266 = vsel %vm265, %v264, %v261
  %267 = vrot.lane.b32.xlu0 %v266, 96
  %v268 = vpop.permute.xlu0 %267
  %vm269 = vcmask 1048320
  %s270 = scalar_lea.vmem %s1, 72
  %271 = vst.msk [vmem:[%s270] sm:$0xff] %vm269, %v268
  %s272 = scalar_lea.vmem %s0, 391
  %s273 = smov 3
  %v274 = vld [vmem:[%s272] ss:$16 sm:%s273]
  %s275 = scalar_lea.vmem %s0, 391
  %s276 = smov 12
  %v277 = vld [vmem:[%s275] ss:$16 sm:%s276]
  %vm278 = vcmask 1043458
  %v279 = vsel %vm278, %v277, %v274
  %s280 = scalar_lea.vmem %s0, 391
  %s281 = smov 48
  %v282 = vld [vmem:[%s280] ss:$16 sm:%s281]
  %vm283 = vcmask 1045508
  %v284 = vsel %vm283, %v282, %v279
  %s285 = scalar_lea.vmem %s0, 391
  %s286 = smov 192
  %v287 = vld [vmem:[%s285] ss:$16 sm:%s286]
  %vm288 = vcmask 1047558
  %v289 = vsel %vm288, %v287, %v284
  %290 = vrot.lane.b32.xlu0 %v289, 96
  %v291 = vpop.permute.xlu0 %290
  %vm292 = vcmask 1048320
  %s293 = scalar_lea.vmem %s1, 104
  %294 = vst.msk [vmem:[%s293] sm:$0xff] %vm292, %v291
  %s295 = scalar_lea.vmem %s0, 11
  %s296 = smov 3
  %v297 = vld [vmem:[%s295] ss:$16 sm:%s296]
  %s298 = scalar_lea.vmem %s0, 11
  %s299 = smov 12
  %v300 = vld [vmem:[%s298] ss:$16 sm:%s299]
  %vm301 = vcmask 1043458
  %v302 = vsel %vm301, %v300, %v297
  %s303 = scalar_lea.vmem %s0, 11
  %s304 = smov 48
  %v305 = vld [vmem:[%s303] ss:$16 sm:%s304]
  %vm306 = vcmask 1045508
  %v307 = vsel %vm306, %v305, %v302
  %s308 = scalar_lea.vmem %s0, 11
  %s309 = smov 192
  %v310 = vld [vmem:[%s308] ss:$16 sm:%s309]
  %vm311 = vcmask 1047558
  %v312 = vsel %vm311, %v310, %v307
  %313 = vrot.lane.b32.xlu0 %v312, 96
  %v314 = vpop.permute.xlu0 %313
  %vm315 = vcmask 1048320
  %s316 = scalar_lea.vmem %s1, 16
  %317 = vst.msk [vmem:[%s316] sm:$0xff] %vm315, %v314
  %s318 = scalar_lea.vmem %s0, 139
  %s319 = smov 3
  %v320 = vld [vmem:[%s318] ss:$16 sm:%s319]
  %s321 = scalar_lea.vmem %s0, 139
  %s322 = smov 12
  %v323 = vld [vmem:[%s321] ss:$16 sm:%s322]
  %vm324 = vcmask 1043458
  %v325 = vsel %vm324, %v323, %v320
  %s326 = scalar_lea.vmem %s0, 139
  %s327 = smov 48
  %v328 = vld [vmem:[%s326] ss:$16 sm:%s327]
  %vm329 = vcmask 1045508
  %v330 = vsel %vm329, %v328, %v325
  %s331 = scalar_lea.vmem %s0, 139
  %s332 = smov 192
  %v333 = vld [vmem:[%s331] ss:$16 sm:%s332]
  %vm334 = vcmask 1047558
  %v335 = vsel %vm334, %v333, %v330
  %336 = vrot.lane.b32.xlu0 %v335, 96
  %v337 = vpop.permute.xlu0 %336
  %vm338 = vcmask 1048320
  %s339 = scalar_lea.vmem %s1, 48
  %340 = vst.msk [vmem:[%s339] sm:$0xff] %vm338, %v337
  %s341 = scalar_lea.vmem %s0, 267
  %s342 = smov 3
  %v343 = vld [vmem:[%s341] ss:$16 sm:%s342]
  %s344 = scalar_lea.vmem %s0, 267
  %s345 = smov 12
  %v346 = vld [vmem:[%s344] ss:$16 sm:%s345]
  %vm347 = vcmask 1043458
  %v348 = vsel %vm347, %v346, %v343
  %s349 = scalar_lea.vmem %s0, 267
  %s350 = smov 48
  %v351 = vld [vmem:[%s349] ss:$16 sm:%s350]
  %vm352 = vcmask 1045508
  %v353 = vsel %vm352, %v351, %v348
  %s354 = scalar_lea.vmem %s0, 267
  %s355 = smov 192
  %v356 = vld [vmem:[%s354] ss:$16 sm:%s355]
  %vm357 = vcmask 1047558
  %v358 = vsel %vm357, %v356, %v353
  %359 = vrot.lane.b32.xlu0 %v358, 96
  %v360 = vpop.permute.xlu0 %359
  %vm361 = vcmask 1048320
  %s362 = scalar_lea.vmem %s1, 80
  %363 = vst.msk [vmem:[%s362] sm:$0xff] %vm361, %v360
  %s364 = scalar_lea.vmem %s0, 395
  %s365 = smov 3
  %v366 = vld [vmem:[%s364] ss:$16 sm:%s365]
  %s367 = scalar_lea.vmem %s0, 395
  %s368 = smov 12
  %v369 = vld [vmem:[%s367] ss:$16 sm:%s368]
  %vm370 = vcmask 1043458
  %v371 = vsel %vm370, %v369, %v366
  %s372 = scalar_lea.vmem %s0, 395
  %s373 = smov 48
  %v374 = vld [vmem:[%s372] ss:$16 sm:%s373]
  %vm375 = vcmask 1045508
  %v376 = vsel %vm375, %v374, %v371
  %s377 = scalar_lea.vmem %s0, 395
  %s378 = smov 192
  %v379 = vld [vmem:[%s377] ss:$16 sm:%s378]
  %vm380 = vcmask 1047558
  %v381 = vsel %vm380, %v379, %v376
  %382 = vrot.lane.b32.xlu0 %v381, 96
  %v383 = vpop.permute.xlu0 %382
  %vm384 = vcmask 1048320
  %s385 = scalar_lea.vmem %s1, 112
  %386 = vst.msk [vmem:[%s385] sm:$0xff] %vm384, %v383
  %s387 = scalar_lea.vmem %s0, 15
  %s388 = smov 3
  %v389 = vld [vmem:[%s387] ss:$16 sm:%s388]
  %s390 = scalar_lea.vmem %s0, 15
  %s391 = smov 12
  %v392 = vld [vmem:[%s390] ss:$16 sm:%s391]
  %vm393 = vcmask 1043458
  %v394 = vsel %vm393, %v392, %v389
  %s395 = scalar_lea.vmem %s0, 15
  %s396 = smov 48
  %v397 = vld [vmem:[%s395] ss:$16 sm:%s396]
  %vm398 = vcmask 1045508
  %v399 = vsel %vm398, %v397, %v394
  %s400 = scalar_lea.vmem %s0, 15
  %s401 = smov 192
  %v402 = vld [vmem:[%s400] ss:$16 sm:%s401]
  %vm403 = vcmask 1047558
  %v404 = vsel %vm403, %v402, %v399
  %405 = vrot.lane.b32.xlu0 %v404, 96
  %v406 = vpop.permute.xlu0 %405
  %vm407 = vcmask 1048320
  %s408 = scalar_lea.vmem %s1, 24
  %409 = vst.msk [vmem:[%s408] sm:$0xff] %vm407, %v406
  %s410 = scalar_lea.vmem %s0, 143
  %s411 = smov 3
  %v412 = vld [vmem:[%s410] ss:$16 sm:%s411]
  %s413 = scalar_lea.vmem %s0, 143
  %s414 = smov 12
  %v415 = vld [vmem:[%s413] ss:$16 sm:%s414]
  %vm416 = vcmask 1043458
  %v417 = vsel %vm416, %v415, %v412
  %s418 = scalar_lea.vmem %s0, 143
  %s419 = smov 48
  %v420 = vld [vmem:[%s418] ss:$16 sm:%s419]
  %vm421 = vcmask 1045508
  %v422 = vsel %vm421, %v420, %v417
  %s423 = scalar_lea.vmem %s0, 143
  %s424 = smov 192
  %v425 = vld [vmem:[%s423] ss:$16 sm:%s424]
  %vm426 = vcmask 1047558
  %v427 = vsel %vm426, %v425, %v422
  %428 = vrot.lane.b32.xlu0 %v427, 96
  %v429 = vpop.permute.xlu0 %428
  %vm430 = vcmask 1048320
  %s431 = scalar_lea.vmem %s1, 56
  %432 = vst.msk [vmem:[%s431] sm:$0xff] %vm430, %v429
  %s433 = scalar_lea.vmem %s0, 271
  %s434 = smov 3
  %v435 = vld [vmem:[%s433] ss:$16 sm:%s434]
  %s436 = scalar_lea.vmem %s0, 271
  %s437 = smov 12
  %v438 = vld [vmem:[%s436] ss:$16 sm:%s437]
  %vm439 = vcmask 1043458
  %v440 = vsel %vm439, %v438, %v435
  %s441 = scalar_lea.vmem %s0, 271
  %s442 = smov 48
  %v443 = vld [vmem:[%s441] ss:$16 sm:%s442]
  %vm444 = vcmask 1045508
  %v445 = vsel %vm444, %v443, %v440
  %s446 = scalar_lea.vmem %s0, 271
  %s447 = smov 192
  %v448 = vld [vmem:[%s446] ss:$16 sm:%s447]
  %vm449 = vcmask 1047558
  %v450 = vsel %vm449, %v448, %v445
  %451 = vrot.lane.b32.xlu0 %v450, 96
  %v452 = vpop.permute.xlu0 %451
  %vm453 = vcmask 1048320
  %s454 = scalar_lea.vmem %s1, 88
  %455 = vst.msk [vmem:[%s454] sm:$0xff] %vm453, %v452
  %s456 = scalar_lea.vmem %s0, 399
  %s457 = smov 3
  %v458 = vld [vmem:[%s456] ss:$16 sm:%s457]
  %s459 = scalar_lea.vmem %s0, 399
  %s460 = smov 12
  %v461 = vld [vmem:[%s459] ss:$16 sm:%s460]
  %vm462 = vcmask 1043458
  %v463 = vsel %vm462, %v461, %v458
  %s464 = scalar_lea.vmem %s0, 399
  %s465 = smov 48
  %v466 = vld [vmem:[%s464] ss:$16 sm:%s465]
  %vm467 = vcmask 1045508
  %v468 = vsel %vm467, %v466, %v463
  %s469 = scalar_lea.vmem %s0, 399
  %s470 = smov 192
  %v471 = vld [vmem:[%s469] ss:$16 sm:%s470]
  %vm472 = vcmask 1047558
  %v473 = vsel %vm472, %v471, %v468
  %474 = vrot.lane.b32.xlu0 %v473, 96
  %v475 = vpop.permute.xlu0 %474
  %vm476 = vcmask 1048320
  %s477 = scalar_lea.vmem %s1, 120
  %478 = vst.msk [vmem:[%s477] sm:$0xff] %vm476, %v475
  %s479 = scalar_lea.vmem %s0, 2
  %s480 = smov 3
  %v481 = vld [vmem:[%s479] ss:$16 sm:%s480]
  %s482 = scalar_lea.vmem %s0, 2
  %s483 = smov 12
  %v484 = vld [vmem:[%s482] ss:$16 sm:%s483]
  %vm485 = vcmask 1043458
  %v486 = vsel %vm485, %v484, %v481
  %s487 = scalar_lea.vmem %s0, 2
  %s488 = smov 48
  %v489 = vld [vmem:[%s487] ss:$16 sm:%s488]
  %vm490 = vcmask 1045508
  %v491 = vsel %vm490, %v489, %v486
  %s492 = scalar_lea.vmem %s0, 2
  %s493 = smov 192
  %v494 = vld [vmem:[%s492] ss:$16 sm:%s493]
  %vm495 = vcmask 1047558
  %v496 = vsel %vm495, %v494, %v491
  %497 = vrot.lane.b32.xlu0 %v496, 64
  %v498 = vpop.permute.xlu0 %497
  %vm499 = vcmask 785920
  %500 = vst.msk [vmem:[%s1] sm:$0xff] %vm499, %v498
  %s501 = scalar_lea.vmem %s0, 130
  %s502 = smov 3
  %v503 = vld [vmem:[%s501] ss:$16 sm:%s502]
  %s504 = scalar_lea.vmem %s0, 130
  %s505 = smov 12
  %v506 = vld [vmem:[%s504] ss:$16 sm:%s505]
  %vm507 = vcmask 1043458
  %v508 = vsel %vm507, %v506, %v503
  %s509 = scalar_lea.vmem %s0, 130
  %s510 = smov 48
  %v511 = vld [vmem:[%s509] ss:$16 sm:%s510]
  %vm512 = vcmask 1045508
  %v513 = vsel %vm512, %v511, %v508
  %s514 = scalar_lea.vmem %s0, 130
  %s515 = smov 192
  %v516 = vld [vmem:[%s514] ss:$16 sm:%s515]
  %vm517 = vcmask 1047558
  %v518 = vsel %vm517, %v516, %v513
  %519 = vrot.lane.b32.xlu0 %v518, 64
  %v520 = vpop.permute.xlu0 %519
  %vm521 = vcmask 785920
  %s522 = scalar_lea.vmem %s1, 32
  %523 = vst.msk [vmem:[%s522] sm:$0xff] %vm521, %v520
  %s524 = scalar_lea.vmem %s0, 258
  %s525 = smov 3
  %v526 = vld [vmem:[%s524] ss:$16 sm:%s525]
  %s527 = scalar_lea.vmem %s0, 258
  %s528 = smov 12
  %v529 = vld [vmem:[%s527] ss:$16 sm:%s528]
  %vm530 = vcmask 1043458
  %v531 = vsel %vm530, %v529, %v526
  %s532 = scalar_lea.vmem %s0, 258
  %s533 = smov 48
  %v534 = vld [vmem:[%s532] ss:$16 sm:%s533]
  %vm535 = vcmask 1045508
  %v536 = vsel %vm535, %v534, %v531
  %s537 = scalar_lea.vmem %s0, 258
  %s538 = smov 192
  %v539 = vld [vmem:[%s537] ss:$16 sm:%s538]
  %vm540 = vcmask 1047558
  %v541 = vsel %vm540, %v539, %v536
  %542 = vrot.lane.b32.xlu0 %v541, 64
  %v543 = vpop.permute.xlu0 %542
  %vm544 = vcmask 785920
  %s545 = scalar_lea.vmem %s1, 64
  %546 = vst.msk [vmem:[%s545] sm:$0xff] %vm544, %v543
  %s547 = scalar_lea.vmem %s0, 386
  %s548 = smov 3
  %v549 = vld [vmem:[%s547] ss:$16 sm:%s548]
  %s550 = scalar_lea.vmem %s0, 386
  %s551 = smov 12
  %v552 = vld [vmem:[%s550] ss:$16 sm:%s551]
  %vm553 = vcmask 1043458
  %v554 = vsel %vm553, %v552, %v549
  %s555 = scalar_lea.vmem %s0, 386
  %s556 = smov 48
  %v557 = vld [vmem:[%s555] ss:$16 sm:%s556]
  %vm558 = vcmask 1045508
  %v559 = vsel %vm558, %v557, %v554
  %s560 = scalar_lea.vmem %s0, 386
  %s561 = smov 192
  %v562 = vld [vmem:[%s560] ss:$16 sm:%s561]
  %vm563 = vcmask 1047558
  %v564 = vsel %vm563, %v562, %v559
  %565 = vrot.lane.b32.xlu0 %v564, 64
  %v566 = vpop.permute.xlu0 %565
  %vm567 = vcmask 785920
  %s568 = scalar_lea.vmem %s1, 96
  %569 = vst.msk [vmem:[%s568] sm:$0xff] %vm567, %v566
  %s570 = scalar_lea.vmem %s0, 6
  %s571 = smov 3
  %v572 = vld [vmem:[%s570] ss:$16 sm:%s571]
  %s573 = scalar_lea.vmem %s0, 6
  %s574 = smov 12
  %v575 = vld [vmem:[%s573] ss:$16 sm:%s574]
  %vm576 = vcmask 1043458
  %v577 = vsel %vm576, %v575, %v572
  %s578 = scalar_lea.vmem %s0, 6
  %s579 = smov 48
  %v580 = vld [vmem:[%s578] ss:$16 sm:%s579]
  %vm581 = vcmask 1045508
  %v582 = vsel %vm581, %v580, %v577
  %s583 = scalar_lea.vmem %s0, 6
  %s584 = smov 192
  %v585 = vld [vmem:[%s583] ss:$16 sm:%s584]
  %vm586 = vcmask 1047558
  %v587 = vsel %vm586, %v585, %v582
  %588 = vrot.lane.b32.xlu0 %v587, 64
  %v589 = vpop.permute.xlu0 %588
  %vm590 = vcmask 785920
  %s591 = scalar_lea.vmem %s1, 8
  %592 = vst.msk [vmem:[%s591] sm:$0xff] %vm590, %v589
  %s593 = scalar_lea.vmem %s0, 134
  %s594 = smov 3
  %v595 = vld [vmem:[%s593] ss:$16 sm:%s594]
  %s596 = scalar_lea.vmem %s0, 134
  %s597 = smov 12
  %v598 = vld [vmem:[%s596] ss:$16 sm:%s597]
  %vm599 = vcmask 1043458
  %v600 = vsel %vm599, %v598, %v595
  %s601 = scalar_lea.vmem %s0, 134
  %s602 = smov 48
  %v603 = vld [vmem:[%s601] ss:$16 sm:%s602]
  %vm604 = vcmask 1045508
  %v605 = vsel %vm604, %v603, %v600
  %s606 = scalar_lea.vmem %s0, 134
  %s607 = smov 192
  %v608 = vld [vmem:[%s606] ss:$16 sm:%s607]
  %vm609 = vcmask 1047558
  %v610 = vsel %vm609, %v608, %v605
  %611 = vrot.lane.b32.xlu0 %v610, 64
  %v612 = vpop.permute.xlu0 %611
  %vm613 = vcmask 785920
  %s614 = scalar_lea.vmem %s1, 40
  %615 = vst.msk [vmem:[%s614] sm:$0xff] %vm613, %v612
  %s616 = scalar_lea.vmem %s0, 262
  %s617 = smov 3
  %v618 = vld [vmem:[%s616] ss:$16 sm:%s617]
  %s619 = scalar_lea.vmem %s0, 262
  %s620 = smov 12
  %v621 = vld [vmem:[%s619] ss:$16 sm:%s620]
  %vm622 = vcmask 1043458
  %v623 = vsel %vm622, %v621, %v618
  %s624 = scalar_lea.vmem %s0, 262
  %s625 = smov 48
  %v626 = vld [vmem:[%s624] ss:$16 sm:%s625]
  %vm627 = vcmask 1045508
  %v628 = vsel %vm627, %v626, %v623
  %s629 = scalar_lea.vmem %s0, 262
  %s630 = smov 192
  %v631 = vld [vmem:[%s629] ss:$16 sm:%s630]
  %vm632 = vcmask 1047558
  %v633 = vsel %vm632, %v631, %v628
  %634 = vrot.lane.b32.xlu0 %v633, 64
  %v635 = vpop.permute.xlu0 %634
  %vm636 = vcmask 785920
  %s637 = scalar_lea.vmem %s1, 72
  %638 = vst.msk [vmem:[%s637] sm:$0xff] %vm636, %v635
  %s639 = scalar_lea.vmem %s0, 390
  %s640 = smov 3
  %v641 = vld [vmem:[%s639] ss:$16 sm:%s640]
  %s642 = scalar_lea.vmem %s0, 390
  %s643 = smov 12
  %v644 = vld [vmem:[%s642] ss:$16 sm:%s643]
  %vm645 = vcmask 1043458
  %v646 = vsel %vm645, %v644, %v641
  %s647 = scalar_lea.vmem %s0, 390
  %s648 = smov 48
  %v649 = vld [vmem:[%s647] ss:$16 sm:%s648]
  %vm650 = vcmask 1045508
  %v651 = vsel %vm650, %v649, %v646
  %s652 = scalar_lea.vmem %s0, 390
  %s653 = smov 192
  %v654 = vld [vmem:[%s652] ss:$16 sm:%s653]
  %vm655 = vcmask 1047558
  %v656 = vsel %vm655, %v654, %v651
  %657 = vrot.lane.b32.xlu0 %v656, 64
  %v658 = vpop.permute.xlu0 %657
  %vm659 = vcmask 785920
  %s660 = scalar_lea.vmem %s1, 104
  %661 = vst.msk [vmem:[%s660] sm:$0xff] %vm659, %v658
  %s662 = scalar_lea.vmem %s0, 10
  %s663 = smov 3
  %v664 = vld [vmem:[%s662] ss:$16 sm:%s663]
  %s665 = scalar_lea.vmem %s0, 10
  %s666 = smov 12
  %v667 = vld [vmem:[%s665] ss:$16 sm:%s666]
  %vm668 = vcmask 1043458
  %v669 = vsel %vm668, %v667, %v664
  %s670 = scalar_lea.vmem %s0, 10
  %s671 = smov 48
  %v672 = vld [vmem:[%s670] ss:$16 sm:%s671]
  %vm673 = vcmask 1045508
  %v674 = vsel %vm673, %v672, %v669
  %s675 = scalar_lea.vmem %s0, 10
  %s676 = smov 192
  %v677 = vld [vmem:[%s675] ss:$16 sm:%s676]
  %vm678 = vcmask 1047558
  %v679 = vsel %vm678, %v677, %v674
  %680 = vrot.lane.b32.xlu0 %v679, 64
  %v681 = vpop.permute.xlu0 %680
  %vm682 = vcmask 785920
  %s683 = scalar_lea.vmem %s1, 16
  %684 = vst.msk [vmem:[%s683] sm:$0xff] %vm682, %v681
  %s685 = scalar_lea.vmem %s0, 138
  %s686 = smov 3
  %v687 = vld [vmem:[%s685] ss:$16 sm:%s686]
  %s688 = scalar_lea.vmem %s0, 138
  %s689 = smov 12
  %v690 = vld [vmem:[%s688] ss:$16 sm:%s689]
  %vm691 = vcmask 1043458
  %v692 = vsel %vm691, %v690, %v687
  %s693 = scalar_lea.vmem %s0, 138
  %s694 = smov 48
  %v695 = vld [vmem:[%s693] ss:$16 sm:%s694]
  %vm696 = vcmask 1045508
  %v697 = vsel %vm696, %v695, %v692
  %s698 = scalar_lea.vmem %s0, 138
  %s699 = smov 192
  %v700 = vld [vmem:[%s698] ss:$16 sm:%s699]
  %vm701 = vcmask 1047558
  %v702 = vsel %vm701, %v700, %v697
  %703 = vrot.lane.b32.xlu0 %v702, 64
  %v704 = vpop.permute.xlu0 %703
  %vm705 = vcmask 785920
  %s706 = scalar_lea.vmem %s1, 48
  %707 = vst.msk [vmem:[%s706] sm:$0xff] %vm705, %v704
  %s708 = scalar_lea.vmem %s0, 266
  %s709 = smov 3
  %v710 = vld [vmem:[%s708] ss:$16 sm:%s709]
  %s711 = scalar_lea.vmem %s0, 266
  %s712 = smov 12
  %v713 = vld [vmem:[%s711] ss:$16 sm:%s712]
  %vm714 = vcmask 1043458
  %v715 = vsel %vm714, %v713, %v710
  %s716 = scalar_lea.vmem %s0, 266
  %s717 = smov 48
  %v718 = vld [vmem:[%s716] ss:$16 sm:%s717]
  %vm719 = vcmask 1045508
  %v720 = vsel %vm719, %v718, %v715
  %s721 = scalar_lea.vmem %s0, 266
  %s722 = smov 192
  %v723 = vld [vmem:[%s721] ss:$16 sm:%s722]
  %vm724 = vcmask 1047558
  %v725 = vsel %vm724, %v723, %v720
  %726 = vrot.lane.b32.xlu0 %v725, 64
  %v727 = vpop.permute.xlu0 %726
  %vm728 = vcmask 785920
  %s729 = scalar_lea.vmem %s1, 80
  %730 = vst.msk [vmem:[%s729] sm:$0xff] %vm728, %v727
  %s731 = scalar_lea.vmem %s0, 394
  %s732 = smov 3
  %v733 = vld [vmem:[%s731] ss:$16 sm:%s732]
  %s734 = scalar_lea.vmem %s0, 394
  %s735 = smov 12
  %v736 = vld [vmem:[%s734] ss:$16 sm:%s735]
  %vm737 = vcmask 1043458
  %v738 = vsel %vm737, %v736, %v733
  %s739 = scalar_lea.vmem %s0, 394
  %s740 = smov 48
  %v741 = vld [vmem:[%s739] ss:$16 sm:%s740]
  %vm742 = vcmask 1045508
  %v743 = vsel %vm742, %v741, %v738
  %s744 = scalar_lea.vmem %s0, 394
  %s745 = smov 192
  %v746 = vld [vmem:[%s744] ss:$16 sm:%s745]
  %vm747 = vcmask 1047558
  %v748 = vsel %vm747, %v746, %v743
  %749 = vrot.lane.b32.xlu0 %v748, 64
  %v750 = vpop.permute.xlu0 %749
  %vm751 = vcmask 785920
  %s752 = scalar_lea.vmem %s1, 112
  %753 = vst.msk [vmem:[%s752] sm:$0xff] %vm751, %v750
  %s754 = scalar_lea.vmem %s0, 14
  %s755 = smov 3
  %v756 = vld [vmem:[%s754] ss:$16 sm:%s755]
  %s757 = scalar_lea.vmem %s0, 14
  %s758 = smov 12
  %v759 = vld [vmem:[%s757] ss:$16 sm:%s758]
  %vm760 = vcmask 1043458
  %v761 = vsel %vm760, %v759, %v756
  %s762 = scalar_lea.vmem %s0, 14
  %s763 = smov 48
  %v764 = vld [vmem:[%s762] ss:$16 sm:%s763]
  %vm765 = vcmask 1045508
  %v766 = vsel %vm765, %v764, %v761
  %s767 = scalar_lea.vmem %s0, 14
  %s768 = smov 192
  %v769 = vld [vmem:[%s767] ss:$16 sm:%s768]
  %vm770 = vcmask 1047558
  %v771 = vsel %vm770, %v769, %v766
  %772 = vrot.lane.b32.xlu0 %v771, 64
  %v773 = vpop.permute.xlu0 %772
  %vm774 = vcmask 785920
  %s775 = scalar_lea.vmem %s1, 24
  %776 = vst.msk [vmem:[%s775] sm:$0xff] %vm774, %v773
  %s777 = scalar_lea.vmem %s0, 142
  %s778 = smov 3
  %v779 = vld [vmem:[%s777] ss:$16 sm:%s778]
  %s780 = scalar_lea.vmem %s0, 142
  %s781 = smov 12
  %v782 = vld [vmem:[%s780] ss:$16 sm:%s781]
  %vm783 = vcmask 1043458
  %v784 = vsel %vm783, %v782, %v779
  %s785 = scalar_lea.vmem %s0, 142
  %s786 = smov 48
  %v787 = vld [vmem:[%s785] ss:$16 sm:%s786]
  %vm788 = vcmask 1045508
  %v789 = vsel %vm788, %v787, %v784
  %s790 = scalar_lea.vmem %s0, 142
  %s791 = smov 192
  %v792 = vld [vmem:[%s790] ss:$16 sm:%s791]
  %vm793 = vcmask 1047558
  %v794 = vsel %vm793, %v792, %v789
  %795 = vrot.lane.b32.xlu0 %v794, 64
  %v796 = vpop.permute.xlu0 %795
  %vm797 = vcmask 785920
  %s798 = scalar_lea.vmem %s1, 56
  %799 = vst.msk [vmem:[%s798] sm:$0xff] %vm797, %v796
  %s800 = scalar_lea.vmem %s0, 270
  %s801 = smov 3
  %v802 = vld [vmem:[%s800] ss:$16 sm:%s801]
  %s803 = scalar_lea.vmem %s0, 270
  %s804 = smov 12
  %v805 = vld [vmem:[%s803] ss:$16 sm:%s804]
  %vm806 = vcmask 1043458
  %v807 = vsel %vm806, %v805, %v802
  %s808 = scalar_lea.vmem %s0, 270
  %s809 = smov 48
  %v810 = vld [vmem:[%s808] ss:$16 sm:%s809]
  %vm811 = vcmask 1045508
  %v812 = vsel %vm811, %v810, %v807
  %s813 = scalar_lea.vmem %s0, 270
  %s814 = smov 192
  %v815 = vld [vmem:[%s813] ss:$16 sm:%s814]
  %vm816 = vcmask 1047558
  %v817 = vsel %vm816, %v815, %v812
  %818 = vrot.lane.b32.xlu0 %v817, 64
  %v819 = vpop.permute.xlu0 %818
  %vm820 = vcmask 785920
  %s821 = scalar_lea.vmem %s1, 88
  %822 = vst.msk [vmem:[%s821] sm:$0xff] %vm820, %v819
  %s823 = scalar_lea.vmem %s0, 398
  %s824 = smov 3
  %v825 = vld [vmem:[%s823] ss:$16 sm:%s824]
  %s826 = scalar_lea.vmem %s0, 398
  %s827 = smov 12
  %v828 = vld [vmem:[%s826] ss:$16 sm:%s827]
  %vm829 = vcmask 1043458
  %v830 = vsel %vm829, %v828, %v825
  %s831 = scalar_lea.vmem %s0, 398
  %s832 = smov 48
  %v833 = vld [vmem:[%s831] ss:$16 sm:%s832]
  %vm834 = vcmask 1045508
  %v835 = vsel %vm834, %v833, %v830
  %s836 = scalar_lea.vmem %s0, 398
  %s837 = smov 192
  %v838 = vld [vmem:[%s836] ss:$16 sm:%s837]
  %vm839 = vcmask 1047558
  %v840 = vsel %vm839, %v838, %v835
  %841 = vrot.lane.b32.xlu0 %v840, 64
  %v842 = vpop.permute.xlu0 %841
  %vm843 = vcmask 785920
  %s844 = scalar_lea.vmem %s1, 120
  %845 = vst.msk [vmem:[%s844] sm:$0xff] %vm843, %v842
  %s846 = scalar_lea.vmem %s0, 1
  %s847 = smov 3
  %v848 = vld [vmem:[%s846] ss:$16 sm:%s847]
  %s849 = scalar_lea.vmem %s0, 1
  %s850 = smov 12
  %v851 = vld [vmem:[%s849] ss:$16 sm:%s850]
  %vm852 = vcmask 1043458
  %v853 = vsel %vm852, %v851, %v848
  %s854 = scalar_lea.vmem %s0, 1
  %s855 = smov 48
  %v856 = vld [vmem:[%s854] ss:$16 sm:%s855]
  %vm857 = vcmask 1045508
  %v858 = vsel %vm857, %v856, %v853
  %s859 = scalar_lea.vmem %s0, 1
  %s860 = smov 192
  %v861 = vld [vmem:[%s859] ss:$16 sm:%s860]
  %vm862 = vcmask 1047558
  %v863 = vsel %vm862, %v861, %v858
  %864 = vrot.lane.b32.xlu0 %v863, 32
  %v865 = vpop.permute.xlu0 %864
  %vm866 = vcmask 523520
  %867 = vst.msk [vmem:[%s1] sm:$0xff] %vm866, %v865
  %s868 = scalar_lea.vmem %s0, 129
  %s869 = smov 3
  %v870 = vld [vmem:[%s868] ss:$16 sm:%s869]
  %s871 = scalar_lea.vmem %s0, 129
  %s872 = smov 12
  %v873 = vld [vmem:[%s871] ss:$16 sm:%s872]
  %vm874 = vcmask 1043458
  %v875 = vsel %vm874, %v873, %v870
  %s876 = scalar_lea.vmem %s0, 129
  %s877 = smov 48
  %v878 = vld [vmem:[%s876] ss:$16 sm:%s877]
  %vm879 = vcmask 1045508
  %v880 = vsel %vm879, %v878, %v875
  %s881 = scalar_lea.vmem %s0, 129
  %s882 = smov 192
  %v883 = vld [vmem:[%s881] ss:$16 sm:%s882]
  %vm884 = vcmask 1047558
  %v885 = vsel %vm884, %v883, %v880
  %886 = vrot.lane.b32.xlu0 %v885, 32
  %v887 = vpop.permute.xlu0 %886
  %vm888 = vcmask 523520
  %s889 = scalar_lea.vmem %s1, 32
  %890 = vst.msk [vmem:[%s889] sm:$0xff] %vm888, %v887
  %s891 = scalar_lea.vmem %s0, 257
  %s892 = smov 3
  %v893 = vld [vmem:[%s891] ss:$16 sm:%s892]
  %s894 = scalar_lea.vmem %s0, 257
  %s895 = smov 12
  %v896 = vld [vmem:[%s894] ss:$16 sm:%s895]
  %vm897 = vcmask 1043458
  %v898 = vsel %vm897, %v896, %v893
  %s899 = scalar_lea.vmem %s0, 257
  %s900 = smov 48
  %v901 = vld [vmem:[%s899] ss:$16 sm:%s900]
  %vm902 = vcmask 1045508
  %v903 = vsel %vm902, %v901, %v898
  %s904 = scalar_lea.vmem %s0, 257
  %s905 = smov 192
  %v906 = vld [vmem:[%s904] ss:$16 sm:%s905]
  %vm907 = vcmask 1047558
  %v908 = vsel %vm907, %v906, %v903
  %909 = vrot.lane.b32.xlu0 %v908, 32
  %v910 = vpop.permute.xlu0 %909
  %vm911 = vcmask 523520
  %s912 = scalar_lea.vmem %s1, 64
  %913 = vst.msk [vmem:[%s912] sm:$0xff] %vm911, %v910
  %s914 = scalar_lea.vmem %s0, 385
  %s915 = smov 3
  %v916 = vld [vmem:[%s914] ss:$16 sm:%s915]
  %s917 = scalar_lea.vmem %s0, 385
  %s918 = smov 12
  %v919 = vld [vmem:[%s917] ss:$16 sm:%s918]
  %vm920 = vcmask 1043458
  %v921 = vsel %vm920, %v919, %v916
  %s922 = scalar_lea.vmem %s0, 385
  %s923 = smov 48
  %v924 = vld [vmem:[%s922] ss:$16 sm:%s923]
  %vm925 = vcmask 1045508
  %v926 = vsel %vm925, %v924, %v921
  %s927 = scalar_lea.vmem %s0, 385
  %s928 = smov 192
  %v929 = vld [vmem:[%s927] ss:$16 sm:%s928]
  %vm930 = vcmask 1047558
  %v931 = vsel %vm930, %v929, %v926
  %932 = vrot.lane.b32.xlu0 %v931, 32
  %v933 = vpop.permute.xlu0 %932
  %vm934 = vcmask 523520
  %s935 = scalar_lea.vmem %s1, 96
  %936 = vst.msk [vmem:[%s935] sm:$0xff] %vm934, %v933
  %s937 = scalar_lea.vmem %s0, 5
  %s938 = smov 3
  %v939 = vld [vmem:[%s937] ss:$16 sm:%s938]
  %s940 = scalar_lea.vmem %s0, 5
  %s941 = smov 12
  %v942 = vld [vmem:[%s940] ss:$16 sm:%s941]
  %vm943 = vcmask 1043458
  %v944 = vsel %vm943, %v942, %v939
  %s945 = scalar_lea.vmem %s0, 5
  %s946 = smov 48
  %v947 = vld [vmem:[%s945] ss:$16 sm:%s946]
  %vm948 = vcmask 1045508
  %v949 = vsel %vm948, %v947, %v944
  %s950 = scalar_lea.vmem %s0, 5
  %s951 = smov 192
  %v952 = vld [vmem:[%s950] ss:$16 sm:%s951]
  %vm953 = vcmask 1047558
  %v954 = vsel %vm953, %v952, %v949
  %955 = vrot.lane.b32.xlu0 %v954, 32
  %v956 = vpop.permute.xlu0 %955
  %vm957 = vcmask 523520
  %s958 = scalar_lea.vmem %s1, 8
  %959 = vst.msk [vmem:[%s958] sm:$0xff] %vm957, %v956
  %s960 = scalar_lea.vmem %s0, 133
  %s961 = smov 3
  %v962 = vld [vmem:[%s960] ss:$16 sm:%s961]
  %s963 = scalar_lea.vmem %s0, 133
  %s964 = smov 12
  %v965 = vld [vmem:[%s963] ss:$16 sm:%s964]
  %vm966 = vcmask 1043458
  %v967 = vsel %vm966, %v965, %v962
  %s968 = scalar_lea.vmem %s0, 133
  %s969 = smov 48
  %v970 = vld [vmem:[%s968] ss:$16 sm:%s969]
  %vm971 = vcmask 1045508
  %v972 = vsel %vm971, %v970, %v967
  %s973 = scalar_lea.vmem %s0, 133
  %s974 = smov 192
  %v975 = vld [vmem:[%s973] ss:$16 sm:%s974]
  %vm976 = vcmask 1047558
  %v977 = vsel %vm976, %v975, %v972
  %978 = vrot.lane.b32.xlu0 %v977, 32
  %v979 = vpop.permute.xlu0 %978
  %vm980 = vcmask 523520
  %s981 = scalar_lea.vmem %s1, 40
  %982 = vst.msk [vmem:[%s981] sm:$0xff] %vm980, %v979
  %s983 = scalar_lea.vmem %s0, 261
  %s984 = smov 3
  %v985 = vld [vmem:[%s983] ss:$16 sm:%s984]
  %s986 = scalar_lea.vmem %s0, 261
  %s987 = smov 12
  %v988 = vld [vmem:[%s986] ss:$16 sm:%s987]
  %vm989 = vcmask 1043458
  %v990 = vsel %vm989, %v988, %v985
  %s991 = scalar_lea.vmem %s0, 261
  %s992 = smov 48
  %v993 = vld [vmem:[%s991] ss:$16 sm:%s992]
  %vm994 = vcmask 1045508
  %v995 = vsel %vm994, %v993, %v990
  %s996 = scalar_lea.vmem %s0, 261
  %s997 = smov 192
  %v998 = vld [vmem:[%s996] ss:$16 sm:%s997]
  %vm999 = vcmask 1047558
  %v1000 = vsel %vm999, %v998, %v995
  %1001 = vrot.lane.b32.xlu0 %v1000, 32
  %v1002 = vpop.permute.xlu0 %1001
  %vm1003 = vcmask 523520
  %s1004 = scalar_lea.vmem %s1, 72
  %1005 = vst.msk [vmem:[%s1004] sm:$0xff] %vm1003, %v1002
  %s1006 = scalar_lea.vmem %s0, 389
  %s1007 = smov 3
  %v1008 = vld [vmem:[%s1006] ss:$16 sm:%s1007]
  %s1009 = scalar_lea.vmem %s0, 389
  %s1010 = smov 12
  %v1011 = vld [vmem:[%s1009] ss:$16 sm:%s1010]
  %vm1012 = vcmask 1043458
  %v1013 = vsel %vm1012, %v1011, %v1008
  %s1014 = scalar_lea.vmem %s0, 389
  %s1015 = smov 48
  %v1016 = vld [vmem:[%s1014] ss:$16 sm:%s1015]
  %vm1017 = vcmask 1045508
  %v1018 = vsel %vm1017, %v1016, %v1013
  %s1019 = scalar_lea.vmem %s0, 389
  %s1020 = smov 192
  %v1021 = vld [vmem:[%s1019] ss:$16 sm:%s1020]
  %vm1022 = vcmask 1047558
  %v1023 = vsel %vm1022, %v1021, %v1018
  %1024 = vrot.lane.b32.xlu0 %v1023, 32
  %v1025 = vpop.permute.xlu0 %1024
  %vm1026 = vcmask 523520
  %s1027 = scalar_lea.vmem %s1, 104
  %1028 = vst.msk [vmem:[%s1027] sm:$0xff] %vm1026, %v1025
  %s1029 = scalar_lea.vmem %s0, 9
  %s1030 = smov 3
  %v1031 = vld [vmem:[%s1029] ss:$16 sm:%s1030]
  %s1032 = scalar_lea.vmem %s0, 9
  %s1033 = smov 12
  %v1034 = vld [vmem:[%s1032] ss:$16 sm:%s1033]
  %vm1035 = vcmask 1043458
  %v1036 = vsel %vm1035, %v1034, %v1031
  %s1037 = scalar_lea.vmem %s0, 9
  %s1038 = smov 48
  %v1039 = vld [vmem:[%s1037] ss:$16 sm:%s1038]
  %vm1040 = vcmask 1045508
  %v1041 = vsel %vm1040, %v1039, %v1036
  %s1042 = scalar_lea.vmem %s0, 9
  %s1043 = smov 192
  %v1044 = vld [vmem:[%s1042] ss:$16 sm:%s1043]
  %vm1045 = vcmask 1047558
  %v1046 = vsel %vm1045, %v1044, %v1041
  %1047 = vrot.lane.b32.xlu0 %v1046, 32
  %v1048 = vpop.permute.xlu0 %1047
  %vm1049 = vcmask 523520
  %s1050 = scalar_lea.vmem %s1, 16
  %1051 = vst.msk [vmem:[%s1050] sm:$0xff] %vm1049, %v1048
  %s1052 = scalar_lea.vmem %s0, 137
  %s1053 = smov 3
  %v1054 = vld [vmem:[%s1052] ss:$16 sm:%s1053]
  %s1055 = scalar_lea.vmem %s0, 137
  %s1056 = smov 12
  %v1057 = vld [vmem:[%s1055] ss:$16 sm:%s1056]
  %vm1058 = vcmask 1043458
  %v1059 = vsel %vm1058, %v1057, %v1054
  %s1060 = scalar_lea.vmem %s0, 137
  %s1061 = smov 48
  %v1062 = vld [vmem:[%s1060] ss:$16 sm:%s1061]
  %vm1063 = vcmask 1045508
  %v1064 = vsel %vm1063, %v1062, %v1059
  %s1065 = scalar_lea.vmem %s0, 137
  %s1066 = smov 192
  %v1067 = vld [vmem:[%s1065] ss:$16 sm:%s1066]
  %vm1068 = vcmask 1047558
  %v1069 = vsel %vm1068, %v1067, %v1064
  %1070 = vrot.lane.b32.xlu0 %v1069, 32
  %v1071 = vpop.permute.xlu0 %1070
  %vm1072 = vcmask 523520
  %s1073 = scalar_lea.vmem %s1, 48
  %1074 = vst.msk [vmem:[%s1073] sm:$0xff] %vm1072, %v1071
  %s1075 = scalar_lea.vmem %s0, 265
  %s1076 = smov 3
  %v1077 = vld [vmem:[%s1075] ss:$16 sm:%s1076]
  %s1078 = scalar_lea.vmem %s0, 265
  %s1079 = smov 12
  %v1080 = vld [vmem:[%s1078] ss:$16 sm:%s1079]
  %vm1081 = vcmask 1043458
  %v1082 = vsel %vm1081, %v1080, %v1077
  %s1083 = scalar_lea.vmem %s0, 265
  %s1084 = smov 48
  %v1085 = vld [vmem:[%s1083] ss:$16 sm:%s1084]
  %vm1086 = vcmask 1045508
  %v1087 = vsel %vm1086, %v1085, %v1082
  %s1088 = scalar_lea.vmem %s0, 265
  %s1089 = smov 192
  %v1090 = vld [vmem:[%s1088] ss:$16 sm:%s1089]
  %vm1091 = vcmask 1047558
  %v1092 = vsel %vm1091, %v1090, %v1087
  %1093 = vrot.lane.b32.xlu0 %v1092, 32
  %v1094 = vpop.permute.xlu0 %1093
  %vm1095 = vcmask 523520
  %s1096 = scalar_lea.vmem %s1, 80
  %1097 = vst.msk [vmem:[%s1096] sm:$0xff] %vm1095, %v1094
  %s1098 = scalar_lea.vmem %s0, 393
  %s1099 = smov 3
  %v1100 = vld [vmem:[%s1098] ss:$16 sm:%s1099]
  %s1101 = scalar_lea.vmem %s0, 393
  %s1102 = smov 12
  %v1103 = vld [vmem:[%s1101] ss:$16 sm:%s1102]
  %vm1104 = vcmask 1043458
  %v1105 = vsel %vm1104, %v1103, %v1100
  %s1106 = scalar_lea.vmem %s0, 393
  %s1107 = smov 48
  %v1108 = vld [vmem:[%s1106] ss:$16 sm:%s1107]
  %vm1109 = vcmask 1045508
  %v1110 = vsel %vm1109, %v1108, %v1105
  %s1111 = scalar_lea.vmem %s0, 393
  %s1112 = smov 192
  %v1113 = vld [vmem:[%s1111] ss:$16 sm:%s1112]
  %vm1114 = vcmask 1047558
  %v1115 = vsel %vm1114, %v1113, %v1110
  %1116 = vrot.lane.b32.xlu0 %v1115, 32
  %v1117 = vpop.permute.xlu0 %1116
  %vm1118 = vcmask 523520
  %s1119 = scalar_lea.vmem %s1, 112
  %1120 = vst.msk [vmem:[%s1119] sm:$0xff] %vm1118, %v1117
  %s1121 = scalar_lea.vmem %s0, 13
  %s1122 = smov 3
  %v1123 = vld [vmem:[%s1121] ss:$16 sm:%s1122]
  %s1124 = scalar_lea.vmem %s0, 13
  %s1125 = smov 12
  %v1126 = vld [vmem:[%s1124] ss:$16 sm:%s1125]
  %vm1127 = vcmask 1043458
  %v1128 = vsel %vm1127, %v1126, %v1123
  %s1129 = scalar_lea.vmem %s0, 13
  %s1130 = smov 48
  %v1131 = vld [vmem:[%s1129] ss:$16 sm:%s1130]
  %vm1132 = vcmask 1045508
  %v1133 = vsel %vm1132, %v1131, %v1128
  %s1134 = scalar_lea.vmem %s0, 13
  %s1135 = smov 192
  %v1136 = vld [vmem:[%s1134] ss:$16 sm:%s1135]
  %vm1137 = vcmask 1047558
  %v1138 = vsel %vm1137, %v1136, %v1133
  %1139 = vrot.lane.b32.xlu0 %v1138, 32
  %v1140 = vpop.permute.xlu0 %1139
  %vm1141 = vcmask 523520
  %s1142 = scalar_lea.vmem %s1, 24
  %1143 = vst.msk [vmem:[%s1142] sm:$0xff] %vm1141, %v1140
  %s1144 = scalar_lea.vmem %s0, 141
  %s1145 = smov 3
  %v1146 = vld [vmem:[%s1144] ss:$16 sm:%s1145]
  %s1147 = scalar_lea.vmem %s0, 141
  %s1148 = smov 12
  %v1149 = vld [vmem:[%s1147] ss:$16 sm:%s1148]
  %vm1150 = vcmask 1043458
  %v1151 = vsel %vm1150, %v1149, %v1146
  %s1152 = scalar_lea.vmem %s0, 141
  %s1153 = smov 48
  %v1154 = vld [vmem:[%s1152] ss:$16 sm:%s1153]
  %vm1155 = vcmask 1045508
  %v1156 = vsel %vm1155, %v1154, %v1151
  %s1157 = scalar_lea.vmem %s0, 141
  %s1158 = smov 192
  %v1159 = vld [vmem:[%s1157] ss:$16 sm:%s1158]
  %vm1160 = vcmask 1047558
  %v1161 = vsel %vm1160, %v1159, %v1156
  %1162 = vrot.lane.b32.xlu0 %v1161, 32
  %v1163 = vpop.permute.xlu0 %1162
  %vm1164 = vcmask 523520
  %s1165 = scalar_lea.vmem %s1, 56
  %1166 = vst.msk [vmem:[%s1165] sm:$0xff] %vm1164, %v1163
  %s1167 = scalar_lea.vmem %s0, 269
  %s1168 = smov 3
  %v1169 = vld [vmem:[%s1167] ss:$16 sm:%s1168]
  %s1170 = scalar_lea.vmem %s0, 269
  %s1171 = smov 12
  %v1172 = vld [vmem:[%s1170] ss:$16 sm:%s1171]
  %vm1173 = vcmask 1043458
  %v1174 = vsel %vm1173, %v1172, %v1169
  %s1175 = scalar_lea.vmem %s0, 269
  %s1176 = smov 48
  %v1177 = vld [vmem:[%s1175] ss:$16 sm:%s1176]
  %vm1178 = vcmask 1045508
  %v1179 = vsel %vm1178, %v1177, %v1174
  %s1180 = scalar_lea.vmem %s0, 269
  %s1181 = smov 192
  %v1182 = vld [vmem:[%s1180] ss:$16 sm:%s1181]
  %vm1183 = vcmask 1047558
  %v1184 = vsel %vm1183, %v1182, %v1179
  %1185 = vrot.lane.b32.xlu0 %v1184, 32
  %v1186 = vpop.permute.xlu0 %1185
  %vm1187 = vcmask 523520
  %s1188 = scalar_lea.vmem %s1, 88
  %1189 = vst.msk [vmem:[%s1188] sm:$0xff] %vm1187, %v1186
  %s1190 = scalar_lea.vmem %s0, 397
  %s1191 = smov 3
  %v1192 = vld [vmem:[%s1190] ss:$16 sm:%s1191]
  %s1193 = scalar_lea.vmem %s0, 397
  %s1194 = smov 12
  %v1195 = vld [vmem:[%s1193] ss:$16 sm:%s1194]
  %vm1196 = vcmask 1043458
  %v1197 = vsel %vm1196, %v1195, %v1192
  %s1198 = scalar_lea.vmem %s0, 397
  %s1199 = smov 48
  %v1200 = vld [vmem:[%s1198] ss:$16 sm:%s1199]
  %vm1201 = vcmask 1045508
  %v1202 = vsel %vm1201, %v1200, %v1197
  %s1203 = scalar_lea.vmem %s0, 397
  %s1204 = smov 192
  %v1205 = vld [vmem:[%s1203] ss:$16 sm:%s1204]
  %vm1206 = vcmask 1047558
  %v1207 = vsel %vm1206, %v1205, %v1202
  %1208 = vrot.lane.b32.xlu0 %v1207, 32
  %v1209 = vpop.permute.xlu0 %1208
  %vm1210 = vcmask 523520
  %s1211 = scalar_lea.vmem %s1, 120
  %1212 = vst.msk [vmem:[%s1211] sm:$0xff] %vm1210, %v1209

// kernel: pointnet_polyline_encoder.1
$region0: #{pointnet_polyline_encoder.1}
  #allocation0 [shape = 'u32[]', space=smem, size = 0x4, offset = 0x4, fixed_abs, tag = 'smem constant byte address 0x4 - core index']
  #allocation1 [shape = 'u32[144,128]{1,0:T(1,128)}', space=vmem, size = 0x12000, scoped, tag = 'internal scratch']
  %s0 = inlined_call_operand.vmem [shape: f32[16,128], index: 0, kind: input, shape index: {}]
  %s1 = inlined_call_operand.vmem [shape: f32[16,16], index: 1, kind: input, shape index: {}]
  %s2 = inlined_call_operand.vmem [shape: f32[128,512], index: 2, kind: input, shape index: {}]
  %s3 = inlined_call_operand.vmem [shape: f32[512,512], index: 3, kind: input, shape index: {}]
  %s4 = inlined_call_operand.vmem [shape: f32[512,512], index: 4, kind: input, shape index: {}]
  %s5 = inlined_call_operand.vmem [shape: f32[32,512], index: 5, kind: input, shape index: {}]
  %s6 = inlined_call_operand.vmem [shape: f32[96,32], index: 6, kind: input, shape index: {}]
  %s7 = inlined_call_operand.vmem [shape: f32[21,512], index: 7, kind: input, shape index: {}]
  %s8 = inlined_call_operand.vmem [shape: f32[2,16,8], index: 8, kind: output, shape index: {}]
  %s9 = sld [smem:[#allocation0]]
  $region65: #{pointnet_polyline_encoder.1} parent=0
    _
  %s11 = ssub.s32 1, %s9
  %s12 = scalar_select 0, %s11, %s9
  loop: start=0, step=1, limit=4
  $region2: #{pointnet_polyline_encoder.1} parent=0 // loop_pre_header
    _
  $region3: #{pointnet_polyline_encoder.1} parent=0 // loop_header
    %s14 = sphi 0, %s18
    %p15 = scmp.ge.s32.totalorder %s14, 4
    %s24 = sphi 0, %s26
    %s27 = sphi 0, %s24
    %s28 = sphi 0, %s27
    %s44 = sphi 0, %s28
    %s50 = sphi 0, %s52
    %s53 = sphi 0, %s50
    %s54 = sphi 0, %s53
    %s70 = sphi 0, %s54
    %s74 = sphi 0, %s74
    %s76 = sphi 0, %s74
    %s77 = sphi 0, %s76
    %s91 = sphi 0, %s77
    %s95 = sphi 0, %s95
    %s97 = sphi 0, %s95
    %s98 = sphi 0, %s97
    %s112 = sphi 0, %s98
    %s116 = sphi 0, %s116
    %s118 = sphi 0, %s116
    %s119 = sphi 0, %s118
    %s133 = sphi 0, %s119
    %s137 = sphi 0, %s137
    %s139 = sphi 0, %s137
    %s140 = sphi 0, %s139
    %s154 = sphi 0, %s140
    %s158 = sphi 0, %s158
    %s160 = sphi 0, %s158
    %s161 = sphi 0, %s160
    %s175 = sphi 0, %s161
    %s179 = sphi 0, %s179
    %s181 = sphi 0, %s179
    %s182 = sphi 0, %s181
    %s196 = sphi 0, %s182
    %s202 = sphi 0, %s204
    %s205 = sphi 0, %s202
    %s206 = sphi 0, %s205
    %s222 = sphi 0, %s206
  $region4: #{pointnet_polyline_encoder.1} parent=0 // loop_header_branch
    %17 = sbr.rel (%p15) target = $region8
  $region5: #{pointnet_polyline_encoder.1} parent=0 // loop_body
    %s19 = ssub.s32 %s14, 1
    %s20 = ssub.s32 %s14, 2
    %s21 = sadd.s32 %s14, 1
    %s22 = ssub.s32 %s14, %s21
    %p23 = scmp.eq.s32.totalorder %s22, 0
    %s25 = sadd.s32 %s24, 1
    %s26 = scalar_select %p23, %s24, %s25
    %p29 = pneg %p23
    %p30 = scmp.eq.s32.totalorder %s14, 1
    %p31 = por %p29, %p30
    %p32 = scmp.ne.s32.totalorder %s24, %s27
    %p33 = scmp.eq.s32.totalorder %s14, 0
    %p34 = por %p32, %p33
    %p35 = scmp.ne.s32.totalorder %s24, %s27
    %p36 = scmp.eq.s32.totalorder %s19, 1
    %p37 = por %p35, %p36
    %p38 = scmp.ne.s32.totalorder %s27, %s28
    %p39 = scmp.eq.s32.totalorder %s19, 0
    %p40 = por %p38, %p39
    %p41 = scmp.ne.s32.totalorder %s27, %s28
    %p42 = scmp.eq.s32.totalorder %s20, 1
    %p43 = por %p41, %p42
    %p45 = scmp.ne.s32.totalorder %s28, %s44
    %p46 = scmp.eq.s32.totalorder %s20, 0
    %p47 = por %p45, %p46
    %s48 = ssub.s32 %s14, %s21
    %p49 = scmp.eq.s32.totalorder %s48, 0
    %s51 = sadd.s32 %s50, 1
    %s52 = scalar_select %p49, %s50, %s51
    %p55 = pneg %p49
    %p56 = scmp.eq.s32.totalorder %s14, 1
    %p57 = por %p55, %p56
    %p58 = scmp.ne.s32.totalorder %s50, %s53
    %p59 = scmp.eq.s32.totalorder %s14, 0
    %p60 = por %p58, %p59
    %p61 = scmp.ne.s32.totalorder %s50, %s53
    %p62 = scmp.eq.s32.totalorder %s19, 1
    %p63 = por %p61, %p62
    %p64 = scmp.ne.s32.totalorder %s53, %s54
    %p65 = scmp.eq.s32.totalorder %s19, 0
    %p66 = por %p64, %p65
    %p67 = scmp.ne.s32.totalorder %s53, %s54
    %p68 = scmp.eq.s32.totalorder %s20, 1
    %p69 = por %p67, %p68
    %p71 = scmp.ne.s32.totalorder %s54, %s70
    %p72 = scmp.eq.s32.totalorder %s20, 0
    %p73 = por %p71, %p72
    %s75 = sadd.s32 %s74, 1
    %p78 = scmp.eq.s32.totalorder %s14, 1
    %p79 = scmp.ne.s32.totalorder %s74, %s76
    %p80 = scmp.eq.s32.totalorder %s14, 0
    %p81 = por %p79, %p80
    %p82 = scmp.ne.s32.totalorder %s74, %s76
    %p83 = scmp.eq.s32.totalorder %s19, 1
    %p84 = por %p82, %p83
    %p85 = scmp.ne.s32.totalorder %s76, %s77
    %p86 = scmp.eq.s32.totalorder %s19, 0
    %p87 = por %p85, %p86
    %p88 = scmp.ne.s32.totalorder %s76, %s77
    %p89 = scmp.eq.s32.totalorder %s20, 1
    %p90 = por %p88, %p89
    %p92 = scmp.ne.s32.totalorder %s77, %s91
    %p93 = scmp.eq.s32.totalorder %s20, 0
    %p94 = por %p92, %p93
    %s96 = sadd.s32 %s95, 1
    %p99 = scmp.eq.s32.totalorder %s14, 1
    %p100 = scmp.ne.s32.totalorder %s95, %s97
    %p101 = scmp.eq.s32.totalorder %s14, 0
    %p102 = por %p100, %p101
    %p103 = scmp.ne.s32.totalorder %s95, %s97
    %p104 = scmp.eq.s32.totalorder %s19, 1
    %p105 = por %p103, %p104
    %p106 = scmp.ne.s32.totalorder %s97, %s98
    %p107 = scmp.eq.s32.totalorder %s19, 0
    %p108 = por %p106, %p107
    %p109 = scmp.ne.s32.totalorder %s97, %s98
    %p110 = scmp.eq.s32.totalorder %s20, 1
    %p111 = por %p109, %p110
    %p113 = scmp.ne.s32.totalorder %s98, %s112
    %p114 = scmp.eq.s32.totalorder %s20, 0
    %p115 = por %p113, %p114
    %s117 = sadd.s32 %s116, 1
    %p120 = scmp.eq.s32.totalorder %s14, 1
    %p121 = scmp.ne.s32.totalorder %s116, %s118
    %p122 = scmp.eq.s32.totalorder %s14, 0
    %p123 = por %p121, %p122
    %p124 = scmp.ne.s32.totalorder %s116, %s118
    %p125 = scmp.eq.s32.totalorder %s19, 1
    %p126 = por %p124, %p125
    %p127 = scmp.ne.s32.totalorder %s118, %s119
    %p128 = scmp.eq.s32.totalorder %s19, 0
    %p129 = por %p127, %p128
    %p130 = scmp.ne.s32.totalorder %s118, %s119
    %p131 = scmp.eq.s32.totalorder %s20, 1
    %p132 = por %p130, %p131
    %p134 = scmp.ne.s32.totalorder %s119, %s133
    %p135 = scmp.eq.s32.totalorder %s20, 0
    %p136 = por %p134, %p135
    %s138 = sadd.s32 %s137, 1
    %p141 = scmp.eq.s32.totalorder %s14, 1
    %p142 = scmp.ne.s32.totalorder %s137, %s139
    %p143 = scmp.eq.s32.totalorder %s14, 0
    %p144 = por %p142, %p143
    %p145 = scmp.ne.s32.totalorder %s137, %s139
    %p146 = scmp.eq.s32.totalorder %s19, 1
    %p147 = por %p145, %p146
    %p148 = scmp.ne.s32.totalorder %s139, %s140
    %p149 = scmp.eq.s32.totalorder %s19, 0
    %p150 = por %p148, %p149
    %p151 = scmp.ne.s32.totalorder %s139, %s140
    %p152 = scmp.eq.s32.totalorder %s20, 1
    %p153 = por %p151, %p152
    %p155 = scmp.ne.s32.totalorder %s140, %s154
    %p156 = scmp.eq.s32.totalorder %s20, 0
    %p157 = por %p155, %p156
    %s159 = sadd.s32 %s158, 1
    %p162 = scmp.eq.s32.totalorder %s14, 1
    %p163 = scmp.ne.s32.totalorder %s158, %s160
    %p164 = scmp.eq.s32.totalorder %s14, 0
    %p165 = por %p163, %p164
    %p166 = scmp.ne.s32.totalorder %s158, %s160
    %p167 = scmp.eq.s32.totalorder %s19, 1
    %p168 = por %p166, %p167
    %p169 = scmp.ne.s32.totalorder %s160, %s161
    %p170 = scmp.eq.s32.totalorder %s19, 0
    %p171 = por %p169, %p170
    %p172 = scmp.ne.s32.totalorder %s160, %s161
    %p173 = scmp.eq.s32.totalorder %s20, 1
    %p174 = por %p172, %p173
    %p176 = scmp.ne.s32.totalorder %s161, %s175
    %p177 = scmp.eq.s32.totalorder %s20, 0
    %p178 = por %p176, %p177
    %s180 = sadd.s32 %s179, 1
    %p183 = scmp.eq.s32.totalorder %s14, 1
    %p184 = scmp.ne.s32.totalorder %s179, %s181
    %p185 = scmp.eq.s32.totalorder %s14, 0
    %p186 = por %p184, %p185
    %p187 = scmp.ne.s32.totalorder %s179, %s181
    %p188 = scmp.eq.s32.totalorder %s19, 1
    %p189 = por %p187, %p188
    %p190 = scmp.ne.s32.totalorder %s181, %s182
    %p191 = scmp.eq.s32.totalorder %s19, 0
    %p192 = por %p190, %p191
    %p193 = scmp.ne.s32.totalorder %s181, %s182
    %p194 = scmp.eq.s32.totalorder %s20, 1
    %p195 = por %p193, %p194
    %p197 = scmp.ne.s32.totalorder %s182, %s196
    %p198 = scmp.eq.s32.totalorder %s20, 0
    %p199 = por %p197, %p198
    %s200 = ssub.s32 %s14, %s21
    %p201 = scmp.eq.s32.totalorder %s200, 0
    %s203 = sadd.s32 %s202, 1
    %s204 = scalar_select %p201, %s202, %s203
    %p207 = pneg %p201
    %p208 = scmp.eq.s32.totalorder %s14, 1
    %p209 = por %p207, %p208
    %p210 = scmp.ne.s32.totalorder %s202, %s205
    %p211 = scmp.eq.s32.totalorder %s14, 0
    %p212 = por %p210, %p211
    %p213 = scmp.ne.s32.totalorder %s202, %s205
    %p214 = scmp.eq.s32.totalorder %s19, 1
    %p215 = por %p213, %p214
    %p216 = scmp.ne.s32.totalorder %s205, %s206
    %p217 = scmp.eq.s32.totalorder %s19, 0
    %p218 = por %p216, %p217
    %p219 = scmp.ne.s32.totalorder %s205, %s206
    %p220 = scmp.eq.s32.totalorder %s20, 1
    %p221 = por %p219, %p220
    %p223 = scmp.ne.s32.totalorder %s206, %s222
    %p224 = scmp.eq.s32.totalorder %s20, 0
    %p225 = por %p223, %p224
    %p226 = scmp.le.s32.totalorder 1, %s14
    %p227 = scmp.lt.s32.totalorder %s14, 3
    %p228 = pnand %p226, %p227
    %p229 = pneg %p228
    // Predicated region
    $region9: #{pointnet_polyline_encoder.1} parent=5 // pred_check
      _
    $region10: #{pointnet_polyline_encoder.1} parent=5 // pred_check_branch
      %231 = sbr.rel (%p228) target = $region12
    $region11: #{pointnet_polyline_encoder.1} parent=5 // pred_region
      %s232 = ssub.s32 %s14, 1
      // Predicated region
      $region13: #{pointnet_polyline_encoder.1} parent=11 // pred_check
        %p233 = pneg %p87
      $region14: #{pointnet_polyline_encoder.1} parent=11 // pred_check_branch
        %235 = sbr.rel (%p233) target = $region16
      $region15: #{pointnet_polyline_encoder.1} parent=11 // pred_region
        _
      $region16: #{pointnet_polyline_encoder.1} parent=11 // pred_fallthru
        _
      // Predicated region
      $region17: #{pointnet_polyline_encoder.1} parent=11 // pred_check
        %p236 = pneg %p108
      $region18: #{pointnet_polyline_encoder.1} parent=11 // pred_check_branch
        %238 = sbr.rel (%p236) target = $region20
      $region19: #{pointnet_polyline_encoder.1} parent=11 // pred_region
        _
      $region20: #{pointnet_polyline_encoder.1} parent=11 // pred_fallthru
        _
      // Predicated region
      $region21: #{pointnet_polyline_encoder.1} parent=11 // pred_check
        %p239 = pneg %p129
      $region22: #{pointnet_polyline_encoder.1} parent=11 // pred_check_branch
        %241 = sbr.rel (%p239) target = $region24
      $region23: #{pointnet_polyline_encoder.1} parent=11 // pred_region
        _
      $region24: #{pointnet_polyline_encoder.1} parent=11 // pred_fallthru
        _
      // Predicated region
      $region25: #{pointnet_polyline_encoder.1} parent=11 // pred_check
        %p242 = pneg %p150
      $region26: #{pointnet_polyline_encoder.1} parent=11 // pred_check_branch
        %244 = sbr.rel (%p242) target = $region28
      $region27: #{pointnet_polyline_encoder.1} parent=11 // pred_region
        _
      $region28: #{pointnet_polyline_encoder.1} parent=11 // pred_fallthru
        _
      // Predicated region
      $region29: #{pointnet_polyline_encoder.1} parent=11 // pred_check
        %p245 = pneg %p171
      $region30: #{pointnet_polyline_encoder.1} parent=11 // pred_check_branch
        %247 = sbr.rel (%p245) target = $region32
      $region31: #{pointnet_polyline_encoder.1} parent=11 // pred_region
        _
      $region32: #{pointnet_polyline_encoder.1} parent=11 // pred_fallthru
        _
      // Predicated region
      $region33: #{pointnet_polyline_encoder.1} parent=11 // pred_check
        %p248 = pneg %p192
      $region34: #{pointnet_polyline_encoder.1} parent=11 // pred_check_branch
        %250 = sbr.rel (%p248) target = $region36
      $region35: #{pointnet_polyline_encoder.1} parent=11 // pred_region
        _
      $region36: #{pointnet_polyline_encoder.1} parent=11 // pred_fallthru
        _
    $region12: #{pointnet_polyline_encoder.1} parent=5 // pred_fallthru
      _
    %p251 = scmp.lt.s32.totalorder %s14, 2
    // Predicated region
    $region37: #{pointnet_polyline_encoder.1} parent=5 // pred_check
      %p252 = pneg %p251
    $region38: #{pointnet_polyline_encoder.1} parent=5 // pred_check_branch
      %254 = sbr.rel (%p252) target = $region40
    $region39: #{pointnet_polyline_encoder.1} parent=5 // pred_region
      // Predicated region
      $region41: #{pointnet_polyline_encoder.1} parent=39 // pred_check
        %p255 = pneg %p34
      $region42: #{pointnet_polyline_encoder.1} parent=39 // pred_check_branch
        %257 = sbr.rel (%p255) target = $region44
      $region43: #{pointnet_polyline_encoder.1} parent=39 // pred_region
        %p258 = scmp.lt.s32.totalorder %s14, 1
        %s259 = scalar_select %p258, %s14, 1
        %s260 = smul.addr %s259, 8
        %s261 = scalar_lea.vmem %s0, %s260
      $region44: #{pointnet_polyline_encoder.1} parent=39 // pred_fallthru
        _
      // Predicated region
      $region45: #{pointnet_polyline_encoder.1} parent=39 // pred_check
        %p262 = pneg %p60
      $region46: #{pointnet_polyline_encoder.1} parent=39 // pred_check_branch
        %264 = sbr.rel (%p262) target = $region48
      $region47: #{pointnet_polyline_encoder.1} parent=39 // pred_region
        %p265 = scmp.lt.s32.totalorder %s14, 1
        %s266 = scalar_select %p265, %s14, 1
        %s267 = smul.addr %s266, 8
        %s268 = scalar_lea.vmem %s1, %s267
      $region48: #{pointnet_polyline_encoder.1} parent=39 // pred_fallthru
        _
    $region40: #{pointnet_polyline_encoder.1} parent=5 // pred_fallthru
      _
    %p269 = scmp.le.s32.totalorder 1, %s14
    %p270 = scmp.lt.s32.totalorder %s14, 3
    %p271 = pnand %p269, %p270
    %p272 = pneg %p271
    // Predicated region
    $region49: #{pointnet_polyline_encoder.1} parent=5 // pred_check
      _
    $region50: #{pointnet_polyline_encoder.1} parent=5 // pred_check_branch
      %274 = sbr.rel (%p271) target = $region52
    $region51: #{pointnet_polyline_encoder.1} parent=5 // pred_region
      %s275 = ssub.s32 %s14, 1
      %p276 = scmp.lt.s32.totalorder %s19, 1
      %s277 = scalar_select %p276, %s19, 1
      %s278 = smul.addr %s277, 8
      %s279 = scalar_lea.vmem %s0, %s278
      %p280 = pneg %p40
      %p281 = pneg %p37
      %p282 = scmp.lt.s32.totalorder %s19, 1
      %s283 = scalar_select %p282, %s19, 1
      %s284 = smul.addr %s283, 8
      %s285 = scalar_lea.vmem %s1, %s284
      %p286 = pneg %p66
      %p287 = pneg %p63
      %p288 = pneg %p87
      %p289 = pneg %p84
      %p290 = pneg %p108
      %p291 = pneg %p105
      %p292 = pneg %p129
      %p293 = pneg %p126
      %p294 = pneg %p150
      %p295 = pneg %p147
      %p296 = pneg %p171
      %p297 = pneg %p168
      %p298 = pneg %p192
      %p299 = pneg %p189
      %p300 = pneg %p218
      %p301 = pneg %p215
      %p302 = scmp.lt.s32.totalorder %s19, 1
      %s303 = scalar_select %p302, %s19, 1
      %s304 = smul.addr %s303, 2
      %s305 = smul.addr %s304, 8
      %s306 = scalar_lea.vmem %s8, %s305
      %p307 = scmp.lt.s32.totalorder %s19, 1
      %s308 = scalar_select %p307, %s19, 1
      %s309 = smul.addr %s308, 8
      %s310 = scalar_lea.vmem %s0, %s309
      %p311 = scmp.lt.s32.totalorder %s19, 1
      %s312 = scalar_select %p311, %s19, 1
      %s313 = smul.addr %s312, 8
      %s314 = scalar_lea.vmem %s1, %s313
      %p315 = scmp.lt.s32.totalorder %s19, 1
      %s316 = scalar_select %p315, %s19, 1
      %s317 = smul.addr %s316, 2
      %s318 = smul.addr %s317, 8
      %s319 = scalar_lea.vmem %s8, %s318
      %v320 = vld [vmem:[%s6] sm:$0xff]
      %v321 = vld [vmem:[%s6 + $0x8] sm:$0xff]
      %v322 = vld [vmem:[%s6 + $0x10] sm:$0xff]
      %v323 = vld [vmem:[%s6 + $0x18] sm:$0xff]
      %v324 = vld [vmem:[%s6 + $0x20] sm:$0xff]
      %v325 = vld [vmem:[%s6 + $0x28] sm:$0xff]
      %v326 = vld [vmem:[%s6 + $0x30] sm:$0xff]
      %v327 = vld [vmem:[%s6 + $0x38] sm:$0xff]
      %v328 = vld [vmem:[%s6 + $0x40] sm:$0xff]
      %v329 = vld [vmem:[%s6 + $0x48] sm:$0xff]
      %v330 = vld [vmem:[%s6 + $0x50] sm:$0xff]
      %v331 = vld [vmem:[%s6 + $0x58] sm:$0xff]
      %v332 = vld [vmem:[%s7] sm:$0xff]
      %v333 = vld [vmem:[%s7 + $0x8] sm:$0xff]
      %v334 = vld [vmem:[%s7 + $0x10] sm:$0xff]
      %v335 = vld [vmem:[%s7 + $0x18] sm:$0xff]
      %v336 = vld [vmem:[%s7 + $0x20] sm:$0xff]
      %v337 = vld [vmem:[%s7 + $0x28] sm:$0xff]
      %v338 = vld [vmem:[%s7 + $0x30] sm:$0xff]
      %v339 = vld [vmem:[%s7 + $0x38] sm:$0xff]
      %s340 = scalar_lea.vmem %s7, 64
      %v341 = vld [vmem:[%s340] ss:$8 sm:$0xf]
      %s342 = scalar_lea.vmem %s7, 65
      %v343 = vld [vmem:[%s342] ss:$8 sm:$0xf]
      %v344 = vld [vmem:[%s7 + $0x42] ss:$0 sm:$0xff]
      %v345 = vld [vmem:[%s7 + $0x43] ss:$0 sm:$0xff]
      %v346 = vld [vmem:[%s7 + $0x44] ss:$0 sm:$0xff]
      %v347 = vld [vmem:[%s310] sm:$0xff]
      %v348 = vld [vmem:[%s314] sm:$0xff]
      %vm349 = vcmask 130048
      %v351 = vsel %vm349, %v348, 0
      %353 = vmatprep.subr.mxu0 %v333
      %354 = vmatpush1.msra.mxu0 %v332
      %355 = vmatprep.subr.mxu0 %v337
      %356 = vmatpush1.msra.mxu0 %v336
      %357 = vmatprep.subr.mxu0 0.0
      %358 = vmatpush1.msra.mxu0 0.0
      %359 = vmatprep.subr.mxu0 0.0
      %360 = vmatpush1.msra.mxu0 0.0
      %361 = vmatprep.subr.mxu0 0.0
      %362 = vmatpush1.msra.mxu0 0.0
      %363 = vmatprep.subr.mxu0 0.0
      %364 = vmatpush1.msra.mxu0 0.0
      %365 = vmatprep.subr.mxu0 0.0
      %366 = vmatpush1.msra.mxu0 0.0
      %367 = vmatprep.subr.mxu0 0.0
      %368 = vmatpush1.msra.mxu0 0.0
      %369 = vmatprep.subr.mxu0 0.0
      %370 = vmatpush1.msra.mxu0 0.0
      %371 = vmatprep.subr.mxu0 0.0
      %372 = vmatpush1.msra.mxu0 0.0
      %373 = vmatprep.subr.mxu0 0.0
      %374 = vmatpush1.msra.mxu0 0.0
      %375 = vmatprep.subr.mxu0 0.0
      %376 = vmatpush1.msra.mxu0 0.0
      %377 = vmatprep.subr.mxu0 0.0
      %378 = vmatpush1.msra.mxu0 0.0
      %379 = vmatprep.subr.mxu0 0.0
      %380 = vmatpush1.msra.mxu0 0.0
      %381 = vmatprep.subr.mxu0 0.0
      %382 = vmatpush1.msra.mxu0 0.0
      %383 = vmatprep.subr.mxu0 0.0
      %384 = vmatpush1.msra.mxu0 0.0
      %385 = vmatprep.subr.mxu0 0.0
      %386 = vmatpush1.msra.mxu0 0.0
      %387 = vmatprep.subr.mxu0 0.0
      %388 = vmatpush1.msra.mxu0 0.0
      %389 = vmatprep.subr.mxu0 0.0
      %390 = vmatpush1.msra.mxu0 0.0
      %391 = vmatprep.subr.mxu0 0.0
      %392 = vmatpush1.msra.mxu0 0.0
      %393 = vmatprep.subr.mxu0 0.0
      %394 = vmatpush1.msra.mxu0 0.0
      %395 = vmatprep.subr.mxu0 0.0
      %396 = vmatpush1.msra.mxu0 0.0
      %397 = vmatprep.subr.mxu0 0.0
      %398 = vmatpush1.msra.mxu0 0.0
      %399 = vmatprep.subr.mxu0 0.0
      %400 = vmatpush1.msra.mxu0 0.0
      %401 = vmatprep.subr.mxu0 0.0
      %402 = vmatpush1.msra.mxu0 0.0
      %403 = vmatprep.subr.mxu0 0.0
      %404 = vmatpush1.msra.mxu0 0.0
      %405 = vmatprep.subr.mxu0 0.0
      %406 = vmatpush1.msra.mxu0 0.0
      %407 = vmatprep.subr.mxu0 0.0
      %408 = vmatpush1.msra.mxu0 0.0
      %409 = vmatprep.subr.mxu0 0.0
      %410 = vmatpush1.msra.mxu0 0.0
      %411 = vmatprep.subr.mxu0 0.0
      %412 = vmatpush1.msra.mxu0 0.0
      %413 = vmatprep.subr.mxu0 0.0
      %414 = vmatpush1.msra.mxu0 0.0
      %415 = vmatprep.subr.mxu0 0.0
      %416 = vmatpush1.msra.mxu0 0.0
      %417 = vmatprep.mubr.f32.mxu0 0.0
      %418 = vmatmul.mubr.f32.gmra.mrb[0].mxu0 %v351
      %v419 = vpop.f32.mrb[0].mxu0
      %v420 = vadd.f32 0.0, %v419
      %v421 = vpop.f32.mrb[0].mxu0
      %v422 = vadd.f32 0.0, %v421
      %423 = vdwg.mxu0
      %424 = vmatprep.subr.mxu0 %v335
      %425 = vmatpush1.msra.mxu0 %v334
      %426 = vmatprep.subr.mxu0 %v339
      %427 = vmatpush1.msra.mxu0 %v338
      %428 = vmatprep.subr.mxu0 0.0
      %429 = vmatpush1.msra.mxu0 0.0
      %430 = vmatprep.subr.mxu0 0.0
      %431 = vmatpush1.msra.mxu0 0.0
      %432 = vmatprep.subr.mxu0 0.0
      %433 = vmatpush1.msra.mxu0 0.0
      %434 = vmatprep.subr.mxu0 0.0
      %435 = vmatpush1.msra.mxu0 0.0
      %436 = vmatprep.subr.mxu0 0.0
      %437 = vmatpush1.msra.mxu0 0.0
      %438 = vmatprep.subr.mxu0 0.0
      %439 = vmatpush1.msra.mxu0 0.0
      %440 = vmatprep.subr.mxu0 0.0
      %441 = vmatpush1.msra.mxu0 0.0
      %442 = vmatprep.subr.mxu0 0.0
      %443 = vmatpush1.msra.mxu0 0.0
      %444 = vmatprep.subr.mxu0 0.0
      %445 = vmatpush1.msra.mxu0 0.0
      %446 = vmatprep.subr.mxu0 0.0
      %447 = vmatpush1.msra.mxu0 0.0
      %448 = vmatprep.subr.mxu0 0.0
      %449 = vmatpush1.msra.mxu0 0.0
      %450 = vmatprep.subr.mxu0 0.0
      %451 = vmatpush1.msra.mxu0 0.0
      %452 = vmatprep.subr.mxu0 0.0
      %453 = vmatpush1.msra.mxu0 0.0
      %454 = vmatprep.subr.mxu0 0.0
      %455 = vmatpush1.msra.mxu0 0.0
      %456 = vmatprep.subr.mxu0 0.0
      %457 = vmatpush1.msra.mxu0 0.0
      %458 = vmatprep.subr.mxu0 0.0
      %459 = vmatpush1.msra.mxu0 0.0
      %460 = vmatprep.subr.mxu0 0.0
      %461 = vmatpush1.msra.mxu0 0.0
      %462 = vmatprep.subr.mxu0 0.0
      %463 = vmatpush1.msra.mxu0 0.0
      %464 = vmatprep.subr.mxu0 0.0
      %465 = vmatpush1.msra.mxu0 0.0
      %466 = vmatprep.subr.mxu0 0.0
      %467 = vmatpush1.msra.mxu0 0.0
      %468 = vmatprep.subr.mxu0 0.0
      %469 = vmatpush1.msra.mxu0 0.0
      %470 = vmatprep.subr.mxu0 0.0
      %471 = vmatpush1.msra.mxu0 0.0
      %472 = vmatprep.subr.mxu0 0.0
      %473 = vmatpush1.msra.mxu0 0.0
      %474 = vmatprep.subr.mxu0 0.0
      %475 = vmatpush1.msra.mxu0 0.0
      %476 = vmatprep.subr.mxu0 0.0
      %477 = vmatpush1.msra.mxu0 0.0
      %478 = vmatprep.subr.mxu0 0.0
      %479 = vmatpush1.msra.mxu0 0.0
      %480 = vmatprep.subr.mxu0 0.0
      %481 = vmatpush1.msra.mxu0 0.0
      %482 = vmatprep.subr.mxu0 0.0
      %483 = vmatpush1.msra.mxu0 0.0
      %484 = vmatprep.subr.mxu0 0.0
      %485 = vmatpush1.msra.mxu0 0.0
      %486 = vmatprep.subr.mxu0 0.0
      %487 = vmatpush1.msra.mxu0 0.0
      %488 = vmatprep.mubr.f32.mxu0 0.0
      %489 = vmatmul.mubr.f32.gmra.mrb[0].mxu0 %v351
      %v490 = vpop.f32.mrb[0].mxu0
      %v491 = vadd.f32 0.0, %v490
      %v492 = vpop.f32.mrb[0].mxu0
      %v493 = vadd.f32 0.0, %v492
      %494 = vdwg.mxu0
      %v495 = vsel %vm349, %v348, -inf
      %496 = vmax.xlane.f32.xlu0 %v495
      %v497 = vpop.xlane.xlu0 %496
      %v498 = vld [vmem:[%s2] sm:$0xff]
      %v499 = vld [vmem:[%s2 + $0x8] sm:$0xff]
      %v500 = vld [vmem:[%s2 + $0x10] sm:$0xff]
      %v501 = vld [vmem:[%s2 + $0x18] sm:$0xff]
      %v502 = vld [vmem:[%s2 + $0x20] sm:$0xff]
      %v503 = vld [vmem:[%s2 + $0x28] sm:$0xff]
      %v504 = vld [vmem:[%s2 + $0x30] sm:$0xff]
      %v505 = vld [vmem:[%s2 + $0x38] sm:$0xff]
      %v506 = vld [vmem:[%s2 + $0x40] sm:$0xff]
      %v507 = vld [vmem:[%s2 + $0x48] sm:$0xff]
      %v508 = vld [vmem:[%s2 + $0x50] sm:$0xff]
      %v509 = vld [vmem:[%s2 + $0x58] sm:$0xff]
      %v510 = vld [vmem:[%s2 + $0x60] sm:$0xff]
      %v511 = vld [vmem:[%s2 + $0x68] sm:$0xff]
      %v512 = vld [vmem:[%s2 + $0x70] sm:$0xff]
      %v513 = vld [vmem:[%s2 + $0x78] sm:$0xff]
      %v514 = vld [vmem:[%s2 + $0x80] sm:$0xff]
      %v515 = vld [vmem:[%s2 + $0x88] sm:$0xff]
      %v516 = vld [vmem:[%s2 + $0x90] sm:$0xff]
      %v517 = vld [vmem:[%s2 + $0x98] sm:$0xff]
      %v518 = vld [vmem:[%s2 + $0xa0] sm:$0xff]
      %v519 = vld [vmem:[%s2 + $0xa8] sm:$0xff]
      %v520 = vld [vmem:[%s2 + $0xb0] sm:$0xff]
      %v521 = vld [vmem:[%s2 + $0xb8] sm:$0xff]
      %v522 = vld [vmem:[%s2 + $0xc0] sm:$0xff]
      %v523 = vld [vmem:[%s2 + $0xc8] sm:$0xff]
      %v524 = vld [vmem:[%s2 + $0xd0] sm:$0xff]
      %v525 = vld [vmem:[%s2 + $0xd8] sm:$0xff]
      %v526 = vld [vmem:[%s2 + $0xe0] sm:$0xff]
      %v527 = vld [vmem:[%s2 + $0xe8] sm:$0xff]
      %v528 = vld [vmem:[%s2 + $0xf0] sm:$0xff]
      %v529 = vld [vmem:[%s2 + $0xf8] sm:$0xff]
      %v530 = vld [vmem:[%s2 + $0x100] sm:$0xff]
      %v531 = vld [vmem:[%s2 + $0x108] sm:$0xff]
      %v532 = vld [vmem:[%s2 + $0x110] sm:$0xff]
      %v533 = vld [vmem:[%s2 + $0x118] sm:$0xff]
      %v534 = vld [vmem:[%s2 + $0x120] sm:$0xff]
      %v535 = vld [vmem:[%s2 + $0x128] sm:$0xff]
      %v536 = vld [vmem:[%s2 + $0x130] sm:$0xff]
      %v537 = vld [vmem:[%s2 + $0x138] sm:$0xff]
      %v538 = vld [vmem:[%s2 + $0x140] sm:$0xff]
      %v539 = vld [vmem:[%s2 + $0x148] sm:$0xff]
      %v540 = vld [vmem:[%s2 + $0x150] sm:$0xff]
      %v541 = vld [vmem:[%s2 + $0x158] sm:$0xff]
      %v542 = vld [vmem:[%s2 + $0x160] sm:$0xff]
      %v543 = vld [vmem:[%s2 + $0x168] sm:$0xff]
      %v544 = vld [vmem:[%s2 + $0x170] sm:$0xff]
      %v545 = vld [vmem:[%s2 + $0x178] sm:$0xff]
      %v546 = vld [vmem:[%s2 + $0x180] sm:$0xff]
      %v547 = vld [vmem:[%s2 + $0x188] sm:$0xff]
      %v548 = vld [vmem:[%s2 + $0x190] sm:$0xff]
      %v549 = vld [vmem:[%s2 + $0x198] sm:$0xff]
      %v550 = vld [vmem:[%s2 + $0x1a0] sm:$0xff]
      %v551 = vld [vmem:[%s2 + $0x1a8] sm:$0xff]
      %v552 = vld [vmem:[%s2 + $0x1b0] sm:$0xff]
      %v553 = vld [vmem:[%s2 + $0x1b8] sm:$0xff]
      %v554 = vld [vmem:[%s2 + $0x1c0] sm:$0xff]
      %v555 = vld [vmem:[%s2 + $0x1c8] sm:$0xff]
      %v556 = vld [vmem:[%s2 + $0x1d0] sm:$0xff]
      %v557 = vld [vmem:[%s2 + $0x1d8] sm:$0xff]
      %v558 = vld [vmem:[%s2 + $0x1e0] sm:$0xff]
      %v559 = vld [vmem:[%s2 + $0x1e8] sm:$0xff]
      %v560 = vld [vmem:[%s2 + $0x1f0] sm:$0xff]
      %v561 = vld [vmem:[%s2 + $0x1f8] sm:$0xff]
      %v563 = vlaneseq
      %v564 = vshrl.u32 %v563, 7
      %v565 = vsub.s32 0, %v564
      %v566 = vrot.slane %v341, %v565
      %v567 = vlaneseq
      %v568 = vshrl.u32 %v567, 7
      %v569 = vsub.s32 1, %v568
      %v570 = vrot.slane %v341, %v569
      %v571 = vlaneseq
      %v572 = vshrl.u32 %v571, 7
      %v573 = vsub.s32 2, %v572
      %v574 = vrot.slane %v341, %v573
      %v575 = vlaneseq
      %v576 = vshrl.u32 %v575, 7
      %v577 = vsub.s32 3, %v576
      %v578 = vrot.slane %v341, %v577
      %583 = vmatprep.subr.mxu0 %v499
      %584 = vmatpush1.msra.mxu0 %v498
      %585 = vmatprep.subr.mxu0 %v503
      %586 = vmatpush1.msra.mxu0 %v502
      %587 = vmatprep.subr.mxu0 %v507
      %588 = vmatpush1.msra.mxu0 %v506
      %589 = vmatprep.subr.mxu0 %v511
      %590 = vmatpush1.msra.mxu0 %v510
      %591 = vmatprep.subr.mxu0 %v515
      %592 = vmatpush1.msra.mxu0 %v514
      %593 = vmatprep.subr.mxu0 %v519
      %594 = vmatpush1.msra.mxu0 %v518
      %595 = vmatprep.subr.mxu0 %v523
      %596 = vmatpush1.msra.mxu0 %v522
      %597 = vmatprep.subr.mxu0 %v527
      %598 = vmatpush1.msra.mxu0 %v526
      %599 = vmatprep.subr.mxu0 %v531
      %600 = vmatpush1.msra.mxu0 %v530
      %601 = vmatprep.subr.mxu0 %v535
      %602 = vmatpush1.msra.mxu0 %v534
      %603 = vmatprep.subr.mxu0 %v539
      %604 = vmatpush1.msra.mxu0 %v538
      %605 = vmatprep.subr.mxu0 %v543
      %606 = vmatpush1.msra.mxu0 %v542
      %607 = vmatprep.subr.mxu0 %v547
      %608 = vmatpush1.msra.mxu0 %v546
      %609 = vmatprep.subr.mxu0 %v551
      %610 = vmatpush1.msra.mxu0 %v550
      %611 = vmatprep.subr.mxu0 %v555
      %612 = vmatpush1.msra.mxu0 %v554
      %613 = vmatprep.subr.mxu0 %v559
      %614 = vmatpush1.msra.mxu0 %v558
      %615 = vmatprep.subr.mxu0 0.0
      %616 = vmatpush1.msra.mxu0 0.0
      %617 = vmatprep.subr.mxu0 0.0
      %618 = vmatpush1.msra.mxu0 0.0
      %619 = vmatprep.subr.mxu0 0.0
      %620 = vmatpush1.msra.mxu0 0.0
      %621 = vmatprep.subr.mxu0 0.0
      %622 = vmatpush1.msra.mxu0 0.0
      %623 = vmatprep.subr.mxu0 0.0
      %624 = vmatpush1.msra.mxu0 0.0
      %625 = vmatprep.subr.mxu0 0.0
      %626 = vmatpush1.msra.mxu0 0.0
      %627 = vmatprep.subr.mxu0 0.0
      %628 = vmatpush1.msra.mxu0 0.0
      %629 = vmatprep.subr.mxu0 0.0
      %630 = vmatpush1.msra.mxu0 0.0
      %631 = vmatprep.subr.mxu0 0.0
      %632 = vmatpush1.msra.mxu0 0.0
      %633 = vmatprep.subr.mxu0 0.0
      %634 = vmatpush1.msra.mxu0 0.0
      %635 = vmatprep.subr.mxu0 0.0
      %636 = vmatpush1.msra.mxu0 0.0
      %637 = vmatprep.subr.mxu0 0.0
      %638 = vmatpush1.msra.mxu0 0.0
      %639 = vmatprep.subr.mxu0 0.0
      %640 = vmatpush1.msra.mxu0 0.0
      %641 = vmatprep.subr.mxu0 0.0
      %642 = vmatpush1.msra.mxu0 0.0
      %643 = vmatprep.subr.mxu0 0.0
      %644 = vmatpush1.msra.mxu0 0.0
      %645 = vmatprep.subr.mxu0 0.0
      %646 = vmatpush1.msra.mxu0 0.0
      %647 = vmatprep.mubr.f32.mxu0 0.0
      %648 = vmatmul.mubr.f32.gmra.mrb[0].mxu0 %v347
      %v649 = vpop.f32.mrb[0].mxu0
      %v650 = vadd.f32 %v566, %v649
      %v651 = vpop.f32.mrb[0].mxu0
      %v652 = vadd.f32 %v570, %v651
      %653 = vdwg.mxu0
      %654 = vmatprep.subr.mxu0 %v501
      %655 = vmatpush1.msra.mxu0 %v500
      %656 = vmatprep.subr.mxu0 %v505
      %657 = vmatpush1.msra.mxu0 %v504
      %658 = vmatprep.subr.mxu0 %v509
      %659 = vmatpush1.msra.mxu0 %v508
      %660 = vmatprep.subr.mxu0 %v513
      %661 = vmatpush1.msra.mxu0 %v512
      %662 = vmatprep.subr.mxu0 %v517
      %663 = vmatpush1.msra.mxu0 %v516
      %664 = vmatprep.subr.mxu0 %v521
      %665 = vmatpush1.msra.mxu0 %v520
      %666 = vmatprep.subr.mxu0 %v525
      %667 = vmatpush1.msra.mxu0 %v524
      %668 = vmatprep.subr.mxu0 %v529
      %669 = vmatpush1.msra.mxu0 %v528
      %670 = vmatprep.subr.mxu0 %v533
      %671 = vmatpush1.msra.mxu0 %v532
      %672 = vmatprep.subr.mxu0 %v537
      %673 = vmatpush1.msra.mxu0 %v536
      %674 = vmatprep.subr.mxu0 %v541
      %675 = vmatpush1.msra.mxu0 %v540
      %676 = vmatprep.subr.mxu0 %v545
      %677 = vmatpush1.msra.mxu0 %v544
      %678 = vmatprep.subr.mxu0 %v549
      %679 = vmatpush1.msra.mxu0 %v548
      %680 = vmatprep.subr.mxu0 %v553
      %681 = vmatpush1.msra.mxu0 %v552
      %682 = vmatprep.subr.mxu0 %v557
      %683 = vmatpush1.msra.mxu0 %v556
      %684 = vmatprep.subr.mxu0 %v561
      %685 = vmatpush1.msra.mxu0 %v560
      %686 = vmatprep.subr.mxu0 0.0
      %687 = vmatpush1.msra.mxu0 0.0
      %688 = vmatprep.subr.mxu0 0.0
      %689 = vmatpush1.msra.mxu0 0.0
      %690 = vmatprep.subr.mxu0 0.0
      %691 = vmatpush1.msra.mxu0 0.0
      %692 = vmatprep.subr.mxu0 0.0
      %693 = vmatpush1.msra.mxu0 0.0
      %694 = vmatprep.subr.mxu0 0.0
      %695 = vmatpush1.msra.mxu0 0.0
      %696 = vmatprep.subr.mxu0 0.0
      %697 = vmatpush1.msra.mxu0 0.0
      %698 = vmatprep.subr.mxu0 0.0
      %699 = vmatpush1.msra.mxu0 0.0
      %700 = vmatprep.subr.mxu0 0.0
      %701 = vmatpush1.msra.mxu0 0.0
      %702 = vmatprep.subr.mxu0 0.0
      %703 = vmatpush1.msra.mxu0 0.0
      %704 = vmatprep.subr.mxu0 0.0
      %705 = vmatpush1.msra.mxu0 0.0
      %706 = vmatprep.subr.mxu0 0.0
      %707 = vmatpush1.msra.mxu0 0.0
      %708 = vmatprep.subr.mxu0 0.0
      %709 = vmatpush1.msra.mxu0 0.0
      %710 = vmatprep.subr.mxu0 0.0
      %711 = vmatpush1.msra.mxu0 0.0
      %712 = vmatprep.subr.mxu0 0.0
      %713 = vmatpush1.msra.mxu0 0.0
      %714 = vmatprep.subr.mxu0 0.0
      %715 = vmatpush1.msra.mxu0 0.0
      %716 = vmatprep.subr.mxu0 0.0
      %717 = vmatpush1.msra.mxu0 0.0
      %718 = vmatprep.mubr.f32.mxu0 0.0
      %719 = vmatmul.mubr.f32.gmra.mrb[0].mxu0 %v347
      %v720 = vpop.f32.mrb[0].mxu0
      %v721 = vadd.f32 %v574, %v720
      %v722 = vpop.f32.mrb[0].mxu0
      %v723 = vadd.f32 %v578, %v722
      %724 = vdwg.mxu0
      %v725 = vmax.f32 %v650, 0.0
      %v726 = vmax.f32 %v652, 0.0
      %v727 = vmax.f32 %v721, 0.0
      %v728 = vmax.f32 %v723, 0.0
      %v729 = vmul.f32 %v725, %v420
      %v730 = vmul.f32 %v726, %v422
      %v731 = vmul.f32 %v727, %v491
      %v732 = vmul.f32 %v728, %v493
      %v733 = vmax.f32 %v729, %v731
      %v734 = vmax.f32 %v730, %v732
      %v735 = vmax.f32 %v733, %v734
      %737 = vrot.lane.b32.xlu0 %v735, 64
      %v738 = vpop.permute.xlu0 %737
      %v740 = vmax.f32 %v735, %v738
      %742 = vrot.lane.b32.xlu0 %v740, 96
      %v743 = vpop.permute.xlu0 %742
      %v745 = vmax.f32 %v740, %v743
      %v746 = vld [vmem:[%s3] sm:$0xff]
      %v747 = vld [vmem:[%s3 + $0x8] sm:$0xff]
      %v748 = vld [vmem:[%s3 + $0x10] sm:$0xff]
      %v749 = vld [vmem:[%s3 + $0x18] sm:$0xff]
      %v750 = vld [vmem:[%s3 + $0x20] sm:$0xff]
      %v751 = vld [vmem:[%s3 + $0x28] sm:$0xff]
      %v752 = vld [vmem:[%s3 + $0x30] sm:$0xff]
      %v753 = vld [vmem:[%s3 + $0x38] sm:$0xff]
      %v754 = vld [vmem:[%s3 + $0x40] sm:$0xff]
      %v755 = vld [vmem:[%s3 + $0x48] sm:$0xff]
      %v756 = vld [vmem:[%s3 + $0x50] sm:$0xff]
      %v757 = vld [vmem:[%s3 + $0x58] sm:$0xff]
      %v758 = vld [vmem:[%s3 + $0x60] sm:$0xff]
      %v759 = vld [vmem:[%s3 + $0x68] sm:$0xff]
      %v760 = vld [vmem:[%s3 + $0x70] sm:$0xff]
      %v761 = vld [vmem:[%s3 + $0x78] sm:$0xff]
      %v762 = vld [vmem:[%s3 + $0x80] sm:$0xff]
      %v763 = vld [vmem:[%s3 + $0x88] sm:$0xff]
      %v764 = vld [vmem:[%s3 + $0x90] sm:$0xff]
      %v765 = vld [vmem:[%s3 + $0x98] sm:$0xff]
      %v766 = vld [vmem:[%s3 + $0xa0] sm:$0xff]
      %v767 = vld [vmem:[%s3 + $0xa8] sm:$0xff]
      %v768 = vld [vmem:[%s3 + $0xb0] sm:$0xff]
      %v769 = vld [vmem:[%s3 + $0xb8] sm:$0xff]
      %v770 = vld [vmem:[%s3 + $0xc0] sm:$0xff]
      %v771 = vld [vmem:[%s3 + $0xc8] sm:$0xff]
      %v772 = vld [vmem:[%s3 + $0xd0] sm:$0xff]
      %v773 = vld [vmem:[%s3 + $0xd8] sm:$0xff]
      %v774 = vld [vmem:[%s3 + $0xe0] sm:$0xff]
      %v775 = vld [vmem:[%s3 + $0xe8] sm:$0xff]
      %v776 = vld [vmem:[%s3 + $0xf0] sm:$0xff]
      %v777 = vld [vmem:[%s3 + $0xf8] sm:$0xff]
      %v778 = vld [vmem:[%s3 + $0x100] sm:$0xff]
      %v779 = vld [vmem:[%s3 + $0x108] sm:$0xff]
      %v780 = vld [vmem:[%s3 + $0x110] sm:$0xff]
      %v781 = vld [vmem:[%s3 + $0x118] sm:$0xff]
      %v782 = vld [vmem:[%s3 + $0x120] sm:$0xff]
      %v783 = vld [vmem:[%s3 + $0x128] sm:$0xff]
      %v784 = vld [vmem:[%s3 + $0x130] sm:$0xff]
      %v785 = vld [vmem:[%s3 + $0x138] sm:$0xff]
      %v786 = vld [vmem:[%s3 + $0x140] sm:$0xff]
      %v787 = vld [vmem:[%s3 + $0x148] sm:$0xff]
      %v788 = vld [vmem:[%s3 + $0x150] sm:$0xff]
      %v789 = vld [vmem:[%s3 + $0x158] sm:$0xff]
      %v790 = vld [vmem:[%s3 + $0x160] sm:$0xff]
      %v791 = vld [vmem:[%s3 + $0x168] sm:$0xff]
      %v792 = vld [vmem:[%s3 + $0x170] sm:$0xff]
      %v793 = vld [vmem:[%s3 + $0x178] sm:$0xff]
      %v794 = vld [vmem:[%s3 + $0x180] sm:$0xff]
      %v795 = vld [vmem:[%s3 + $0x188] sm:$0xff]
      %v796 = vld [vmem:[%s3 + $0x190] sm:$0xff]
      %v797 = vld [vmem:[%s3 + $0x198] sm:$0xff]
      %v798 = vld [vmem:[%s3 + $0x1a0] sm:$0xff]
      %v799 = vld [vmem:[%s3 + $0x1a8] sm:$0xff]
      %v800 = vld [vmem:[%s3 + $0x1b0] sm:$0xff]
      %v801 = vld [vmem:[%s3 + $0x1b8] sm:$0xff]
      %v802 = vld [vmem:[%s3 + $0x1c0] sm:$0xff]
      %v803 = vld [vmem:[%s3 + $0x1c8] sm:$0xff]
      %v804 = vld [vmem:[%s3 + $0x1d0] sm:$0xff]
      %v805 = vld [vmem:[%s3 + $0x1d8] sm:$0xff]
      %v806 = vld [vmem:[%s3 + $0x1e0] sm:$0xff]
      %v807 = vld [vmem:[%s3 + $0x1e8] sm:$0xff]
      %v808 = vld [vmem:[%s3 + $0x1f0] sm:$0xff]
      %v809 = vld [vmem:[%s3 + $0x1f8] sm:$0xff]
      %v810 = vld [vmem:[%s3 + $0x200] sm:$0xff]
      %v811 = vld [vmem:[%s3 + $0x208] sm:$0xff]
      %v812 = vld [vmem:[%s3 + $0x210] sm:$0xff]
      %v813 = vld [vmem:[%s3 + $0x218] sm:$0xff]
      %v814 = vld [vmem:[%s3 + $0x220] sm:$0xff]
      %v815 = vld [vmem:[%s3 + $0x228] sm:$0xff]
      %v816 = vld [vmem:[%s3 + $0x230] sm:$0xff]
      %v817 = vld [vmem:[%s3 + $0x238] sm:$0xff]
      %v818 = vld [vmem:[%s3 + $0x240] sm:$0xff]
      %v819 = vld [vmem:[%s3 + $0x248] sm:$0xff]
      %v820 = vld [vmem:[%s3 + $0x250] sm:$0xff]
      %v821 = vld [vmem:[%s3 + $0x258] sm:$0xff]
      %v822 = vld [vmem:[%s3 + $0x260] sm:$0xff]
      %v823 = vld [vmem:[%s3 + $0x268] sm:$0xff]
      %v824 = vld [vmem:[%s3 + $0x270] sm:$0xff]
      %v825 = vld [vmem:[%s3 + $0x278] sm:$0xff]
      %v826 = vld [vmem:[%s3 + $0x280] sm:$0xff]
      %v827 = vld [vmem:[%s3 + $0x288] sm:$0xff]
      %v828 = vld [vmem:[%s3 + $0x290] sm:$0xff]
      %v829 = vld [vmem:[%s3 + $0x298] sm:$0xff]
      %v830 = vld [vmem:[%s3 + $0x2a0] sm:$0xff]
      %v831 = vld [vmem:[%s3 + $0x2a8] sm:$0xff]
      %v832 = vld [vmem:[%s3 + $0x2b0] sm:$0xff]
      %v833 = vld [vmem:[%s3 + $0x2b8] sm:$0xff]
      %v834 = vld [vmem:[%s3 + $0x2c0] sm:$0xff]
      %v835 = vld [vmem:[%s3 + $0x2c8] sm:$0xff]
      %v836 = vld [vmem:[%s3 + $0x2d0] sm:$0xff]
      %v837 = vld [vmem:[%s3 + $0x2d8] sm:$0xff]
      %v838 = vld [vmem:[%s3 + $0x2e0] sm:$0xff]
      %v839 = vld [vmem:[%s3 + $0x2e8] sm:$0xff]
      %v840 = vld [vmem:[%s3 + $0x2f0] sm:$0xff]
      %v841 = vld [vmem:[%s3 + $0x2f8] sm:$0xff]
      %v842 = vld [vmem:[%s3 + $0x300] sm:$0xff]
      %v843 = vld [vmem:[%s3 + $0x308] sm:$0xff]
      %v844 = vld [vmem:[%s3 + $0x310] sm:$0xff]
      %v845 = vld [vmem:[%s3 + $0x318] sm:$0xff]
      %v846 = vld [vmem:[%s3 + $0x320] sm:$0xff]
      %v847 = vld [vmem:[%s3 + $0x328] sm:$0xff]
      %v848 = vld [vmem:[%s3 + $0x330] sm:$0xff]
      %v849 = vld [vmem:[%s3 + $0x338] sm:$0xff]
      %v850 = vld [vmem:[%s3 + $0x340] sm:$0xff]
      %v851 = vld [vmem:[%s3 + $0x348] sm:$0xff]
      %v852 = vld [vmem:[%s3 + $0x350] sm:$0xff]
      %v853 = vld [vmem:[%s3 + $0x358] sm:$0xff]
      %v854 = vld [vmem:[%s3 + $0x360] sm:$0xff]
      %v855 = vld [vmem:[%s3 + $0x368] sm:$0xff]
      %v856 = vld [vmem:[%s3 + $0x370] sm:$0xff]
      %v857 = vld [vmem:[%s3 + $0x378] sm:$0xff]
      %v858 = vld [vmem:[%s3 + $0x380] sm:$0xff]
      %v859 = vld [vmem:[%s3 + $0x388] sm:$0xff]
      %v860 = vld [vmem:[%s3 + $0x390] sm:$0xff]
      %v861 = vld [vmem:[%s3 + $0x398] sm:$0xff]
      %v862 = vld [vmem:[%s3 + $0x3a0] sm:$0xff]
      %v863 = vld [vmem:[%s3 + $0x3a8] sm:$0xff]
      %v864 = vld [vmem:[%s3 + $0x3b0] sm:$0xff]
      %v865 = vld [vmem:[%s3 + $0x3b8] sm:$0xff]
      %v866 = vld [vmem:[%s3 + $0x3c0] sm:$0xff]
      %v867 = vld [vmem:[%s3 + $0x3c8] sm:$0xff]
      %v868 = vld [vmem:[%s3 + $0x3d0] sm:$0xff]
      %v869 = vld [vmem:[%s3 + $0x3d8] sm:$0xff]
      %v870 = vld [vmem:[%s3 + $0x3e0] sm:$0xff]
      %v871 = vld [vmem:[%s3 + $0x3e8] sm:$0xff]
      %v872 = vld [vmem:[%s3 + $0x3f0] sm:$0xff]
      %v873 = vld [vmem:[%s3 + $0x3f8] sm:$0xff]
      %v874 = vld [vmem:[%s3 + $0x400] sm:$0xff]
      %v875 = vld [vmem:[%s3 + $0x408] sm:$0xff]
      %v876 = vld [vmem:[%s3 + $0x410] sm:$0xff]
      %v877 = vld [vmem:[%s3 + $0x418] sm:$0xff]
      %v878 = vld [vmem:[%s3 + $0x420] sm:$0xff]
      %v879 = vld [vmem:[%s3 + $0x428] sm:$0xff]
      %v880 = vld [vmem:[%s3 + $0x430] sm:$0xff]
      %v881 = vld [vmem:[%s3 + $0x438] sm:$0xff]
      %v882 = vld [vmem:[%s3 + $0x440] sm:$0xff]
      %v883 = vld [vmem:[%s3 + $0x448] sm:$0xff]
      %v884 = vld [vmem:[%s3 + $0x450] sm:$0xff]
      %v885 = vld [vmem:[%s3 + $0x458] sm:$0xff]
      %v886 = vld [vmem:[%s3 + $0x460] sm:$0xff]
      %v887 = vld [vmem:[%s3 + $0x468] sm:$0xff]
      %v888 = vld [vmem:[%s3 + $0x470] sm:$0xff]
      %v889 = vld [vmem:[%s3 + $0x478] sm:$0xff]
      %v890 = vld [vmem:[%s3 + $0x480] sm:$0xff]
      %v891 = vld [vmem:[%s3 + $0x488] sm:$0xff]
      %v892 = vld [vmem:[%s3 + $0x490] sm:$0xff]
      %v893 = vld [vmem:[%s3 + $0x498] sm:$0xff]
      %v894 = vld [vmem:[%s3 + $0x4a0] sm:$0xff]
      %v895 = vld [vmem:[%s3 + $0x4a8] sm:$0xff]
      %v896 = vld [vmem:[%s3 + $0x4b0] sm:$0xff]
      %v897 = vld [vmem:[%s3 + $0x4b8] sm:$0xff]
      %v898 = vld [vmem:[%s3 + $0x4c0] sm:$0xff]
      %v899 = vld [vmem:[%s3 + $0x4c8] sm:$0xff]
      %v900 = vld [vmem:[%s3 + $0x4d0] sm:$0xff]
      %v901 = vld [vmem:[%s3 + $0x4d8] sm:$0xff]
      %v902 = vld [vmem:[%s3 + $0x4e0] sm:$0xff]
      %v903 = vld [vmem:[%s3 + $0x4e8] sm:$0xff]
      %v904 = vld [vmem:[%s3 + $0x4f0] sm:$0xff]
      %v905 = vld [vmem:[%s3 + $0x4f8] sm:$0xff]
      %v906 = vld [vmem:[%s3 + $0x500] sm:$0xff]
      %v907 = vld [vmem:[%s3 + $0x508] sm:$0xff]
      %v908 = vld [vmem:[%s3 + $0x510] sm:$0xff]
      %v909 = vld [vmem:[%s3 + $0x518] sm:$0xff]
      %v910 = vld [vmem:[%s3 + $0x520] sm:$0xff]
      %v911 = vld [vmem:[%s3 + $0x528] sm:$0xff]
      %v912 = vld [vmem:[%s3 + $0x530] sm:$0xff]
      %v913 = vld [vmem:[%s3 + $0x538] sm:$0xff]
      %v914 = vld [vmem:[%s3 + $0x540] sm:$0xff]
      %v915 = vld [vmem:[%s3 + $0x548] sm:$0xff]
      %v916 = vld [vmem:[%s3 + $0x550] sm:$0xff]
      %v917 = vld [vmem:[%s3 + $0x558] sm:$0xff]
      %v918 = vld [vmem:[%s3 + $0x560] sm:$0xff]
      %v919 = vld [vmem:[%s3 + $0x568] sm:$0xff]
      %v920 = vld [vmem:[%s3 + $0x570] sm:$0xff]
      %v921 = vld [vmem:[%s3 + $0x578] sm:$0xff]
      %v922 = vld [vmem:[%s3 + $0x580] sm:$0xff]
      %v923 = vld [vmem:[%s3 + $0x588] sm:$0xff]
      %v924 = vld [vmem:[%s3 + $0x590] sm:$0xff]
      %v925 = vld [vmem:[%s3 + $0x598] sm:$0xff]
      %v926 = vld [vmem:[%s3 + $0x5a0] sm:$0xff]
      %v927 = vld [vmem:[%s3 + $0x5a8] sm:$0xff]
      %v928 = vld [vmem:[%s3 + $0x5b0] sm:$0xff]
      %v929 = vld [vmem:[%s3 + $0x5b8] sm:$0xff]
      %v930 = vld [vmem:[%s3 + $0x5c0] sm:$0xff]
      %v931 = vld [vmem:[%s3 + $0x5c8] sm:$0xff]
      %v932 = vld [vmem:[%s3 + $0x5d0] sm:$0xff]
      %v933 = vld [vmem:[%s3 + $0x5d8] sm:$0xff]
      %v934 = vld [vmem:[%s3 + $0x5e0] sm:$0xff]
      %v935 = vld [vmem:[%s3 + $0x5e8] sm:$0xff]
      %v936 = vld [vmem:[%s3 + $0x5f0] sm:$0xff]
      %v937 = vld [vmem:[%s3 + $0x5f8] sm:$0xff]
      %v938 = vld [vmem:[%s3 + $0x600] sm:$0xff]
      %v939 = vld [vmem:[%s3 + $0x608] sm:$0xff]
      %v940 = vld [vmem:[%s3 + $0x610] sm:$0xff]
      %v941 = vld [vmem:[%s3 + $0x618] sm:$0xff]
      %v942 = vld [vmem:[%s3 + $0x620] sm:$0xff]
      %v943 = vld [vmem:[%s3 + $0x628] sm:$0xff]
      %v944 = vld [vmem:[%s3 + $0x630] sm:$0xff]
      %v945 = vld [vmem:[%s3 + $0x638] sm:$0xff]
      %v946 = vld [vmem:[%s3 + $0x640] sm:$0xff]
      %v947 = vld [vmem:[%s3 + $0x648] sm:$0xff]
      %v948 = vld [vmem:[%s3 + $0x650] sm:$0xff]
      %v949 = vld [vmem:[%s3 + $0x658] sm:$0xff]
      %v950 = vld [vmem:[%s3 + $0x660] sm:$0xff]
      %v951 = vld [vmem:[%s3 + $0x668] sm:$0xff]
      %v952 = vld [vmem:[%s3 + $0x670] sm:$0xff]
      %v953 = vld [vmem:[%s3 + $0x678] sm:$0xff]
      %v954 = vld [vmem:[%s3 + $0x680] sm:$0xff]
      %v955 = vld [vmem:[%s3 + $0x688] sm:$0xff]
      %v956 = vld [vmem:[%s3 + $0x690] sm:$0xff]
      %v957 = vld [vmem:[%s3 + $0x698] sm:$0xff]
      %v958 = vld [vmem:[%s3 + $0x6a0] sm:$0xff]
      %v959 = vld [vmem:[%s3 + $0x6a8] sm:$0xff]
      %v960 = vld [vmem:[%s3 + $0x6b0] sm:$0xff]
      %v961 = vld [vmem:[%s3 + $0x6b8] sm:$0xff]
      %v962 = vld [vmem:[%s3 + $0x6c0] sm:$0xff]
      %v963 = vld [vmem:[%s3 + $0x6c8] sm:$0xff]
      %v964 = vld [vmem:[%s3 + $0x6d0] sm:$0xff]
      %v965 = vld [vmem:[%s3 + $0x6d8] sm:$0xff]
      %v966 = vld [vmem:[%s3 + $0x6e0] sm:$0xff]
      %v967 = vld [vmem:[%s3 + $0x6e8] sm:$0xff]
      %v968 = vld [vmem:[%s3 + $0x6f0] sm:$0xff]
      %v969 = vld [vmem:[%s3 + $0x6f8] sm:$0xff]
      %v970 = vld [vmem:[%s3 + $0x700] sm:$0xff]
      %v971 = vld [vmem:[%s3 + $0x708] sm:$0xff]
      %v972 = vld [vmem:[%s3 + $0x710] sm:$0xff]
      %v973 = vld [vmem:[%s3 + $0x718] sm:$0xff]
      %v974 = vld [vmem:[%s3 + $0x720] sm:$0xff]
      %v975 = vld [vmem:[%s3 + $0x728] sm:$0xff]
      %v976 = vld [vmem:[%s3 + $0x730] sm:$0xff]
      %v977 = vld [vmem:[%s3 + $0x738] sm:$0xff]
      %v978 = vld [vmem:[%s3 + $0x740] sm:$0xff]
      %v979 = vld [vmem:[%s3 + $0x748] sm:$0xff]
      %v980 = vld [vmem:[%s3 + $0x750] sm:$0xff]
      %v981 = vld [vmem:[%s3 + $0x758] sm:$0xff]
      %v982 = vld [vmem:[%s3 + $0x760] sm:$0xff]
      %v983 = vld [vmem:[%s3 + $0x768] sm:$0xff]
      %v984 = vld [vmem:[%s3 + $0x770] sm:$0xff]
      %v985 = vld [vmem:[%s3 + $0x778] sm:$0xff]
      %v986 = vld [vmem:[%s3 + $0x780] sm:$0xff]
      %v987 = vld [vmem:[%s3 + $0x788] sm:$0xff]
      %v988 = vld [vmem:[%s3 + $0x790] sm:$0xff]
      %v989 = vld [vmem:[%s3 + $0x798] sm:$0xff]
      %v990 = vld [vmem:[%s3 + $0x7a0] sm:$0xff]
      %v991 = vld [vmem:[%s3 + $0x7a8] sm:$0xff]
      %v992 = vld [vmem:[%s3 + $0x7b0] sm:$0xff]
      %v993 = vld [vmem:[%s3 + $0x7b8] sm:$0xff]
      %v994 = vld [vmem:[%s3 + $0x7c0] sm:$0xff]
      %v995 = vld [vmem:[%s3 + $0x7c8] sm:$0xff]
      %v996 = vld [vmem:[%s3 + $0x7d0] sm:$0xff]
      %v997 = vld [vmem:[%s3 + $0x7d8] sm:$0xff]
      %v998 = vld [vmem:[%s3 + $0x7e0] sm:$0xff]
      %v999 = vld [vmem:[%s3 + $0x7e8] sm:$0xff]
      %v1000 = vld [vmem:[%s3 + $0x7f0] sm:$0xff]
      %v1001 = vld [vmem:[%s3 + $0x7f8] sm:$0xff]
      %vm1002 = vcmask 261120
      %v1004 = vsel %vm1002, %v745, 0
      %1006 = vmatprep.subr.mxu0 0.0
      %1007 = vmatpush1.msra.mxu0 %v320
      %1008 = vmatprep.subr.mxu0 0.0
      %1009 = vmatpush1.msra.mxu0 %v321
      %1010 = vmatprep.subr.mxu0 0.0
      %1011 = vmatpush1.msra.mxu0 %v322
      %1012 = vmatprep.subr.mxu0 0.0
      %1013 = vmatpush1.msra.mxu0 %v323
      %1014 = vmatprep.subr.mxu0 0.0
      %1015 = vmatpush1.msra.mxu0 0.0
      %1016 = vmatprep.subr.mxu0 0.0
      %1017 = vmatpush1.msra.mxu0 0.0
      %1018 = vmatprep.subr.mxu0 0.0
      %1019 = vmatpush1.msra.mxu0 0.0
      %1020 = vmatprep.subr.mxu0 0.0
      %1021 = vmatpush1.msra.mxu0 0.0
      %1022 = vmatprep.subr.mxu0 0.0
      %1023 = vmatpush1.msra.mxu0 0.0
      %1024 = vmatprep.subr.mxu0 0.0
      %1025 = vmatpush1.msra.mxu0 0.0
      %1026 = vmatprep.subr.mxu0 0.0
      %1027 = vmatpush1.msra.mxu0 0.0
      %1028 = vmatprep.subr.mxu0 0.0
      %1029 = vmatpush1.msra.mxu0 0.0
      %1030 = vmatprep.subr.mxu0 0.0
      %1031 = vmatpush1.msra.mxu0 0.0
      %1032 = vmatprep.subr.mxu0 0.0
      %1033 = vmatpush1.msra.mxu0 0.0
      %1034 = vmatprep.subr.mxu0 0.0
      %1035 = vmatpush1.msra.mxu0 0.0
      %1036 = vmatprep.subr.mxu0 0.0
      %1037 = vmatpush1.msra.mxu0 0.0
      %1038 = vmatprep.subr.mxu0 0.0
      %1039 = vmatpush1.msra.mxu0 0.0
      %1040 = vmatprep.subr.mxu0 0.0
      %1041 = vmatpush1.msra.mxu0 0.0
      %1042 = vmatprep.subr.mxu0 0.0
      %1043 = vmatpush1.msra.mxu0 0.0
      %1044 = vmatprep.subr.mxu0 0.0
      %1045 = vmatpush1.msra.mxu0 0.0
      %1046 = vmatprep.subr.mxu0 0.0
      %1047 = vmatpush1.msra.mxu0 0.0
      %1048 = vmatprep.subr.mxu0 0.0
      %1049 = vmatpush1.msra.mxu0 0.0
      %1050 = vmatprep.subr.mxu0 0.0
      %1051 = vmatpush1.msra.mxu0 0.0
      %1052 = vmatprep.subr.mxu0 0.0
      %1053 = vmatpush1.msra.mxu0 0.0
      %1054 = vmatprep.subr.mxu0 0.0
      %1055 = vmatpush1.msra.mxu0 0.0
      %1056 = vmatprep.subr.mxu0 0.0
      %1057 = vmatpush1.msra.mxu0 0.0
      %1058 = vmatprep.subr.mxu0 0.0
      %1059 = vmatpush1.msra.mxu0 0.0
      %1060 = vmatprep.subr.mxu0 0.0
      %1061 = vmatpush1.msra.mxu0 0.0
      %1062 = vmatprep.subr.mxu0 0.0
      %1063 = vmatpush1.msra.mxu0 0.0
      %1064 = vmatprep.subr.mxu0 0.0
      %1065 = vmatpush1.msra.mxu0 0.0
      %1066 = vmatprep.subr.mxu0 0.0
      %1067 = vmatpush1.msra.mxu0 0.0
      %1068 = vmatprep.subr.mxu0 0.0
      %1069 = vmatpush1.msra.mxu0 0.0
      %1070 = vmatprep.mubr.f32.mxu0 0.0
      %1071 = vmatmul.mubr.f32.gmra.mrb[0].mxu0 %v1004
      %v1072 = vpop.f32.mrb[0].mxu0
      %v1073 = vadd.f32 %v344, %v1072
      %v1074 = vpop.f32.mrb[0].mxu0
      %1075 = vdwg.mxu0
      %v1076 = vld [vmem:[%s5] sm:$0xff]
      %v1077 = vld [vmem:[%s5 + $0x8] sm:$0xff]
      %v1078 = vld [vmem:[%s5 + $0x10] sm:$0xff]
      %v1079 = vld [vmem:[%s5 + $0x18] sm:$0xff]
      %v1080 = vld [vmem:[%s5 + $0x20] sm:$0xff]
      %v1081 = vld [vmem:[%s5 + $0x28] sm:$0xff]
      %v1082 = vld [vmem:[%s5 + $0x30] sm:$0xff]
      %v1083 = vld [vmem:[%s5 + $0x38] sm:$0xff]
      %v1084 = vld [vmem:[%s5 + $0x40] sm:$0xff]
      %v1085 = vld [vmem:[%s5 + $0x48] sm:$0xff]
      %v1086 = vld [vmem:[%s5 + $0x50] sm:$0xff]
      %v1087 = vld [vmem:[%s5 + $0x58] sm:$0xff]
      %v1088 = vld [vmem:[%s5 + $0x60] sm:$0xff]
      %v1089 = vld [vmem:[%s5 + $0x68] sm:$0xff]
      %v1090 = vld [vmem:[%s5 + $0x70] sm:$0xff]
      %v1091 = vld [vmem:[%s5 + $0x78] sm:$0xff]
      %v1093 = vsel %vm1002, %v1073, 0
      %1095 = vmatprep.subr.mxu0 %v1077
      %1096 = vmatpush1.msra.mxu0 %v1076
      %1097 = vmatprep.subr.mxu0 %v1081
      %1098 = vmatpush1.msra.mxu0 %v1080
      %1099 = vmatprep.subr.mxu0 %v1085
      %1100 = vmatpush1.msra.mxu0 %v1084
      %1101 = vmatprep.subr.mxu0 %v1089
      %1102 = vmatpush1.msra.mxu0 %v1088
      %1103 = vmatprep.subr.mxu0 0.0
      %1104 = vmatpush1.msra.mxu0 0.0
      %1105 = vmatprep.subr.mxu0 0.0
      %1106 = vmatpush1.msra.mxu0 0.0
      %1107 = vmatprep.subr.mxu0 0.0
      %1108 = vmatpush1.msra.mxu0 0.0
      %1109 = vmatprep.subr.mxu0 0.0
      %1110 = vmatpush1.msra.mxu0 0.0
      %1111 = vmatprep.subr.mxu0 0.0
      %1112 = vmatpush1.msra.mxu0 0.0
      %1113 = vmatprep.subr.mxu0 0.0
      %1114 = vmatpush1.msra.mxu0 0.0
      %1115 = vmatprep.subr.mxu0 0.0
      %1116 = vmatpush1.msra.mxu0 0.0
      %1117 = vmatprep.subr.mxu0 0.0
      %1118 = vmatpush1.msra.mxu0 0.0
      %1119 = vmatprep.subr.mxu0 0.0
      %1120 = vmatpush1.msra.mxu0 0.0
      %1121 = vmatprep.subr.mxu0 0.0
      %1122 = vmatpush1.msra.mxu0 0.0
      %1123 = vmatprep.subr.mxu0 0.0
      %1124 = vmatpush1.msra.mxu0 0.0
      %1125 = vmatprep.subr.mxu0 0.0
      %1126 = vmatpush1.msra.mxu0 0.0
      %1127 = vmatprep.subr.mxu0 0.0
      %1128 = vmatpush1.msra.mxu0 0.0
      %1129 = vmatprep.subr.mxu0 0.0
      %1130 = vmatpush1.msra.mxu0 0.0
      %1131 = vmatprep.subr.mxu0 0.0
      %1132 = vmatpush1.msra.mxu0 0.0
      %1133 = vmatprep.subr.mxu0 0.0
      %1134 = vmatpush1.msra.mxu0 0.0
      %1135 = vmatprep.subr.mxu0 0.0
      %1136 = vmatpush1.msra.mxu0 0.0
      %1137 = vmatprep.subr.mxu0 0.0
      %1138 = vmatpush1.msra.mxu0 0.0
      %1139 = vmatprep.subr.mxu0 0.0
      %1140 = vmatpush1.msra.mxu0 0.0
      %1141 = vmatprep.subr.mxu0 0.0
      %1142 = vmatpush1.msra.mxu0 0.0
      %1143 = vmatprep.subr.mxu0 0.0
      %1144 = vmatpush1.msra.mxu0 0.0
      %1145 = vmatprep.subr.mxu0 0.0
      %1146 = vmatpush1.msra.mxu0 0.0
      %1147 = vmatprep.subr.mxu0 0.0
      %1148 = vmatpush1.msra.mxu0 0.0
      %1149 = vmatprep.subr.mxu0 0.0
      %1150 = vmatpush1.msra.mxu0 0.0
      %1151 = vmatprep.subr.mxu0 0.0
      %1152 = vmatpush1.msra.mxu0 0.0
      %1153 = vmatprep.subr.mxu0 0.0
      %1154 = vmatpush1.msra.mxu0 0.0
      %1155 = vmatprep.subr.mxu0 0.0
      %1156 = vmatpush1.msra.mxu0 0.0
      %1157 = vmatprep.subr.mxu0 0.0
      %1158 = vmatpush1.msra.mxu0 0.0
      %1159 = vmatprep.mubr.f32.mxu0 0.0
      %1160 = vmatmul.mubr.f32.gmra.mrb[0].mxu0 %v1093
      %v1161 = vpop.f32.mrb[0].mxu0
      %v1162 = vadd.f32 0.0, %v1161
      %v1163 = vpop.f32.mrb[0].mxu0
      %v1164 = vadd.f32 0.0, %v1163
      %1165 = vdwg.mxu0
      %1166 = vmatprep.subr.mxu0 %v1079
      %1167 = vmatpush1.msra.mxu0 %v1078
      %1168 = vmatprep.subr.mxu0 %v1083
      %1169 = vmatpush1.msra.mxu0 %v1082
      %1170 = vmatprep.subr.mxu0 %v1087
      %1171 = vmatpush1.msra.mxu0 %v1086
      %1172 = vmatprep.subr.mxu0 %v1091
      %1173 = vmatpush1.msra.mxu0 %v1090
      %1174 = vmatprep.subr.mxu0 0.0
      %1175 = vmatpush1.msra.mxu0 0.0
      %1176 = vmatprep.subr.mxu0 0.0
      %1177 = vmatpush1.msra.mxu0 0.0
      %1178 = vmatprep.subr.mxu0 0.0
      %1179 = vmatpush1.msra.mxu0 0.0
      %1180 = vmatprep.subr.mxu0 0.0
      %1181 = vmatpush1.msra.mxu0 0.0
      %1182 = vmatprep.subr.mxu0 0.0
      %1183 = vmatpush1.msra.mxu0 0.0
      %1184 = vmatprep.subr.mxu0 0.0
      %1185 = vmatpush1.msra.mxu0 0.0
      %1186 = vmatprep.subr.mxu0 0.0
      %1187 = vmatpush1.msra.mxu0 0.0
      %1188 = vmatprep.subr.mxu0 0.0
      %1189 = vmatpush1.msra.mxu0 0.0
      %1190 = vmatprep.subr.mxu0 0.0
      %1191 = vmatpush1.msra.mxu0 0.0
      %1192 = vmatprep.subr.mxu0 0.0
      %1193 = vmatpush1.msra.mxu0 0.0
      %1194 = vmatprep.subr.mxu0 0.0
      %1195 = vmatpush1.msra.mxu0 0.0
      %1196 = vmatprep.subr.mxu0 0.0
      %1197 = vmatpush1.msra.mxu0 0.0
      %1198 = vmatprep.subr.mxu0 0.0
      %1199 = vmatpush1.msra.mxu0 0.0
      %1200 = vmatprep.subr.mxu0 0.0
      %1201 = vmatpush1.msra.mxu0 0.0
      %1202 = vmatprep.subr.mxu0 0.0
      %1203 = vmatpush1.msra.mxu0 0.0
      %1204 = vmatprep.subr.mxu0 0.0
      %1205 = vmatpush1.msra.mxu0 0.0
      %1206 = vmatprep.subr.mxu0 0.0
      %1207 = vmatpush1.msra.mxu0 0.0
      %1208 = vmatprep.subr.mxu0 0.0
      %1209 = vmatpush1.msra.mxu0 0.0
      %1210 = vmatprep.subr.mxu0 0.0
      %1211 = vmatpush1.msra.mxu0 0.0
      %1212 = vmatprep.subr.mxu0 0.0
      %1213 = vmatpush1.msra.mxu0 0.0
      %1214 = vmatprep.subr.mxu0 0.0
      %1215 = vmatpush1.msra.mxu0 0.0
      %1216 = vmatprep.subr.mxu0 0.0
      %1217 = vmatpush1.msra.mxu0 0.0
      %1218 = vmatprep.subr.mxu0 0.0
      %1219 = vmatpush1.msra.mxu0 0.0
      %1220 = vmatprep.subr.mxu0 0.0
      %1221 = vmatpush1.msra.mxu0 0.0
      %1222 = vmatprep.subr.mxu0 0.0
      %1223 = vmatpush1.msra.mxu0 0.0
      %1224 = vmatprep.subr.mxu0 0.0
      %1225 = vmatpush1.msra.mxu0 0.0
      %1226 = vmatprep.subr.mxu0 0.0
      %1227 = vmatpush1.msra.mxu0 0.0
      %1228 = vmatprep.subr.mxu0 0.0
      %1229 = vmatpush1.msra.mxu0 0.0
      %1230 = vmatprep.mubr.f32.mxu0 0.0
      %1231 = vmatmul.mubr.f32.gmra.mrb[0].mxu0 %v1093
      %v1232 = vpop.f32.mrb[0].mxu0
      %v1233 = vadd.f32 0.0, %v1232
      %v1234 = vpop.f32.mrb[0].mxu0
      %v1235 = vadd.f32 0.0, %v1234
      %1236 = vdwg.mxu0
      %1237 = vmatprep.subr.mxu0 %v747
      %1238 = vmatpush1.msra.mxu0 %v746
      %1239 = vmatprep.subr.mxu0 %v751
      %1240 = vmatpush1.msra.mxu0 %v750
      %1241 = vmatprep.subr.mxu0 %v755
      %1242 = vmatpush1.msra.mxu0 %v754
      %1243 = vmatprep.subr.mxu0 %v759
      %1244 = vmatpush1.msra.mxu0 %v758
      %1245 = vmatprep.subr.mxu0 %v763
      %1246 = vmatpush1.msra.mxu0 %v762
      %1247 = vmatprep.subr.mxu0 %v767
      %1248 = vmatpush1.msra.mxu0 %v766
      %1249 = vmatprep.subr.mxu0 %v771
      %1250 = vmatpush1.msra.mxu0 %v770
      %1251 = vmatprep.subr.mxu0 %v775
      %1252 = vmatpush1.msra.mxu0 %v774
      %1253 = vmatprep.subr.mxu0 %v779
      %1254 = vmatpush1.msra.mxu0 %v778
      %1255 = vmatprep.subr.mxu0 %v783
      %1256 = vmatpush1.msra.mxu0 %v782
      %1257 = vmatprep.subr.mxu0 %v787
      %1258 = vmatpush1.msra.mxu0 %v786
      %1259 = vmatprep.subr.mxu0 %v791
      %1260 = vmatpush1.msra.mxu0 %v790
      %1261 = vmatprep.subr.mxu0 %v795
      %1262 = vmatpush1.msra.mxu0 %v794
      %1263 = vmatprep.subr.mxu0 %v799
      %1264 = vmatpush1.msra.mxu0 %v798
      %1265 = vmatprep.subr.mxu0 %v803
      %1266 = vmatpush1.msra.mxu0 %v802
      %1267 = vmatprep.subr.mxu0 %v807
      %1268 = vmatpush1.msra.mxu0 %v806
      %1269 = vmatprep.subr.mxu0 %v811
      %1270 = vmatpush1.msra.mxu0 %v810
      %1271 = vmatprep.subr.mxu0 %v815
      %1272 = vmatpush1.msra.mxu0 %v814
      %1273 = vmatprep.subr.mxu0 %v819
      %1274 = vmatpush1.msra.mxu0 %v818
      %1275 = vmatprep.subr.mxu0 %v823
      %1276 = vmatpush1.msra.mxu0 %v822
      %1277 = vmatprep.subr.mxu0 %v827
      %1278 = vmatpush1.msra.mxu0 %v826
      %1279 = vmatprep.subr.mxu0 %v831
      %1280 = vmatpush1.msra.mxu0 %v830
      %1281 = vmatprep.subr.mxu0 %v835
      %1282 = vmatpush1.msra.mxu0 %v834
      %1283 = vmatprep.subr.mxu0 %v839
      %1284 = vmatpush1.msra.mxu0 %v838
      %1285 = vmatprep.subr.mxu0 %v843
      %1286 = vmatpush1.msra.mxu0 %v842
      %1287 = vmatprep.subr.mxu0 %v847
      %1288 = vmatpush1.msra.mxu0 %v846
      %1289 = vmatprep.subr.mxu0 %v851
      %1290 = vmatpush1.msra.mxu0 %v850
      %1291 = vmatprep.subr.mxu0 %v855
      %1292 = vmatpush1.msra.mxu0 %v854
      %1293 = vmatprep.subr.mxu0 %v859
      %1294 = vmatpush1.msra.mxu0 %v858
      %1295 = vmatprep.subr.mxu0 %v863
      %1296 = vmatpush1.msra.mxu0 %v862
      %1297 = vmatprep.subr.mxu0 %v867
      %1298 = vmatpush1.msra.mxu0 %v866
      %1299 = vmatprep.subr.mxu0 %v871
      %1300 = vmatpush1.msra.mxu0 %v870
      %1301 = vmatprep.mubr.f32.mxu0 %v730
      %1302 = vmatmul.mubr.f32.gmra.mrb[0].mxu0 %v729
      %v1303 = vpop.f32.mrb[0].mxu0
      %v1304 = vadd.f32 %v1162, %v1303
      %v1305 = vpop.f32.mrb[0].mxu0
      %v1306 = vadd.f32 %v1164, %v1305
      %1307 = vdwg.mxu0
      %1308 = vmatprep.subr.mxu0 %v875
      %1309 = vmatpush1.msra.mxu0 %v874
      %1310 = vmatprep.subr.mxu0 %v879
      %1311 = vmatpush1.msra.mxu0 %v878
      %1312 = vmatprep.subr.mxu0 %v883
      %1313 = vmatpush1.msra.mxu0 %v882
      %1314 = vmatprep.subr.mxu0 %v887
      %1315 = vmatpush1.msra.mxu0 %v886
      %1316 = vmatprep.subr.mxu0 %v891
      %1317 = vmatpush1.msra.mxu0 %v890
      %1318 = vmatprep.subr.mxu0 %v895
      %1319 = vmatpush1.msra.mxu0 %v894
      %1320 = vmatprep.subr.mxu0 %v899
      %1321 = vmatpush1.msra.mxu0 %v898
      %1322 = vmatprep.subr.mxu0 %v903
      %1323 = vmatpush1.msra.mxu0 %v902
      %1324 = vmatprep.subr.mxu0 %v907
      %1325 = vmatpush1.msra.mxu0 %v906
      %1326 = vmatprep.subr.mxu0 %v911
      %1327 = vmatpush1.msra.mxu0 %v910
      %1328 = vmatprep.subr.mxu0 %v915
      %1329 = vmatpush1.msra.mxu0 %v914
      %1330 = vmatprep.subr.mxu0 %v919
      %1331 = vmatpush1.msra.mxu0 %v918
      %1332 = vmatprep.subr.mxu0 %v923
      %1333 = vmatpush1.msra.mxu0 %v922
      %1334 = vmatprep.subr.mxu0 %v927
      %1335 = vmatpush1.msra.mxu0 %v926
      %1336 = vmatprep.subr.mxu0 %v931
      %1337 = vmatpush1.msra.mxu0 %v930
      %1338 = vmatprep.subr.mxu0 %v935
      %1339 = vmatpush1.msra.mxu0 %v934
      %1340 = vmatprep.subr.mxu0 %v939
      %1341 = vmatpush1.msra.mxu0 %v938
      %1342 = vmatprep.subr.mxu0 %v943
      %1343 = vmatpush1.msra.mxu0 %v942
      %1344 = vmatprep.subr.mxu0 %v947
      %1345 = vmatpush1.msra.mxu0 %v946
      %1346 = vmatprep.subr.mxu0 %v951
      %1347 = vmatpush1.msra.mxu0 %v950
      %1348 = vmatprep.subr.mxu0 %v955
      %1349 = vmatpush1.msra.mxu0 %v954
      %1350 = vmatprep.subr.mxu0 %v959
      %1351 = vmatpush1.msra.mxu0 %v958
      %1352 = vmatprep.subr.mxu0 %v963
      %1353 = vmatpush1.msra.mxu0 %v962
      %1354 = vmatprep.subr.mxu0 %v967
      %1355 = vmatpush1.msra.mxu0 %v966
      %1356 = vmatprep.subr.mxu0 %v971
      %1357 = vmatpush1.msra.mxu0 %v970
      %1358 = vmatprep.subr.mxu0 %v975
      %1359 = vmatpush1.msra.mxu0 %v974
      %1360 = vmatprep.subr.mxu0 %v979
      %1361 = vmatpush1.msra.mxu0 %v978
      %1362 = vmatprep.subr.mxu0 %v983
      %1363 = vmatpush1.msra.mxu0 %v982
      %1364 = vmatprep.subr.mxu0 %v987
      %1365 = vmatpush1.msra.mxu0 %v986
      %1366 = vmatprep.subr.mxu0 %v991
      %1367 = vmatpush1.msra.mxu0 %v990
      %1368 = vmatprep.subr.mxu0 %v995
      %1369 = vmatpush1.msra.mxu0 %v994
      %1370 = vmatprep.subr.mxu0 %v999
      %1371 = vmatpush1.msra.mxu0 %v998
      %1372 = vmatprep.mubr.f32.mxu0 %v732
      %1373 = vmatmul.mubr.f32.gmra.mrb[0].mxu0 %v731
      %v1374 = vpop.f32.mrb[0].mxu0
      %v1375 = vadd.f32 %v1304, %v1374
      %v1376 = vpop.f32.mrb[0].mxu0
      %v1377 = vadd.f32 %v1306, %v1376
      %1378 = vdwg.mxu0
      %1379 = vmatprep.subr.mxu0 %v749
      %1380 = vmatpush1.msra.mxu0 %v748
      %1381 = vmatprep.subr.mxu0 %v753
      %1382 = vmatpush1.msra.mxu0 %v752
      %1383 = vmatprep.subr.mxu0 %v757
      %1384 = vmatpush1.msra.mxu0 %v756
      %1385 = vmatprep.subr.mxu0 %v761
      %1386 = vmatpush1.msra.mxu0 %v760
      %1387 = vmatprep.subr.mxu0 %v765
      %1388 = vmatpush1.msra.mxu0 %v764
      %1389 = vmatprep.subr.mxu0 %v769
      %1390 = vmatpush1.msra.mxu0 %v768
      %1391 = vmatprep.subr.mxu0 %v773
      %1392 = vmatpush1.msra.mxu0 %v772
      %1393 = vmatprep.subr.mxu0 %v777
      %1394 = vmatpush1.msra.mxu0 %v776
      %1395 = vmatprep.subr.mxu0 %v781
      %1396 = vmatpush1.msra.mxu0 %v780
      %1397 = vmatprep.subr.mxu0 %v785
      %1398 = vmatpush1.msra.mxu0 %v784
      %1399 = vmatprep.subr.mxu0 %v789
      %1400 = vmatpush1.msra.mxu0 %v788
      %1401 = vmatprep.subr.mxu0 %v793
      %1402 = vmatpush1.msra.mxu0 %v792
      %1403 = vmatprep.subr.mxu0 %v797
      %1404 = vmatpush1.msra.mxu0 %v796
      %1405 = vmatprep.subr.mxu0 %v801
      %1406 = vmatpush1.msra.mxu0 %v800
      %1407 = vmatprep.subr.mxu0 %v805
      %1408 = vmatpush1.msra.mxu0 %v804
      %1409 = vmatprep.subr.mxu0 %v809
      %1410 = vmatpush1.msra.mxu0 %v808
      %1411 = vmatprep.subr.mxu0 %v813
      %1412 = vmatpush1.msra.mxu0 %v812
      %1413 = vmatprep.subr.mxu0 %v817
      %1414 = vmatpush1.msra.mxu0 %v816
      %1415 = vmatprep.subr.mxu0 %v821
      %1416 = vmatpush1.msra.mxu0 %v820
      %1417 = vmatprep.subr.mxu0 %v825
      %1418 = vmatpush1.msra.mxu0 %v824
      %1419 = vmatprep.subr.mxu0 %v829
      %1420 = vmatpush1.msra.mxu0 %v828
      %1421 = vmatprep.subr.mxu0 %v833
      %1422 = vmatpush1.msra.mxu0 %v832
      %1423 = vmatprep.subr.mxu0 %v837
      %1424 = vmatpush1.msra.mxu0 %v836
      %1425 = vmatprep.subr.mxu0 %v841
      %1426 = vmatpush1.msra.mxu0 %v840
      %1427 = vmatprep.subr.mxu0 %v845
      %1428 = vmatpush1.msra.mxu0 %v844
      %1429 = vmatprep.subr.mxu0 %v849
      %1430 = vmatpush1.msra.mxu0 %v848
      %1431 = vmatprep.subr.mxu0 %v853
      %1432 = vmatpush1.msra.mxu0 %v852
      %1433 = vmatprep.subr.mxu0 %v857
      %1434 = vmatpush1.msra.mxu0 %v856
      %1435 = vmatprep.subr.mxu0 %v861
      %1436 = vmatpush1.msra.mxu0 %v860
      %1437 = vmatprep.subr.mxu0 %v865
      %1438 = vmatpush1.msra.mxu0 %v864
      %1439 = vmatprep.subr.mxu0 %v869
      %1440 = vmatpush1.msra.mxu0 %v868
      %1441 = vmatprep.subr.mxu0 %v873
      %1442 = vmatpush1.msra.mxu0 %v872
      %1443 = vmatprep.mubr.f32.mxu0 %v730
      %1444 = vmatmul.mubr.f32.gmra.mrb[0].mxu0 %v729
      %v1445 = vpop.f32.mrb[0].mxu0
      %v1446 = vadd.f32 %v1233, %v1445
      %v1447 = vpop.f32.mrb[0].mxu0
      %v1448 = vadd.f32 %v1235, %v1447
      %1449 = vdwg.mxu0
      %1450 = vmatprep.subr.mxu0 %v877
      %1451 = vmatpush1.msra.mxu0 %v876
      %1452 = vmatprep.subr.mxu0 %v881
      %1453 = vmatpush1.msra.mxu0 %v880
      %1454 = vmatprep.subr.mxu0 %v885
      %1455 = vmatpush1.msra.mxu0 %v884
      %1456 = vmatprep.subr.mxu0 %v889
      %1457 = vmatpush1.msra.mxu0 %v888
      %1458 = vmatprep.subr.mxu0 %v893
      %1459 = vmatpush1.msra.mxu0 %v892
      %1460 = vmatprep.subr.mxu0 %v897
      %1461 = vmatpush1.msra.mxu0 %v896
      %1462 = vmatprep.subr.mxu0 %v901
      %1463 = vmatpush1.msra.mxu0 %v900
      %1464 = vmatprep.subr.mxu0 %v905
      %1465 = vmatpush1.msra.mxu0 %v904
      %1466 = vmatprep.subr.mxu0 %v909
      %1467 = vmatpush1.msra.mxu0 %v908
      %1468 = vmatprep.subr.mxu0 %v913
      %1469 = vmatpush1.msra.mxu0 %v912
      %1470 = vmatprep.subr.mxu0 %v917
      %1471 = vmatpush1.msra.mxu0 %v916
      %1472 = vmatprep.subr.mxu0 %v921
      %1473 = vmatpush1.msra.mxu0 %v920
      %1474 = vmatprep.subr.mxu0 %v925
      %1475 = vmatpush1.msra.mxu0 %v924
      %1476 = vmatprep.subr.mxu0 %v929
      %1477 = vmatpush1.msra.mxu0 %v928
      %1478 = vmatprep.subr.mxu0 %v933
      %1479 = vmatpush1.msra.mxu0 %v932
      %1480 = vmatprep.subr.mxu0 %v937
      %1481 = vmatpush1.msra.mxu0 %v936
      %1482 = vmatprep.subr.mxu0 %v941
      %1483 = vmatpush1.msra.mxu0 %v940
      %1484 = vmatprep.subr.mxu0 %v945
      %1485 = vmatpush1.msra.mxu0 %v944
      %1486 = vmatprep.subr.mxu0 %v949
      %1487 = vmatpush1.msra.mxu0 %v948
      %1488 = vmatprep.subr.mxu0 %v953
      %1489 = vmatpush1.msra.mxu0 %v952
      %1490 = vmatprep.subr.mxu0 %v957
      %1491 = vmatpush1.msra.mxu0 %v956
      %1492 = vmatprep.subr.mxu0 %v961
      %1493 = vmatpush1.msra.mxu0 %v960
      %1494 = vmatprep.subr.mxu0 %v965
      %1495 = vmatpush1.msra.mxu0 %v964
      %1496 = vmatprep.subr.mxu0 %v969
      %1497 = vmatpush1.msra.mxu0 %v968
      %1498 = vmatprep.subr.mxu0 %v973
      %1499 = vmatpush1.msra.mxu0 %v972
      %1500 = vmatprep.subr.mxu0 %v977
      %1501 = vmatpush1.msra.mxu0 %v976
      %1502 = vmatprep.subr.mxu0 %v981
      %1503 = vmatpush1.msra.mxu0 %v980
      %1504 = vmatprep.subr.mxu0 %v985
      %1505 = vmatpush1.msra.mxu0 %v984
      %1506 = vmatprep.subr.mxu0 %v989
      %1507 = vmatpush1.msra.mxu0 %v988
      %1508 = vmatprep.subr.mxu0 %v993
      %1509 = vmatpush1.msra.mxu0 %v992
      %1510 = vmatprep.subr.mxu0 %v997
      %1511 = vmatpush1.msra.mxu0 %v996
      %1512 = vmatprep.subr.mxu0 %v1001
      %1513 = vmatpush1.msra.mxu0 %v1000
      %1514 = vmatprep.mubr.f32.mxu0 %v732
      %1515 = vmatmul.mubr.f32.gmra.mrb[0].mxu0 %v731
      %v1516 = vpop.f32.mrb[0].mxu0
      %v1517 = vadd.f32 %v1446, %v1516
      %v1518 = vpop.f32.mrb[0].mxu0
      %v1519 = vadd.f32 %v1448, %v1518
      %1520 = vdwg.mxu0
      %v1521 = vmax.f32 %v1375, 0.0
      %v1522 = vmax.f32 %v1377, 0.0
      %v1523 = vmax.f32 %v1517, 0.0
      %v1524 = vmax.f32 %v1519, 0.0
      %v1525 = vld [vmem:[%s4] sm:$0xff]
      %v1526 = vld [vmem:[%s4 + $0x8] sm:$0xff]
      %v1527 = vld [vmem:[%s4 + $0x10] sm:$0xff]
      %v1528 = vld [vmem:[%s4 + $0x18] sm:$0xff]
      %v1529 = vld [vmem:[%s4 + $0x20] sm:$0xff]
      %v1530 = vld [vmem:[%s4 + $0x28] sm:$0xff]
      %v1531 = vld [vmem:[%s4 + $0x30] sm:$0xff]
      %v1532 = vld [vmem:[%s4 + $0x38] sm:$0xff]
      %v1533 = vld [vmem:[%s4 + $0x40] sm:$0xff]
      %v1534 = vld [vmem:[%s4 + $0x48] sm:$0xff]
      %v1535 = vld [vmem:[%s4 + $0x50] sm:$0xff]
      %v1536 = vld [vmem:[%s4 + $0x58] sm:$0xff]
      %v1537 = vld [vmem:[%s4 + $0x60] sm:$0xff]
      %v1538 = vld [vmem:[%s4 + $0x68] sm:$0xff]
      %v1539 = vld [vmem:[%s4 + $0x70] sm:$0xff]
      %v1540 = vld [vmem:[%s4 + $0x78] sm:$0xff]
      %v1541 = vld [vmem:[%s4 + $0x80] sm:$0xff]
      %v1542 = vld [vmem:[%s4 + $0x88] sm:$0xff]
      %v1543 = vld [vmem:[%s4 + $0x90] sm:$0xff]
      %v1544 = vld [vmem:[%s4 + $0x98] sm:$0xff]
      %v1545 = vld [vmem:[%s4 + $0xa0] sm:$0xff]
      %v1546 = vld [vmem:[%s4 + $0xa8] sm:$0xff]
      %v1547 = vld [vmem:[%s4 + $0xb0] sm:$0xff]
      %v1548 = vld [vmem:[%s4 + $0xb8] sm:$0xff]
      %v1549 = vld [vmem:[%s4 + $0xc0] sm:$0xff]
      %v1550 = vld [vmem:[%s4 + $0xc8] sm:$0xff]
      %v1551 = vld [vmem:[%s4 + $0xd0] sm:$0xff]
      %v1552 = vld [vmem:[%s4 + $0xd8] sm:$0xff]
      %v1553 = vld [vmem:[%s4 + $0xe0] sm:$0xff]
      %v1554 = vld [vmem:[%s4 + $0xe8] sm:$0xff]
      %v1555 = vld [vmem:[%s4 + $0xf0] sm:$0xff]
      %v1556 = vld [vmem:[%s4 + $0xf8] sm:$0xff]
      %v1557 = vld [vmem:[%s4 + $0x100] sm:$0xff]
      %v1558 = vld [vmem:[%s4 + $0x108] sm:$0xff]
      %v1559 = vld [vmem:[%s4 + $0x110] sm:$0xff]
      %v1560 = vld [vmem:[%s4 + $0x118] sm:$0xff]
      %v1561 = vld [vmem:[%s4 + $0x120] sm:$0xff]
      %v1562 = vld [vmem:[%s4 + $0x128] sm:$0xff]
      %v1563 = vld [vmem:[%s4 + $0x130] sm:$0xff]
      %v1564 = vld [vmem:[%s4 + $0x138] sm:$0xff]
      %v1565 = vld [vmem:[%s4 + $0x140] sm:$0xff]
      %v1566 = vld [vmem:[%s4 + $0x148] sm:$0xff]
      %v1567 = vld [vmem:[%s4 + $0x150] sm:$0xff]
      %v1568 = vld [vmem:[%s4 + $0x158] sm:$0xff]
      %v1569 = vld [vmem:[%s4 + $0x160] sm:$0xff]
      %v1570 = vld [vmem:[%s4 + $0x168] sm:$0xff]
      %v1571 = vld [vmem:[%s4 + $0x170] sm:$0xff]
      %v1572 = vld [vmem:[%s4 + $0x178] sm:$0xff]
      %v1573 = vld [vmem:[%s4 + $0x180] sm:$0xff]
      %v1574 = vld [vmem:[%s4 + $0x188] sm:$0xff]
      %v1575 = vld [vmem:[%s4 + $0x190] sm:$0xff]
      %v1576 = vld [vmem:[%s4 + $0x198] sm:$0xff]
      %v1577 = vld [vmem:[%s4 + $0x1a0] sm:$0xff]
      %v1578 = vld [vmem:[%s4 + $0x1a8] sm:$0xff]
      %v1579 = vld [vmem:[%s4 + $0x1b0] sm:$0xff]
      %v1580 = vld [vmem:[%s4 + $0x1b8] sm:$0xff]
      %v1581 = vld [vmem:[%s4 + $0x1c0] sm:$0xff]
      %v1582 = vld [vmem:[%s4 + $0x1c8] sm:$0xff]
      %v1583 = vld [vmem:[%s4 + $0x1d0] sm:$0xff]
      %v1584 = vld [vmem:[%s4 + $0x1d8] sm:$0xff]
      %v1585 = vld [vmem:[%s4 + $0x1e0] sm:$0xff]
      %v1586 = vld [vmem:[%s4 + $0x1e8] sm:$0xff]
      %v1587 = vld [vmem:[%s4 + $0x1f0] sm:$0xff]
      %v1588 = vld [vmem:[%s4 + $0x1f8] sm:$0xff]
      %v1589 = vld [vmem:[%s4 + $0x200] sm:$0xff]
      %v1590 = vld [vmem:[%s4 + $0x208] sm:$0xff]
      %v1591 = vld [vmem:[%s4 + $0x210] sm:$0xff]
      %v1592 = vld [vmem:[%s4 + $0x218] sm:$0xff]
      %v1593 = vld [vmem:[%s4 + $0x220] sm:$0xff]
      %v1594 = vld [vmem:[%s4 + $0x228] sm:$0xff]
      %v1595 = vld [vmem:[%s4 + $0x230] sm:$0xff]
      %v1596 = vld [vmem:[%s4 + $0x238] sm:$0xff]
      %v1597 = vld [vmem:[%s4 + $0x240] sm:$0xff]
      %v1598 = vld [vmem:[%s4 + $0x248] sm:$0xff]
      %v1599 = vld [vmem:[%s4 + $0x250] sm:$0xff]
      %v1600 = vld [vmem:[%s4 + $0x258] sm:$0xff]
      %v1601 = vld [vmem:[%s4 + $0x260] sm:$0xff]
      %v1602 = vld [vmem:[%s4 + $0x268] sm:$0xff]
      %v1603 = vld [vmem:[%s4 + $0x270] sm:$0xff]
      %v1604 = vld [vmem:[%s4 + $0x278] sm:$0xff]
      %v1605 = vld [vmem:[%s4 + $0x280] sm:$0xff]
      %v1606 = vld [vmem:[%s4 + $0x288] sm:$0xff]
      %v1607 = vld [vmem:[%s4 + $0x290] sm:$0xff]
      %v1608 = vld [vmem:[%s4 + $0x298] sm:$0xff]
      %v1609 = vld [vmem:[%s4 + $0x2a0] sm:$0xff]
      %v1610 = vld [vmem:[%s4 + $0x2a8] sm:$0xff]
      %v1611 = vld [vmem:[%s4 + $0x2b0] sm:$0xff]
      %v1612 = vld [vmem:[%s4 + $0x2b8] sm:$0xff]
      %v1613 = vld [vmem:[%s4 + $0x2c0] sm:$0xff]
      %v1614 = vld [vmem:[%s4 + $0x2c8] sm:$0xff]
      %v1615 = vld [vmem:[%s4 + $0x2d0] sm:$0xff]
      %v1616 = vld [vmem:[%s4 + $0x2d8] sm:$0xff]
      %v1617 = vld [vmem:[%s4 + $0x2e0] sm:$0xff]
      %v1618 = vld [vmem:[%s4 + $0x2e8] sm:$0xff]
      %v1619 = vld [vmem:[%s4 + $0x2f0] sm:$0xff]
      %v1620 = vld [vmem:[%s4 + $0x2f8] sm:$0xff]
      %v1621 = vld [vmem:[%s4 + $0x300] sm:$0xff]
      %v1622 = vld [vmem:[%s4 + $0x308] sm:$0xff]
      %v1623 = vld [vmem:[%s4 + $0x310] sm:$0xff]
      %v1624 = vld [vmem:[%s4 + $0x318] sm:$0xff]
      %v1625 = vld [vmem:[%s4 + $0x320] sm:$0xff]
      %v1626 = vld [vmem:[%s4 + $0x328] sm:$0xff]
      %v1627 = vld [vmem:[%s4 + $0x330] sm:$0xff]
      %v1628 = vld [vmem:[%s4 + $0x338] sm:$0xff]
      %v1629 = vld [vmem:[%s4 + $0x340] sm:$0xff]
      %v1630 = vld [vmem:[%s4 + $0x348] sm:$0xff]
      %v1631 = vld [vmem:[%s4 + $0x350] sm:$0xff]
      %v1632 = vld [vmem:[%s4 + $0x358] sm:$0xff]
      %v1633 = vld [vmem:[%s4 + $0x360] sm:$0xff]
      %v1634 = vld [vmem:[%s4 + $0x368] sm:$0xff]
      %v1635 = vld [vmem:[%s4 + $0x370] sm:$0xff]
      %v1636 = vld [vmem:[%s4 + $0x378] sm:$0xff]
      %v1637 = vld [vmem:[%s4 + $0x380] sm:$0xff]
      %v1638 = vld [vmem:[%s4 + $0x388] sm:$0xff]
      %v1639 = vld [vmem:[%s4 + $0x390] sm:$0xff]
      %v1640 = vld [vmem:[%s4 + $0x398] sm:$0xff]
      %v1641 = vld [vmem:[%s4 + $0x3a0] sm:$0xff]
      %v1642 = vld [vmem:[%s4 + $0x3a8] sm:$0xff]
      %v1643 = vld [vmem:[%s4 + $0x3b0] sm:$0xff]
      %v1644 = vld [vmem:[%s4 + $0x3b8] sm:$0xff]
      %v1645 = vld [vmem:[%s4 + $0x3c0] sm:$0xff]
      %v1646 = vld [vmem:[%s4 + $0x3c8] sm:$0xff]
      %v1647 = vld [vmem:[%s4 + $0x3d0] sm:$0xff]
      %v1648 = vld [vmem:[%s4 + $0x3d8] sm:$0xff]
      %v1649 = vld [vmem:[%s4 + $0x3e0] sm:$0xff]
      %v1650 = vld [vmem:[%s4 + $0x3e8] sm:$0xff]
      %v1651 = vld [vmem:[%s4 + $0x3f0] sm:$0xff]
      %v1652 = vld [vmem:[%s4 + $0x3f8] sm:$0xff]
      %v1653 = vld [vmem:[%s4 + $0x400] sm:$0xff]
      %v1654 = vld [vmem:[%s4 + $0x408] sm:$0xff]
      %v1655 = vld [vmem:[%s4 + $0x410] sm:$0xff]
      %v1656 = vld [vmem:[%s4 + $0x418] sm:$0xff]
      %v1657 = vld [vmem:[%s4 + $0x420] sm:$0xff]
      %v1658 = vld [vmem:[%s4 + $0x428] sm:$0xff]
      %v1659 = vld [vmem:[%s4 + $0x430] sm:$0xff]
      %v1660 = vld [vmem:[%s4 + $0x438] sm:$0xff]
      %v1661 = vld [vmem:[%s4 + $0x440] sm:$0xff]
      %v1662 = vld [vmem:[%s4 + $0x448] sm:$0xff]
      %v1663 = vld [vmem:[%s4 + $0x450] sm:$0xff]
      %v1664 = vld [vmem:[%s4 + $0x458] sm:$0xff]
      %v1665 = vld [vmem:[%s4 + $0x460] sm:$0xff]
      %v1666 = vld [vmem:[%s4 + $0x468] sm:$0xff]
      %v1667 = vld [vmem:[%s4 + $0x470] sm:$0xff]
      %v1668 = vld [vmem:[%s4 + $0x478] sm:$0xff]
      %v1669 = vld [vmem:[%s4 + $0x480] sm:$0xff]
      %v1670 = vld [vmem:[%s4 + $0x488] sm:$0xff]
      %v1671 = vld [vmem:[%s4 + $0x490] sm:$0xff]
      %v1672 = vld [vmem:[%s4 + $0x498] sm:$0xff]
      %v1673 = vld [vmem:[%s4 + $0x4a0] sm:$0xff]
      %v1674 = vld [vmem:[%s4 + $0x4a8] sm:$0xff]
      %v1675 = vld [vmem:[%s4 + $0x4b0] sm:$0xff]
      %v1676 = vld [vmem:[%s4 + $0x4b8] sm:$0xff]
      %v1677 = vld [vmem:[%s4 + $0x4c0] sm:$0xff]
      %v1678 = vld [vmem:[%s4 + $0x4c8] sm:$0xff]
      %v1679 = vld [vmem:[%s4 + $0x4d0] sm:$0xff]
      %v1680 = vld [vmem:[%s4 + $0x4d8] sm:$0xff]
      %v1681 = vld [vmem:[%s4 + $0x4e0] sm:$0xff]
      %v1682 = vld [vmem:[%s4 + $0x4e8] sm:$0xff]
      %v1683 = vld [vmem:[%s4 + $0x4f0] sm:$0xff]
      %v1684 = vld [vmem:[%s4 + $0x4f8] sm:$0xff]
      %v1685 = vld [vmem:[%s4 + $0x500] sm:$0xff]
      %v1686 = vld [vmem:[%s4 + $0x508] sm:$0xff]
      %v1687 = vld [vmem:[%s4 + $0x510] sm:$0xff]
      %v1688 = vld [vmem:[%s4 + $0x518] sm:$0xff]
      %v1689 = vld [vmem:[%s4 + $0x520] sm:$0xff]
      %v1690 = vld [vmem:[%s4 + $0x528] sm:$0xff]
      %v1691 = vld [vmem:[%s4 + $0x530] sm:$0xff]
      %v1692 = vld [vmem:[%s4 + $0x538] sm:$0xff]
      %v1693 = vld [vmem:[%s4 + $0x540] sm:$0xff]
      %v1694 = vld [vmem:[%s4 + $0x548] sm:$0xff]
      %v1695 = vld [vmem:[%s4 + $0x550] sm:$0xff]
      %v1696 = vld [vmem:[%s4 + $0x558] sm:$0xff]
      %v1697 = vld [vmem:[%s4 + $0x560] sm:$0xff]
      %v1698 = vld [vmem:[%s4 + $0x568] sm:$0xff]
      %v1699 = vld [vmem:[%s4 + $0x570] sm:$0xff]
      %v1700 = vld [vmem:[%s4 + $0x578] sm:$0xff]
      %v1701 = vld [vmem:[%s4 + $0x580] sm:$0xff]
      %v1702 = vld [vmem:[%s4 + $0x588] sm:$0xff]
      %v1703 = vld [vmem:[%s4 + $0x590] sm:$0xff]
      %v1704 = vld [vmem:[%s4 + $0x598] sm:$0xff]
      %v1705 = vld [vmem:[%s4 + $0x5a0] sm:$0xff]
      %v1706 = vld [vmem:[%s4 + $0x5a8] sm:$0xff]
      %v1707 = vld [vmem:[%s4 + $0x5b0] sm:$0xff]
      %v1708 = vld [vmem:[%s4 + $0x5b8] sm:$0xff]
      %v1709 = vld [vmem:[%s4 + $0x5c0] sm:$0xff]
      %v1710 = vld [vmem:[%s4 + $0x5c8] sm:$0xff]
      %v1711 = vld [vmem:[%s4 + $0x5d0] sm:$0xff]
      %v1712 = vld [vmem:[%s4 + $0x5d8] sm:$0xff]
      %v1713 = vld [vmem:[%s4 + $0x5e0] sm:$0xff]
      %v1714 = vld [vmem:[%s4 + $0x5e8] sm:$0xff]
      %v1715 = vld [vmem:[%s4 + $0x5f0] sm:$0xff]
      %v1716 = vld [vmem:[%s4 + $0x5f8] sm:$0xff]
      %v1717 = vld [vmem:[%s4 + $0x600] sm:$0xff]
      %v1718 = vld [vmem:[%s4 + $0x608] sm:$0xff]
      %v1719 = vld [vmem:[%s4 + $0x610] sm:$0xff]
      %v1720 = vld [vmem:[%s4 + $0x618] sm:$0xff]
      %v1721 = vld [vmem:[%s4 + $0x620] sm:$0xff]
      %v1722 = vld [vmem:[%s4 + $0x628] sm:$0xff]
      %v1723 = vld [vmem:[%s4 + $0x630] sm:$0xff]
      %v1724 = vld [vmem:[%s4 + $0x638] sm:$0xff]
      %v1725 = vld [vmem:[%s4 + $0x640] sm:$0xff]
      %v1726 = vld [vmem:[%s4 + $0x648] sm:$0xff]
      %v1727 = vld [vmem:[%s4 + $0x650] sm:$0xff]
      %v1728 = vld [vmem:[%s4 + $0x658] sm:$0xff]
      %v1729 = vld [vmem:[%s4 + $0x660] sm:$0xff]
      %v1730 = vld [vmem:[%s4 + $0x668] sm:$0xff]
      %v1731 = vld [vmem:[%s4 + $0x670] sm:$0xff]
      %v1732 = vld [vmem:[%s4 + $0x678] sm:$0xff]
      %v1733 = vld [vmem:[%s4 + $0x680] sm:$0xff]
      %v1734 = vld [vmem:[%s4 + $0x688] sm:$0xff]
      %v1735 = vld [vmem:[%s4 + $0x690] sm:$0xff]
      %v1736 = vld [vmem:[%s4 + $0x698] sm:$0xff]
      %v1737 = vld [vmem:[%s4 + $0x6a0] sm:$0xff]
      %v1738 = vld [vmem:[%s4 + $0x6a8] sm:$0xff]
      %v1739 = vld [vmem:[%s4 + $0x6b0] sm:$0xff]
      %v1740 = vld [vmem:[%s4 + $0x6b8] sm:$0xff]
      %v1741 = vld [vmem:[%s4 + $0x6c0] sm:$0xff]
      %v1742 = vld [vmem:[%s4 + $0x6c8] sm:$0xff]
      %v1743 = vld [vmem:[%s4 + $0x6d0] sm:$0xff]
      %v1744 = vld [vmem:[%s4 + $0x6d8] sm:$0xff]
      %v1745 = vld [vmem:[%s4 + $0x6e0] sm:$0xff]
      %v1746 = vld [vmem:[%s4 + $0x6e8] sm:$0xff]
      %v1747 = vld [vmem:[%s4 + $0x6f0] sm:$0xff]
      %v1748 = vld [vmem:[%s4 + $0x6f8] sm:$0xff]
      %v1749 = vld [vmem:[%s4 + $0x700] sm:$0xff]
      %v1750 = vld [vmem:[%s4 + $0x708] sm:$0xff]
      %v1751 = vld [vmem:[%s4 + $0x710] sm:$0xff]
      %v1752 = vld [vmem:[%s4 + $0x718] sm:$0xff]
      %v1753 = vld [vmem:[%s4 + $0x720] sm:$0xff]
      %v1754 = vld [vmem:[%s4 + $0x728] sm:$0xff]
      %v1755 = vld [vmem:[%s4 + $0x730] sm:$0xff]
      %v1756 = vld [vmem:[%s4 + $0x738] sm:$0xff]
      %v1757 = vld [vmem:[%s4 + $0x740] sm:$0xff]
      %v1758 = vld [vmem:[%s4 + $0x748] sm:$0xff]
      %v1759 = vld [vmem:[%s4 + $0x750] sm:$0xff]
      %v1760 = vld [vmem:[%s4 + $0x758] sm:$0xff]
      %v1761 = vld [vmem:[%s4 + $0x760] sm:$0xff]
      %v1762 = vld [vmem:[%s4 + $0x768] sm:$0xff]
      %v1763 = vld [vmem:[%s4 + $0x770] sm:$0xff]
      %v1764 = vld [vmem:[%s4 + $0x778] sm:$0xff]
      %v1765 = vld [vmem:[%s4 + $0x780] sm:$0xff]
      %v1766 = vld [vmem:[%s4 + $0x788] sm:$0xff]
      %v1767 = vld [vmem:[%s4 + $0x790] sm:$0xff]
      %v1768 = vld [vmem:[%s4 + $0x798] sm:$0xff]
      %v1769 = vld [vmem:[%s4 + $0x7a0] sm:$0xff]
      %v1770 = vld [vmem:[%s4 + $0x7a8] sm:$0xff]
      %v1771 = vld [vmem:[%s4 + $0x7b0] sm:$0xff]
      %v1772 = vld [vmem:[%s4 + $0x7b8] sm:$0xff]
      %v1773 = vld [vmem:[%s4 + $0x7c0] sm:$0xff]
      %v1774 = vld [vmem:[%s4 + $0x7c8] sm:$0xff]
      %v1775 = vld [vmem:[%s4 + $0x7d0] sm:$0xff]
      %v1776 = vld [vmem:[%s4 + $0x7d8] sm:$0xff]
      %v1777 = vld [vmem:[%s4 + $0x7e0] sm:$0xff]
      %v1778 = vld [vmem:[%s4 + $0x7e8] sm:$0xff]
      %v1779 = vld [vmem:[%s4 + $0x7f0] sm:$0xff]
      %v1780 = vld [vmem:[%s4 + $0x7f8] sm:$0xff]
      %v1782 = vlaneseq
      %v1783 = vshrl.u32 %v1782, 7
      %v1784 = vsub.s32 0, %v1783
      %v1785 = vrot.slane %v343, %v1784
      %v1786 = vlaneseq
      %v1787 = vshrl.u32 %v1786, 7
      %v1788 = vsub.s32 1, %v1787
      %v1789 = vrot.slane %v343, %v1788
      %v1790 = vlaneseq
      %v1791 = vshrl.u32 %v1790, 7
      %v1792 = vsub.s32 2, %v1791
      %v1793 = vrot.slane %v343, %v1792
      %v1794 = vlaneseq
      %v1795 = vshrl.u32 %v1794, 7
      %v1796 = vsub.s32 3, %v1795
      %v1797 = vrot.slane %v343, %v1796
      %1802 = vmatprep.subr.mxu0 %v1526
      %1803 = vmatpush1.msra.mxu0 %v1525
      %1804 = vmatprep.subr.mxu0 %v1530
      %1805 = vmatpush1.msra.mxu0 %v1529
      %1806 = vmatprep.subr.mxu0 %v1534
      %1807 = vmatpush1.msra.mxu0 %v1533
      %1808 = vmatprep.subr.mxu0 %v1538
      %1809 = vmatpush1.msra.mxu0 %v1537
      %1810 = vmatprep.subr.mxu0 %v1542
      %1811 = vmatpush1.msra.mxu0 %v1541
      %1812 = vmatprep.subr.mxu0 %v1546
      %1813 = vmatpush1.msra.mxu0 %v1545
      %1814 = vmatprep.subr.mxu0 %v1550
      %1815 = vmatpush1.msra.mxu0 %v1549
      %1816 = vmatprep.subr.mxu0 %v1554
      %1817 = vmatpush1.msra.mxu0 %v1553
      %1818 = vmatprep.subr.mxu0 %v1558
      %1819 = vmatpush1.msra.mxu0 %v1557
      %1820 = vmatprep.subr.mxu0 %v1562
      %1821 = vmatpush1.msra.mxu0 %v1561
      %1822 = vmatprep.subr.mxu0 %v1566
      %1823 = vmatpush1.msra.mxu0 %v1565
      %1824 = vmatprep.subr.mxu0 %v1570
      %1825 = vmatpush1.msra.mxu0 %v1569
      %1826 = vmatprep.subr.mxu0 %v1574
      %1827 = vmatpush1.msra.mxu0 %v1573
      %1828 = vmatprep.subr.mxu0 %v1578
      %1829 = vmatpush1.msra.mxu0 %v1577
      %1830 = vmatprep.subr.mxu0 %v1582
      %1831 = vmatpush1.msra.mxu0 %v1581
      %1832 = vmatprep.subr.mxu0 %v1586
      %1833 = vmatpush1.msra.mxu0 %v1585
      %1834 = vmatprep.subr.mxu0 %v1590
      %1835 = vmatpush1.msra.mxu0 %v1589
      %1836 = vmatprep.subr.mxu0 %v1594
      %1837 = vmatpush1.msra.mxu0 %v1593
      %1838 = vmatprep.subr.mxu0 %v1598
      %1839 = vmatpush1.msra.mxu0 %v1597
      %1840 = vmatprep.subr.mxu0 %v1602
      %1841 = vmatpush1.msra.mxu0 %v1601
      %1842 = vmatprep.subr.mxu0 %v1606
      %1843 = vmatpush1.msra.mxu0 %v1605
      %1844 = vmatprep.subr.mxu0 %v1610
      %1845 = vmatpush1.msra.mxu0 %v1609
      %1846 = vmatprep.subr.mxu0 %v1614
      %1847 = vmatpush1.msra.mxu0 %v1613
      %1848 = vmatprep.subr.mxu0 %v1618
      %1849 = vmatpush1.msra.mxu0 %v1617
      %1850 = vmatprep.subr.mxu0 %v1622
      %1851 = vmatpush1.msra.mxu0 %v1621
      %1852 = vmatprep.subr.mxu0 %v1626
      %1853 = vmatpush1.msra.mxu0 %v1625
      %1854 = vmatprep.subr.mxu0 %v1630
      %1855 = vmatpush1.msra.mxu0 %v1629
      %1856 = vmatprep.subr.mxu0 %v1634
      %1857 = vmatpush1.msra.mxu0 %v1633
      %1858 = vmatprep.subr.mxu0 %v1638
      %1859 = vmatpush1.msra.mxu0 %v1637
      %1860 = vmatprep.subr.mxu0 %v1642
      %1861 = vmatpush1.msra.mxu0 %v1641
      %1862 = vmatprep.subr.mxu0 %v1646
      %1863 = vmatpush1.msra.mxu0 %v1645
      %1864 = vmatprep.subr.mxu0 %v1650
      %1865 = vmatpush1.msra.mxu0 %v1649
      %1866 = vmatprep.mubr.f32.mxu0 %v1522
      %1867 = vmatmul.mubr.f32.gmra.mrb[0].mxu0 %v1521
      %v1868 = vpop.f32.mrb[0].mxu0
      %v1869 = vadd.f32 %v1785, %v1868
      %v1870 = vpop.f32.mrb[0].mxu0
      %v1871 = vadd.f32 %v1789, %v1870
      %1872 = vdwg.mxu0
      %1873 = vmatprep.subr.mxu0 %v1654
      %1874 = vmatpush1.msra.mxu0 %v1653
      %1875 = vmatprep.subr.mxu0 %v1658
      %1876 = vmatpush1.msra.mxu0 %v1657
      %1877 = vmatprep.subr.mxu0 %v1662
      %1878 = vmatpush1.msra.mxu0 %v1661
      %1879 = vmatprep.subr.mxu0 %v1666
      %1880 = vmatpush1.msra.mxu0 %v1665
      %1881 = vmatprep.subr.mxu0 %v1670
      %1882 = vmatpush1.msra.mxu0 %v1669
      %1883 = vmatprep.subr.mxu0 %v1674
      %1884 = vmatpush1.msra.mxu0 %v1673
      %1885 = vmatprep.subr.mxu0 %v1678
      %1886 = vmatpush1.msra.mxu0 %v1677
      %1887 = vmatprep.subr.mxu0 %v1682
      %1888 = vmatpush1.msra.mxu0 %v1681
      %1889 = vmatprep.subr.mxu0 %v1686
      %1890 = vmatpush1.msra.mxu0 %v1685
      %1891 = vmatprep.subr.mxu0 %v1690
      %1892 = vmatpush1.msra.mxu0 %v1689
      %1893 = vmatprep.subr.mxu0 %v1694
      %1894 = vmatpush1.msra.mxu0 %v1693
      %1895 = vmatprep.subr.mxu0 %v1698
      %1896 = vmatpush1.msra.mxu0 %v1697
      %1897 = vmatprep.subr.mxu0 %v1702
      %1898 = vmatpush1.msra.mxu0 %v1701
      %1899 = vmatprep.subr.mxu0 %v1706
      %1900 = vmatpush1.msra.mxu0 %v1705
      %1901 = vmatprep.subr.mxu0 %v1710
      %1902 = vmatpush1.msra.mxu0 %v1709
      %1903 = vmatprep.subr.mxu0 %v1714
      %1904 = vmatpush1.msra.mxu0 %v1713
      %1905 = vmatprep.subr.mxu0 %v1718
      %1906 = vmatpush1.msra.mxu0 %v1717
      %1907 = vmatprep.subr.mxu0 %v1722
      %1908 = vmatpush1.msra.mxu0 %v1721
      %1909 = vmatprep.subr.mxu0 %v1726
      %1910 = vmatpush1.msra.mxu0 %v1725
      %1911 = vmatprep.subr.mxu0 %v1730
      %1912 = vmatpush1.msra.mxu0 %v1729
      %1913 = vmatprep.subr.mxu0 %v1734
      %1914 = vmatpush1.msra.mxu0 %v1733
      %1915 = vmatprep.subr.mxu0 %v1738
      %1916 = vmatpush1.msra.mxu0 %v1737
      %1917 = vmatprep.subr.mxu0 %v1742
      %1918 = vmatpush1.msra.mxu0 %v1741
      %1919 = vmatprep.subr.mxu0 %v1746
      %1920 = vmatpush1.msra.mxu0 %v1745
      %1921 = vmatprep.subr.mxu0 %v1750
      %1922 = vmatpush1.msra.mxu0 %v1749
      %1923 = vmatprep.subr.mxu0 %v1754
      %1924 = vmatpush1.msra.mxu0 %v1753
      %1925 = vmatprep.subr.mxu0 %v1758
      %1926 = vmatpush1.msra.mxu0 %v1757
      %1927 = vmatprep.subr.mxu0 %v1762
      %1928 = vmatpush1.msra.mxu0 %v1761
      %1929 = vmatprep.subr.mxu0 %v1766
      %1930 = vmatpush1.msra.mxu0 %v1765
      %1931 = vmatprep.subr.mxu0 %v1770
      %1932 = vmatpush1.msra.mxu0 %v1769
      %1933 = vmatprep.subr.mxu0 %v1774
      %1934 = vmatpush1.msra.mxu0 %v1773
      %1935 = vmatprep.subr.mxu0 %v1778
      %1936 = vmatpush1.msra.mxu0 %v1777
      %1937 = vmatprep.mubr.f32.mxu0 %v1524
      %1938 = vmatmul.mubr.f32.gmra.mrb[0].mxu0 %v1523
      %v1939 = vpop.f32.mrb[0].mxu0
      %v1940 = vadd.f32 %v1869, %v1939
      %v1941 = vpop.f32.mrb[0].mxu0
      %v1942 = vadd.f32 %v1871, %v1941
      %1943 = vdwg.mxu0
      %1944 = vmatprep.subr.mxu0 %v1528
      %1945 = vmatpush1.msra.mxu0 %v1527
      %1946 = vmatprep.subr.mxu0 %v1532
      %1947 = vmatpush1.msra.mxu0 %v1531
      %1948 = vmatprep.subr.mxu0 %v1536
      %1949 = vmatpush1.msra.mxu0 %v1535
      %1950 = vmatprep.subr.mxu0 %v1540
      %1951 = vmatpush1.msra.mxu0 %v1539
      %1952 = vmatprep.subr.mxu0 %v1544
      %1953 = vmatpush1.msra.mxu0 %v1543
      %1954 = vmatprep.subr.mxu0 %v1548
      %1955 = vmatpush1.msra.mxu0 %v1547
      %1956 = vmatprep.subr.mxu0 %v1552
      %1957 = vmatpush1.msra.mxu0 %v1551
      %1958 = vmatprep.subr.mxu0 %v1556
      %1959 = vmatpush1.msra.mxu0 %v1555
      %1960 = vmatprep.subr.mxu0 %v1560
      %1961 = vmatpush1.msra.mxu0 %v1559
      %1962 = vmatprep.subr.mxu0 %v1564
      %1963 = vmatpush1.msra.mxu0 %v1563
      %1964 = vmatprep.subr.mxu0 %v1568
      %1965 = vmatpush1.msra.mxu0 %v1567
      %1966 = vmatprep.subr.mxu0 %v1572
      %1967 = vmatpush1.msra.mxu0 %v1571
      %1968 = vmatprep.subr.mxu0 %v1576
      %1969 = vmatpush1.msra.mxu0 %v1575
      %1970 = vmatprep.subr.mxu0 %v1580
      %1971 = vmatpush1.msra.mxu0 %v1579
      %1972 = vmatprep.subr.mxu0 %v1584
      %1973 = vmatpush1.msra.mxu0 %v1583
      %1974 = vmatprep.subr.mxu0 %v1588
      %1975 = vmatpush1.msra.mxu0 %v1587
      %1976 = vmatprep.subr.mxu0 %v1592
      %1977 = vmatpush1.msra.mxu0 %v1591
      %1978 = vmatprep.subr.mxu0 %v1596
      %1979 = vmatpush1.msra.mxu0 %v1595
      %1980 = vmatprep.subr.mxu0 %v1600
      %1981 = vmatpush1.msra.mxu0 %v1599
      %1982 = vmatprep.subr.mxu0 %v1604
      %1983 = vmatpush1.msra.mxu0 %v1603
      %1984 = vmatprep.subr.mxu0 %v1608
      %1985 = vmatpush1.msra.mxu0 %v1607
      %1986 = vmatprep.subr.mxu0 %v1612
      %1987 = vmatpush1.msra.mxu0 %v1611
      %1988 = vmatprep.subr.mxu0 %v1616
      %1989 = vmatpush1.msra.mxu0 %v1615
      %1990 = vmatprep.subr.mxu0 %v1620
      %1991 = vmatpush1.msra.mxu0 %v1619
      %1992 = vmatprep.subr.mxu0 %v1624
      %1993 = vmatpush1.msra.mxu0 %v1623
      %1994 = vmatprep.subr.mxu0 %v1628
      %1995 = vmatpush1.msra.mxu0 %v1627
      %1996 = vmatprep.subr.mxu0 %v1632
      %1997 = vmatpush1.msra.mxu0 %v1631
      %1998 = vmatprep.subr.mxu0 %v1636
      %1999 = vmatpush1.msra.mxu0 %v1635
      %2000 = vmatprep.subr.mxu0 %v1640
      %2001 = vmatpush1.msra.mxu0 %v1639
      %2002 = vmatprep.subr.mxu0 %v1644
      %2003 = vmatpush1.msra.mxu0 %v1643
      %2004 = vmatprep.subr.mxu0 %v1648
      %2005 = vmatpush1.msra.mxu0 %v1647
      %2006 = vmatprep.subr.mxu0 %v1652
      %2007 = vmatpush1.msra.mxu0 %v1651
      %2008 = vmatprep.mubr.f32.mxu0 %v1522
      %2009 = vmatmul.mubr.f32.gmra.mrb[0].mxu0 %v1521
      %v2010 = vpop.f32.mrb[0].mxu0
      %v2011 = vadd.f32 %v1793, %v2010
      %v2012 = vpop.f32.mrb[0].mxu0
      %v2013 = vadd.f32 %v1797, %v2012
      %2014 = vdwg.mxu0
      %2015 = vmatprep.subr.mxu0 %v1656
      %2016 = vmatpush1.msra.mxu0 %v1655
      %2017 = vmatprep.subr.mxu0 %v1660
      %2018 = vmatpush1.msra.mxu0 %v1659
      %2019 = vmatprep.subr.mxu0 %v1664
      %2020 = vmatpush1.msra.mxu0 %v1663
      %2021 = vmatprep.subr.mxu0 %v1668
      %2022 = vmatpush1.msra.mxu0 %v1667
      %2023 = vmatprep.subr.mxu0 %v1672
      %2024 = vmatpush1.msra.mxu0 %v1671
      %2025 = vmatprep.subr.mxu0 %v1676
      %2026 = vmatpush1.msra.mxu0 %v1675
      %2027 = vmatprep.subr.mxu0 %v1680
      %2028 = vmatpush1.msra.mxu0 %v1679
      %2029 = vmatprep.subr.mxu0 %v1684
      %2030 = vmatpush1.msra.mxu0 %v1683
      %2031 = vmatprep.subr.mxu0 %v1688
      %2032 = vmatpush1.msra.mxu0 %v1687
      %2033 = vmatprep.subr.mxu0 %v1692
      %2034 = vmatpush1.msra.mxu0 %v1691
      %2035 = vmatprep.subr.mxu0 %v1696
      %2036 = vmatpush1.msra.mxu0 %v1695
      %2037 = vmatprep.subr.mxu0 %v1700
      %2038 = vmatpush1.msra.mxu0 %v1699
      %2039 = vmatprep.subr.mxu0 %v1704
      %2040 = vmatpush1.msra.mxu0 %v1703
      %2041 = vmatprep.subr.mxu0 %v1708
      %2042 = vmatpush1.msra.mxu0 %v1707
      %2043 = vmatprep.subr.mxu0 %v1712
      %2044 = vmatpush1.msra.mxu0 %v1711
      %2045 = vmatprep.subr.mxu0 %v1716
      %2046 = vmatpush1.msra.mxu0 %v1715
      %2047 = vmatprep.subr.mxu0 %v1720
      %2048 = vmatpush1.msra.mxu0 %v1719
      %2049 = vmatprep.subr.mxu0 %v1724
      %2050 = vmatpush1.msra.mxu0 %v1723
      %2051 = vmatprep.subr.mxu0 %v1728
      %2052 = vmatpush1.msra.mxu0 %v1727
      %2053 = vmatprep.subr.mxu0 %v1732
      %2054 = vmatpush1.msra.mxu0 %v1731
      %2055 = vmatprep.subr.mxu0 %v1736
      %2056 = vmatpush1.msra.mxu0 %v1735
      %2057 = vmatprep.subr.mxu0 %v1740
      %2058 = vmatpush1.msra.mxu0 %v1739
      %2059 = vmatprep.subr.mxu0 %v1744
      %2060 = vmatpush1.msra.mxu0 %v1743
      %2061 = vmatprep.subr.mxu0 %v1748
      %2062 = vmatpush1.msra.mxu0 %v1747
      %2063 = vmatprep.subr.mxu0 %v1752
      %2064 = vmatpush1.msra.mxu0 %v1751
      %2065 = vmatprep.subr.mxu0 %v1756
      %2066 = vmatpush1.msra.mxu0 %v1755
      %2067 = vmatprep.subr.mxu0 %v1760
      %2068 = vmatpush1.msra.mxu0 %v1759
      %2069 = vmatprep.subr.mxu0 %v1764
      %2070 = vmatpush1.msra.mxu0 %v1763
      %2071 = vmatprep.subr.mxu0 %v1768
      %2072 = vmatpush1.msra.mxu0 %v1767
      %2073 = vmatprep.subr.mxu0 %v1772
      %2074 = vmatpush1.msra.mxu0 %v1771
      %2075 = vmatprep.subr.mxu0 %v1776
      %2076 = vmatpush1.msra.mxu0 %v1775
      %2077 = vmatprep.subr.mxu0 %v1780
      %2078 = vmatpush1.msra.mxu0 %v1779
      %2079 = vmatprep.mubr.f32.mxu0 %v1524
      %2080 = vmatmul.mubr.f32.gmra.mrb[0].mxu0 %v1523
      %v2081 = vpop.f32.mrb[0].mxu0
      %v2082 = vadd.f32 %v2011, %v2081
      %v2083 = vpop.f32.mrb[0].mxu0
      %v2084 = vadd.f32 %v2013, %v2083
      %2085 = vdwg.mxu0
      %v2086 = vmax.f32 %v1940, 0.0
      %v2087 = vmax.f32 %v1942, 0.0
      %v2088 = vmax.f32 %v2082, 0.0
      %v2089 = vmax.f32 %v2084, 0.0
      %v2090 = vmul.f32 %v2086, %v420
      %v2091 = vmul.f32 %v2087, %v422
      %v2092 = vmul.f32 %v2088, %v491
      %v2093 = vmul.f32 %v2089, %v493
      %v2094 = vmax.f32 %v2090, %v2092
      %v2095 = vmax.f32 %v2091, %v2093
      %v2096 = vmax.f32 %v2094, %v2095
      %2098 = vrot.lane.b32.xlu0 %v2096, 64
      %v2099 = vpop.permute.xlu0 %2098
      %v2101 = vmax.f32 %v2096, %v2099
      %2103 = vrot.lane.b32.xlu0 %v2101, 96
      %v2104 = vpop.permute.xlu0 %2103
      %v2106 = vmax.f32 %v2101, %v2104
      %v2108 = vsel %vm1002, %v2106, 0
      %2110 = vmatprep.subr.mxu0 0.0
      %2111 = vmatpush1.msra.mxu0 %v324
      %2112 = vmatprep.subr.mxu0 0.0
      %2113 = vmatpush1.msra.mxu0 %v325
      %2114 = vmatprep.subr.mxu0 0.0
      %2115 = vmatpush1.msra.mxu0 %v326
      %2116 = vmatprep.subr.mxu0 0.0
      %2117 = vmatpush1.msra.mxu0 %v327
      %2118 = vmatprep.subr.mxu0 0.0
      %2119 = vmatpush1.msra.mxu0 0.0
      %2120 = vmatprep.subr.mxu0 0.0
      %2121 = vmatpush1.msra.mxu0 0.0
      %2122 = vmatprep.subr.mxu0 0.0
      %2123 = vmatpush1.msra.mxu0 0.0
      %2124 = vmatprep.subr.mxu0 0.0
      %2125 = vmatpush1.msra.mxu0 0.0
      %2126 = vmatprep.subr.mxu0 0.0
      %2127 = vmatpush1.msra.mxu0 0.0
      %2128 = vmatprep.subr.mxu0 0.0
      %2129 = vmatpush1.msra.mxu0 0.0
      %2130 = vmatprep.subr.mxu0 0.0
      %2131 = vmatpush1.msra.mxu0 0.0
      %2132 = vmatprep.subr.mxu0 0.0
      %2133 = vmatpush1.msra.mxu0 0.0
      %2134 = vmatprep.subr.mxu0 0.0
      %2135 = vmatpush1.msra.mxu0 0.0
      %2136 = vmatprep.subr.mxu0 0.0
      %2137 = vmatpush1.msra.mxu0 0.0
      %2138 = vmatprep.subr.mxu0 0.0
      %2139 = vmatpush1.msra.mxu0 0.0
      %2140 = vmatprep.subr.mxu0 0.0
      %2141 = vmatpush1.msra.mxu0 0.0
      %2142 = vmatprep.subr.mxu0 0.0
      %2143 = vmatpush1.msra.mxu0 0.0
      %2144 = vmatprep.subr.mxu0 0.0
      %2145 = vmatpush1.msra.mxu0 0.0
      %2146 = vmatprep.subr.mxu0 0.0
      %2147 = vmatpush1.msra.mxu0 0.0
      %2148 = vmatprep.subr.mxu0 0.0
      %2149 = vmatpush1.msra.mxu0 0.0
      %2150 = vmatprep.subr.mxu0 0.0
      %2151 = vmatpush1.msra.mxu0 0.0
      %2152 = vmatprep.subr.mxu0 0.0
      %2153 = vmatpush1.msra.mxu0 0.0
      %2154 = vmatprep.subr.mxu0 0.0
      %2155 = vmatpush1.msra.mxu0 0.0
      %2156 = vmatprep.subr.mxu0 0.0
      %2157 = vmatpush1.msra.mxu0 0.0
      %2158 = vmatprep.subr.mxu0 0.0
      %2159 = vmatpush1.msra.mxu0 0.0
      %2160 = vmatprep.subr.mxu0 0.0
      %2161 = vmatpush1.msra.mxu0 0.0
      %2162 = vmatprep.subr.mxu0 0.0
      %2163 = vmatpush1.msra.mxu0 0.0
      %2164 = vmatprep.subr.mxu0 0.0
      %2165 = vmatpush1.msra.mxu0 0.0
      %2166 = vmatprep.subr.mxu0 0.0
      %2167 = vmatpush1.msra.mxu0 0.0
      %2168 = vmatprep.subr.mxu0 0.0
      %2169 = vmatpush1.msra.mxu0 0.0
      %2170 = vmatprep.subr.mxu0 0.0
      %2171 = vmatpush1.msra.mxu0 0.0
      %2172 = vmatprep.subr.mxu0 0.0
      %2173 = vmatpush1.msra.mxu0 0.0
      %2174 = vmatprep.mubr.f32.mxu0 0.0
      %2175 = vmatmul.mubr.f32.gmra.mrb[0].mxu0 %v2108
      %v2176 = vpop.f32.mrb[0].mxu0
      %v2177 = vadd.f32 %v345, %v2176
      %v2178 = vpop.f32.mrb[0].mxu0
      %2179 = vdwg.mxu0
      %v2180 = vmax.f32 %v2177, 0.0
      %v2182 = vsel %vm1002, %v2180, 0
      %2184 = vmatprep.subr.mxu0 0.0
      %2185 = vmatpush1.msra.mxu0 %v328
      %2186 = vmatprep.subr.mxu0 0.0
      %2187 = vmatpush1.msra.mxu0 %v329
      %2188 = vmatprep.subr.mxu0 0.0
      %2189 = vmatpush1.msra.mxu0 %v330
      %2190 = vmatprep.subr.mxu0 0.0
      %2191 = vmatpush1.msra.mxu0 %v331
      %2192 = vmatprep.subr.mxu0 0.0
      %2193 = vmatpush1.msra.mxu0 0.0
      %2194 = vmatprep.subr.mxu0 0.0
      %2195 = vmatpush1.msra.mxu0 0.0
      %2196 = vmatprep.subr.mxu0 0.0
      %2197 = vmatpush1.msra.mxu0 0.0
      %2198 = vmatprep.subr.mxu0 0.0
      %2199 = vmatpush1.msra.mxu0 0.0
      %2200 = vmatprep.subr.mxu0 0.0
      %2201 = vmatpush1.msra.mxu0 0.0
      %2202 = vmatprep.subr.mxu0 0.0
      %2203 = vmatpush1.msra.mxu0 0.0
      %2204 = vmatprep.subr.mxu0 0.0
      %2205 = vmatpush1.msra.mxu0 0.0
      %2206 = vmatprep.subr.mxu0 0.0
      %2207 = vmatpush1.msra.mxu0 0.0
      %2208 = vmatprep.subr.mxu0 0.0
      %2209 = vmatpush1.msra.mxu0 0.0
      %2210 = vmatprep.subr.mxu0 0.0
      %2211 = vmatpush1.msra.mxu0 0.0
      %2212 = vmatprep.subr.mxu0 0.0
      %2213 = vmatpush1.msra.mxu0 0.0
      %2214 = vmatprep.subr.mxu0 0.0
      %2215 = vmatpush1.msra.mxu0 0.0
      %2216 = vmatprep.subr.mxu0 0.0
      %2217 = vmatpush1.msra.mxu0 0.0
      %2218 = vmatprep.subr.mxu0 0.0
      %2219 = vmatpush1.msra.mxu0 0.0
      %2220 = vmatprep.subr.mxu0 0.0
      %2221 = vmatpush1.msra.mxu0 0.0
      %2222 = vmatprep.subr.mxu0 0.0
      %2223 = vmatpush1.msra.mxu0 0.0
      %2224 = vmatprep.subr.mxu0 0.0
      %2225 = vmatpush1.msra.mxu0 0.0
      %2226 = vmatprep.subr.mxu0 0.0
      %2227 = vmatpush1.msra.mxu0 0.0
      %2228 = vmatprep.subr.mxu0 0.0
      %2229 = vmatpush1.msra.mxu0 0.0
      %2230 = vmatprep.subr.mxu0 0.0
      %2231 = vmatpush1.msra.mxu0 0.0
      %2232 = vmatprep.subr.mxu0 0.0
      %2233 = vmatpush1.msra.mxu0 0.0
      %2234 = vmatprep.subr.mxu0 0.0
      %2235 = vmatpush1.msra.mxu0 0.0
      %2236 = vmatprep.subr.mxu0 0.0
      %2237 = vmatpush1.msra.mxu0 0.0
      %2238 = vmatprep.subr.mxu0 0.0
      %2239 = vmatpush1.msra.mxu0 0.0
      %2240 = vmatprep.subr.mxu0 0.0
      %2241 = vmatpush1.msra.mxu0 0.0
      %2242 = vmatprep.subr.mxu0 0.0
      %2243 = vmatpush1.msra.mxu0 0.0
      %2244 = vmatprep.subr.mxu0 0.0
      %2245 = vmatpush1.msra.mxu0 0.0
      %2246 = vmatprep.subr.mxu0 0.0
      %2247 = vmatpush1.msra.mxu0 0.0
      %2248 = vmatprep.mubr.f32.mxu0 0.0
      %2249 = vmatmul.mubr.f32.gmra.mrb[0].mxu0 %v2182
      %v2250 = vpop.f32.mrb[0].mxu0
      %v2251 = vadd.f32 %v346, %v2250
      %v2252 = vpop.f32.mrb[0].mxu0
      %2253 = vdwg.mxu0
      %v2254 = vmul.f32 %v2251, %v497
      %2255 = vxpose.xlu0.b32.start [1/16] %v2254, 128
      %2256 = vxpose.xlu0.b32.cont [2/16] 0.0, 128
      %2257 = vxpose.xlu0.b32.cont [3/16] 0.0, 128
      %2258 = vxpose.xlu0.b32.cont [4/16] 0.0, 128
      %2259 = vxpose.xlu0.b32.cont [5/16] 0.0, 128
      %2260 = vxpose.xlu0.b32.cont [6/16] 0.0, 128
      %2261 = vxpose.xlu0.b32.cont [7/16] 0.0, 128
      %2262 = vxpose.xlu0.b32.cont [8/16] 0.0, 128
      %2263 = vxpose.xlu0.b32.cont [9/16] 0.0, 128
      %2264 = vxpose.xlu0.b32.cont [10/16] 0.0, 128
      %2265 = vxpose.xlu0.b32.cont [11/16] 0.0, 128
      %2266 = vxpose.xlu0.b32.cont [12/16] 0.0, 128
      %2267 = vxpose.xlu0.b32.cont [13/16] 0.0, 128
      %2268 = vxpose.xlu0.b32.cont [14/16] 0.0, 128
      %2269 = vxpose.xlu0.b32.cont [15/16] 0.0, 128
      %2270 = vxpose.xlu0.b32.end [16/16] 0.0, 128
      %v2271 = vpop.trf.xlu0
      %v2272 = vpop.trf.xlu0
      %v2273 = vpop.trf.xlu0
      %v2274 = vpop.trf.xlu0
      %v2275 = vpop.trf.xlu0
      %v2276 = vpop.trf.xlu0
      %v2277 = vpop.trf.xlu0
      %v2278 = vpop.trf.xlu0
      %v2279 = vpop.trf.xlu0
      %v2280 = vpop.trf.xlu0
      %v2281 = vpop.trf.xlu0
      %v2282 = vpop.trf.xlu0
      %v2283 = vpop.trf.xlu0
      %v2284 = vpop.trf.xlu0
      %v2285 = vpop.trf.xlu0
      %v2286 = vpop.trf.xlu0
      %vm2287 = vcmask 64512
      %2288 = vst.msk [vmem:[%s319] sm:$0xff] %vm2287, %v2271
      %2289 = vst.msk [vmem:[%s319 + $0x8] sm:$0xff] %vm2287, %v2272
      %p2290 = scmp.lt.s32.totalorder %s19, 1
      %s2291 = scalar_select %p2290, %s19, 1
      %s2292 = smul.addr %s2291, 2
      %s2293 = smul.addr %s2292, 8
      %s2294 = scalar_lea.vmem %s8, %s2293
      // Predicated region
      $region53: #{pointnet_polyline_encoder.1} parent=51 // pred_check
        %p2295 = pneg %p215
      $region54: #{pointnet_polyline_encoder.1} parent=51 // pred_check_branch
        %2297 = sbr.rel (%p2295) target = $region56
      $region55: #{pointnet_polyline_encoder.1} parent=51 // pred_region
        _
      $region56: #{pointnet_polyline_encoder.1} parent=51 // pred_fallthru
        _
    $region52: #{pointnet_polyline_encoder.1} parent=5 // pred_fallthru
      _
    %p2298 = scmp.le.s32.totalorder 2, %s14
    // Predicated region
    $region57: #{pointnet_polyline_encoder.1} parent=5 // pred_check
      %p2299 = pneg %p2298
    $region58: #{pointnet_polyline_encoder.1} parent=5 // pred_check_branch
      %2301 = sbr.rel (%p2299) target = $region60
    $region59: #{pointnet_polyline_encoder.1} parent=5 // pred_region
      %s2302 = ssub.s32 %s14, 2
      // Predicated region
      $region61: #{pointnet_polyline_encoder.1} parent=59 // pred_check
        %p2303 = pneg %p221
      $region62: #{pointnet_polyline_encoder.1} parent=59 // pred_check_branch
        %2305 = sbr.rel (%p2303) target = $region64
      $region63: #{pointnet_polyline_encoder.1} parent=59 // pred_region
        %p2306 = scmp.lt.s32.totalorder %s20, 1
        %s2307 = scalar_select %p2306, %s20, 1
        %s2308 = smul.addr %s2307, 2
        %s2309 = smul.addr %s2308, 8
        %s2310 = scalar_lea.vmem %s8, %s2309
      $region64: #{pointnet_polyline_encoder.1} parent=59 // pred_fallthru
        _
    $region60: #{pointnet_polyline_encoder.1} parent=5 // pred_fallthru
      _
  $region6: #{pointnet_polyline_encoder.1} parent=0 // loop_footer
    %s18 = sadd.s32 1, %s14
  $region7: #{pointnet_polyline_encoder.1} parent=0 // loop_footer_branch
    %13 = sbr.rel target = $region3
  $region8: #{pointnet_polyline_encoder.1} parent=0 // loop_exit
    _

</llo_original>
